<compile_context>
chip_gen: v5e
topology: v5e:2x2
jax: 0.10.0
libtpu: 0.0.40
codegen_flags: <defaults>
</compile_context>

<pallas_src>
import jax
import jax.numpy as jnp
from jax import lax
from jax.experimental import pallas as pl
from jax.experimental.pallas import tpu as pltpu


# ----------------------------------------------------------------------------- kernel
def lstm_intent_kernel(emb_ref,    # [T, B, H]   time-major embedded sequence (weight dtype)
                       wih0_ref,   # [H, 4H]     layer-0 input weights, gate cols [i,f,o,g]
                       b0_ref,     # [1, 4H]     b_ih0 + b_hh0 (f32)
                       wrec0_ref,  # [H, 8H]     [whh0 | wih1]  (h0 -> l0 rec gates | l1 input gates)
                       whh1_ref,   # [H, 4H]     layer-1 recurrent weights
                       b1_ref,     # [1, 4H]     b_ih1 + b_hh1 (f32)
                       wfc_ref,    # [H, NPAD]   fc weight, lane-padded to multiple of 128
                       bfc_ref,    # [1, NPAD]   fc bias (f32), lane-padded
                       len_ref,    # [B, 1]      int32 sequence lengths
                       out_ref,    # [B, NPAD]   f32 logits (padded)
                       x0_ref):    # scratch VMEM [T, B, 4H] f32
    T, B, H = emb_ref.shape
    H3, H4 = 3 * H, 4 * H
    f32 = jnp.float32
    cdt = wih0_ref.dtype                     # matmul-LHS / h-state dtype (f32 or bf16)

    # ---- hoisted layer-0 input projection: one big MXU matmul, off the serial chain.
    #      Parked in VMEM scratch so the unrolled loop does not carry a [T,B,4H] live value. ----
    emb2d = emb_ref[...].reshape(T * B, H)
    x0 = jnp.dot(emb2d, wih0_ref[...], preferred_element_type=f32) + b0_ref[...]
    x0_ref[...] = x0.reshape(T, B, H4)

    b1 = b1_ref[...]                         # [1, 4H] f32

    def lstm_update(gates, c):
        # gate layout [i, f, o, g]: one contiguous sigmoid + one tanh (EUP path)
        ifo = jax.nn.sigmoid(gates[:, :H3])
        g = jnp.tanh(gates[:, H3:])
        i, f, o = ifo[:, :H], ifo[:, H:2 * H], ifo[:, 2 * H:H3]
        c_new = f * c + i * g                              # f32
        h_new = (o * jnp.tanh(c_new)).astype(cdt)          # h in matmul dtype; c stays f32
        return h_new, c_new

    zf32 = jnp.zeros((B, H), f32)

    # prologue: layer 0 at t = 0 (h0_{-1} = 0 -> no recurrent contribution)
    h0, c0 = lstm_update(x0_ref[0], zf32)

    # ---- skewed recurrence: step t runs layer0(t) and layer1(t-1) with two concat-free dots ----
    def step(t, carry):
        h0, c0, h1, c1 = carry                              # h0/c0 at t-1; h1/c1 at t-2
        g0 = jnp.dot(h0, wrec0_ref[...], preferred_element_type=f32)   # [B, 8H]
        g1 = jnp.dot(h1, whh1_ref[...], preferred_element_type=f32)    # [B, 4H]
        h0n, c0n = lstm_update(g0[:, :H4] + x0_ref[t], c0)             # layer 0, time t
        h1n, c1n = lstm_update(g0[:, H4:] + g1 + b1, c1)               # layer 1, time t-1
        return h0n, c0n, h1n, c1n

    unroll = True if T <= 32 else 8   # guard full unroll for long sequences
    h0, c0, h1, c1 = lax.fori_loop(
        1, T, step, (h0, c0, jnp.zeros((B, H), cdt), zf32), unroll=unroll)

    # epilogue: layer 1 at the last timestep (t = T-1); wih1 is a static, lane-aligned ref slice
    g1 = (jnp.dot(h0, wrec0_ref[:, H4:], preferred_element_type=f32)
          + jnp.dot(h1, whh1_ref[...], preferred_element_type=f32) + b1)
    h1, _ = lstm_update(g1, c1)

    # pad_packed_sequence zero-pads rows with lengths < T at t = T-1, so output[:, -1, :]
    # is h1 only for full-length rows and zeros otherwise (logits collapse to the fc bias).
    mask = (len_ref[...] == T).astype(h1.dtype)             # [B, 1]
    h_last = h1 * mask
    out_ref[...] = (jnp.dot(h_last, wfc_ref[...], preferred_element_type=f32)
                    + bfc_ref[...])


# ----------------------------------------------------------------------------- wrapper
def intent_classifier_forward(packed, input_seq, lengths):
    """input_seq: int32 [B, T]; lengths: int32 [B]. Assumes max(lengths) == T."""
    cdt = packed["wih0"].dtype
    # Gather straight into time-major layout: no [B,T,H] float transpose round-trip.
    emb = packed["embedding"][input_seq.T].astype(cdt)                  # [T, B, H]
    # TODO(synk): move the gather into the kernel (PrefetchScalarGridSpec + pl.Element row-gather
    # on the embedding table) to drop this separate XLA gather op and its HBM round-trip.
    T, B, H = emb.shape
    NPAD = packed["bfc"].shape[-1]
    lengths2d = lengths.reshape(B, 1).astype(jnp.int32)

    vmem = pl.BlockSpec(memory_space=pltpu.MemorySpace.VMEM)
    out_padded = pl.pallas_call(
        lstm_intent_kernel,
        out_shape=jax.ShapeDtypeStruct((B, NPAD), jnp.float32),
        in_specs=[vmem] * 9,
        out_specs=vmem,
        scratch_shapes=[pltpu.VMEM((T, B, 4 * H), jnp.float32)],
        # TODO(synk): for large B add a batch grid axis with
        # dimension_semantics=("parallel",) to use both v7x TensorCores; for large T/H stream
        # emb/x0 in time chunks, tile wrec0 along its 8H columns, and set
        # pltpu.CompilerParams(vmem_limit_bytes=...) (v7x has only 64 MiB VMEM).
    )(emb, packed["wih0"], packed["b0"], packed["wrec0"], packed["whh1"],
      packed["b1"], packed["wfc"], packed["bfc"], lengths2d)
    return out_padded[:, :packed["num_intents"]]


# ----------------------------------------------------------------------------- params
def init_raw_params(key, vocab_size, hidden_size, num_intents):
    """PyTorch-native layout: weight_ih/hh [4H,H] (gate order i,f,g,o), biases [4H], fc [NI,H]."""
    H = hidden_size
    s = 1.0 / float(H) ** 0.5
    ks = jax.random.split(key, 11)
    u = lambda k, shape: jax.random.uniform(k, shape, jnp.float32, -s, s)
    return {
        "embedding": jax.random.normal(ks[0], (vocab_size, H), jnp.float32),
        "w_ih_l0": u(ks[1], (4 * H, H)), "w_hh_l0": u(ks[2], (4 * H, H)),
        "b_ih_l0": u(ks[3], (4 * H,)),   "b_hh_l0": u(ks[4], (4 * H,)),
        "w_ih_l1": u(ks[5], (4 * H, H)), "w_hh_l1": u(ks[6], (4 * H, H)),
        "b_ih_l1": u(ks[7], (4 * H,)),   "b_hh_l1": u(ks[8], (4 * H,)),
        "fc_w": u(ks[9], (num_intents, H)), "fc_b": u(ks[10], (num_intents,)),
    }


def pack_params(raw, param_dtype=jnp.float32):
    """Offline weight packing for the kernel.

    param_dtype=jnp.bfloat16 (recommended on v6e/v7x) halves weight VMEM/DMA bytes and uses the
    bf16 MXU rate; gate accumulation and c-state math stay f32 inside the kernel.
    """
    H = raw["w_hh_l0"].shape[1]
    NI = raw["fc_w"].shape[0]

    def reorder(w4h, axis=0):
        # PyTorch gate order [i, f, g, o] -> kernel order [i, f, o, g]
        i, f, g, o = jnp.split(w4h, 4, axis=axis)
        return jnp.concatenate([i, f, o, g], axis=axis)

    wih0 = reorder(raw["w_ih_l0"]).T                    # [H, 4H]
    whh0 = reorder(raw["w_hh_l0"]).T
    wih1 = reorder(raw["w_ih_l1"]).T
    whh1 = reorder(raw["w_hh_l1"]).T
    b0 = reorder(raw["b_ih_l0"] + raw["b_hh_l0"]).reshape(1, 4 * H)
    b1 = reorder(raw["b_ih_l1"] + raw["b_hh_l1"]).reshape(1, 4 * H)

    # h0 feeds both the layer-0 recurrence and the layer-1 input: pack side by side (no zero block)
    wrec0 = jnp.concatenate([whh0, wih1], axis=1)       # [H, 8H]

    NPAD = max(128, ((NI + 127) // 128) * 128)
    wfc = jnp.zeros((H, NPAD), jnp.float32).at[:, :NI].set(raw["fc_w"].T)
    bfc = jnp.zeros((1, NPAD), jnp.float32).at[:, :NI].set(raw["fc_b"])

    dt = param_dtype
    return {
        "embedding": raw["embedding"],
        "wih0": wih0.astype(dt), "wrec0": wrec0.astype(dt),
        "whh1": whh1.astype(dt), "wfc": wfc.astype(dt),
        "b0": b0, "b1": b1, "bfc": bfc,                 # biases stay f32 (added to f32 accumulators)
        "num_intents": NI,
    }


# ----------------------------------------------------------------------------- pure-JAX reference
def reference_forward(raw, input_seq, lengths):
    emb = raw["embedding"][input_seq].astype(jnp.float32)               # [B, T, H]
    B, T, H = emb.shape

    def cell(x, h, c, w_ih, w_hh, b_ih, b_hh):
        gates = x @ w_ih.T + h @ w_hh.T + b_ih + b_hh
        i, f, g, o = jnp.split(gates, 4, axis=1)
        i, f, o = jax.nn.sigmoid(i), jax.nn.sigmoid(f), jax.nn.sigmoid(o)
        g = jnp.tanh(g)
        c = f * c + i * g
        return o * jnp.tanh(c), c

    h0 = c0 = h1 = c1 = jnp.zeros((B, H), jnp.float32)
    for t in range(T):
        h0, c0 = cell(emb[:, t, :], h0, c0, raw["w_ih_l0"], raw["w_hh_l0"],
                      raw["b_ih_l0"], raw["b_hh_l0"])
        h1, c1 = cell(h0, h1, c1, raw["w_ih_l1"], raw["w_hh_l1"],
                      raw["b_ih_l1"], raw["b_hh_l1"])
    mask = (lengths.reshape(B, 1) == T).astype(jnp.float32)
    return (h1 * mask) @ raw["fc_w"].T + raw["fc_b"]


# ----------------------------------------------------------------------------- main
if __name__ == "__main__":
    VOCAB, HIDDEN, NUM_INTENTS = 32, 128, 8
    B, T = 8, 8

    key = jax.random.PRNGKey(0)
    k_params, k_seq = jax.random.split(key)
    raw = init_raw_params(k_params, VOCAB, HIDDEN, NUM_INTENTS)

    input_seq = jax.random.randint(k_seq, (B, T), 0, VOCAB, dtype=jnp.int32)
    # max(lengths) == T (sequences padded to the batch max, as pack_padded_sequence expects)
    lengths = jnp.array([T, 5, T, 3, 7, T, 2, 6], dtype=jnp.int32)
    assert int(jnp.max(lengths)) == T, "kernel assumes max(lengths) == T (pad to batch max)"

    ref = reference_forward(raw, input_seq, lengths)

    # f32 weights: strict numerical check against the pure-JAX reference.
    packed = pack_params(raw, jnp.float32)
    logits = intent_classifier_forward(packed, input_seq, lengths)
    jax.block_until_ready(logits)
    assert logits.shape == (B, NUM_INTENTS)
    assert logits.dtype == jnp.float32
    assert bool(jnp.allclose(logits, ref, rtol=1e-4, atol=1e-4)), "f32 kernel mismatch vs reference"

    # bf16 weights (recommended default on v6e/v7x): half the weight bytes, bf16 MXU rate,
    # f32 accumulation. LSTM recurrences amplify bf16 rounding -> loose tolerance here.
    packed_bf16 = pack_params(raw, jnp.bfloat16)
    logits_bf16 = intent_classifier_forward(packed_bf16, input_seq, lengths)
    jax.block_until_ready(logits_bf16)
    assert logits_bf16.shape == (B, NUM_INTENTS)
    assert bool(jnp.allclose(logits_bf16, ref, rtol=1e-1, atol=1e-1)), "bf16 kernel mismatch"

    print("KERNEL_OK")
</pallas_src>

<mosaic_0001>
module attributes {stable_mosaic.version = 11 : i64} {
  func.func @lstm_intent_kernel(%arg0: memref<8x8x128xf32, #tpu.memory_space<vmem>>, %arg1: memref<128x512xf32, #tpu.memory_space<vmem>>, %arg2: memref<1x512xf32, #tpu.memory_space<vmem>>, %arg3: memref<128x1024xf32, #tpu.memory_space<vmem>>, %arg4: memref<128x512xf32, #tpu.memory_space<vmem>>, %arg5: memref<1x512xf32, #tpu.memory_space<vmem>>, %arg6: memref<128x128xf32, #tpu.memory_space<vmem>>, %arg7: memref<1x128xf32, #tpu.memory_space<vmem>>, %arg8: memref<8x1xi32, #tpu.memory_space<vmem>>, %arg9: memref<8x128xf32, #tpu.memory_space<vmem>>, %arg10: memref<8x8x512xf32, #tpu.memory_space<vmem>>) attributes {dimension_semantics = [], scalar_prefetch = 0 : i64, scratch_operands = 1 : i64, tpu.core_type = #tpu.core_type<tc>} {
    %c0 = arith.constant 0 : index
    %c0_0 = arith.constant 0 : index
    %c0_1 = arith.constant 0 : index
    %0 = vector.load %arg0[%c0, %c0_0, %c0_1] : memref<8x8x128xf32, #tpu.memory_space<vmem>>, vector<8x8x128xf32>
    %1 = vector.shape_cast %0 : vector<8x8x128xf32> to vector<64x128xf32>
    %c0_2 = arith.constant 0 : index
    %c0_3 = arith.constant 0 : index
    %2 = vector.load %arg1[%c0_2, %c0_3] : memref<128x512xf32, #tpu.memory_space<vmem>>, vector<128x512xf32>
    %cst = arith.constant dense<0.000000e+00> : vector<64x512xf32>
    %3 = tpu.matmul %1, %2, %cst {dimension_numbers = #tpu.dot_dimension_numbers<[1], [0], [0], [1], [0, 0, 1, 1], [], []>} : vector<64x128xf32>, vector<128x512xf32>, vector<64x512xf32> -> vector<64x512xf32>
    %c0_4 = arith.constant 0 : index
    %c0_5 = arith.constant 0 : index
    %4 = vector.load %arg2[%c0_4, %c0_5] : memref<1x512xf32, #tpu.memory_space<vmem>>, vector<1x512xf32>
    %5 = vector.broadcast %4 : vector<1x512xf32> to vector<64x512xf32>
    %6 = arith.addf %3, %5 : vector<64x512xf32>
    %7 = vector.shape_cast %6 : vector<64x512xf32> to vector<8x8x512xf32>
    %c0_6 = arith.constant 0 : index
    %c0_7 = arith.constant 0 : index
    %c0_8 = arith.constant 0 : index
    %8 = vector.load %arg10[%c0_6, %c0_7, %c0_8] : memref<8x8x512xf32, #tpu.memory_space<vmem>>, vector<8x8x512xf32>
    tpu.vector_store %arg10[%c0_6, %c0_7, %c0_8], %7 {strides = array<i32>} : memref<8x8x512xf32, #tpu.memory_space<vmem>>, vector<8x8x512xf32>,
    %c0_9 = arith.constant 0 : index
    %c0_10 = arith.constant 0 : index
    %9 = vector.load %arg5[%c0_9, %c0_10] : memref<1x512xf32, #tpu.memory_space<vmem>>, vector<1x512xf32>
    %cst_11 = arith.constant 0.000000e+00 : f32
    %10 = vector.broadcast %cst_11 : f32 to vector<8x128xf32>
    %c0_12 = arith.constant 0 : index
    %c0_13 = arith.constant 0 : index
    %c0_14 = arith.constant 0 : index
    %11 = vector.load %arg10[%c0_12, %c0_13, %c0_14] : memref<8x8x512xf32, #tpu.memory_space<vmem>>, vector<1x8x512xf32>
    %12 = vector.shape_cast %11 : vector<1x8x512xf32> to vector<8x512xf32>
    %13 = vector.extract_strided_slice %12 {offsets = [0, 0], sizes = [8, 384], strides = [1, 1]} : vector<8x512xf32> to vector<8x384xf32>
    %14 = arith.negf %13 : vector<8x384xf32>
    %15 = math.exp %14 : vector<8x384xf32>
    %cst_15 = arith.constant 1.000000e+00 : f32
    %16 = vector.broadcast %cst_15 : f32 to vector<8x384xf32>
    %17 = arith.addf %16, %15 : vector<8x384xf32>
    %18 = arith.divf %16, %17 : vector<8x384xf32>
    %19 = vector.extract_strided_slice %12 {offsets = [0, 384], sizes = [8, 128], strides = [1, 1]} : vector<8x512xf32> to vector<8x128xf32>
    %20 = math.tanh %19 : vector<8x128xf32>
    %21 = vector.extract_strided_slice %18 {offsets = [0, 0], sizes = [8, 128], strides = [1, 1]} : vector<8x384xf32> to vector<8x128xf32>
    %22 = vector.extract_strided_slice %18 {offsets = [0, 128], sizes = [8, 128], strides = [1, 1]} : vector<8x384xf32> to vector<8x128xf32>
    %23 = vector.extract_strided_slice %18 {offsets = [0, 256], sizes = [8, 128], strides = [1, 1]} : vector<8x384xf32> to vector<8x128xf32>
    %24 = arith.mulf %22, %10 : vector<8x128xf32>
    %25 = arith.mulf %21, %20 : vector<8x128xf32>
    %26 = arith.addf %24, %25 : vector<8x128xf32>
    %27 = math.tanh %26 : vector<8x128xf32>
    %28 = arith.mulf %23, %27 : vector<8x128xf32>
    %cst_16 = arith.constant 0.000000e+00 : f32
    %29 = vector.broadcast %cst_16 : f32 to vector<8x128xf32>
    %c1_i32 = arith.constant 1 : i32
    %c0_17 = arith.constant 0 : index
    %c0_18 = arith.constant 0 : index
    %30 = vector.load %arg3[%c0_17, %c0_18] : memref<128x1024xf32, #tpu.memory_space<vmem>>, vector<128x1024xf32>
    %cst_19 = arith.constant dense<0.000000e+00> : vector<8x1024xf32>
    %31 = tpu.matmul %28, %30, %cst_19 {dimension_numbers = #tpu.dot_dimension_numbers<[1], [0], [0], [1], [0, 0, 1, 1], [], []>} : vector<8x128xf32>, vector<128x1024xf32>, vector<8x1024xf32> -> vector<8x1024xf32>
    %c0_20 = arith.constant 0 : index
    %c0_21 = arith.constant 0 : index
    %32 = vector.load %arg4[%c0_20, %c0_21] : memref<128x512xf32, #tpu.memory_space<vmem>>, vector<128x512xf32>
    %cst_22 = arith.constant dense<0.000000e+00> : vector<8x512xf32>
    %33 = tpu.matmul %29, %32, %cst_22 {dimension_numbers = #tpu.dot_dimension_numbers<[1], [0], [0], [1], [0, 0, 1, 1], [], []>} : vector<8x128xf32>, vector<128x512xf32>, vector<8x512xf32> -> vector<8x512xf32>
    %34 = vector.extract_strided_slice %31 {offsets = [0, 0], sizes = [8, 512], strides = [1, 1]} : vector<8x1024xf32> to vector<8x512xf32>
    %35 = arith.index_cast %c1_i32 : i32 to index
    %c0_23 = arith.constant 0 : index
    %c0_24 = arith.constant 0 : index
    %36 = vector.load %arg10[%35, %c0_23, %c0_24] : memref<8x8x512xf32, #tpu.memory_space<vmem>>, vector<1x8x512xf32>
    %37 = vector.shape_cast %36 : vector<1x8x512xf32> to vector<8x512xf32>
    %38 = arith.addf %34, %37 : vector<8x512xf32>
    %39 = vector.extract_strided_slice %38 {offsets = [0, 0], sizes = [8, 384], strides = [1, 1]} : vector<8x512xf32> to vector<8x384xf32>
    %40 = arith.negf %39 : vector<8x384xf32>
    %41 = math.exp %40 : vector<8x384xf32>
    %cst_25 = arith.constant 1.000000e+00 : f32
    %42 = vector.broadcast %cst_25 : f32 to vector<8x384xf32>
    %43 = arith.addf %42, %41 : vector<8x384xf32>
    %44 = arith.divf %42, %43 : vector<8x384xf32>
    %45 = vector.extract_strided_slice %38 {offsets = [0, 384], sizes = [8, 128], strides = [1, 1]} : vector<8x512xf32> to vector<8x128xf32>
    %46 = math.tanh %45 : vector<8x128xf32>
    %47 = vector.extract_strided_slice %44 {offsets = [0, 0], sizes = [8, 128], strides = [1, 1]} : vector<8x384xf32> to vector<8x128xf32>
    %48 = vector.extract_strided_slice %44 {offsets = [0, 128], sizes = [8, 128], strides = [1, 1]} : vector<8x384xf32> to vector<8x128xf32>
    %49 = vector.extract_strided_slice %44 {offsets = [0, 256], sizes = [8, 128], strides = [1, 1]} : vector<8x384xf32> to vector<8x128xf32>
    %50 = arith.mulf %48, %26 : vector<8x128xf32>
    %51 = arith.mulf %47, %46 : vector<8x128xf32>
    %52 = arith.addf %50, %51 : vector<8x128xf32>
    %53 = math.tanh %52 : vector<8x128xf32>
    %54 = arith.mulf %49, %53 : vector<8x128xf32>
    %55 = vector.extract_strided_slice %31 {offsets = [0, 512], sizes = [8, 512], strides = [1, 1]} : vector<8x1024xf32> to vector<8x512xf32>
    %56 = arith.addf %55, %33 : vector<8x512xf32>
    %57 = vector.broadcast %9 : vector<1x512xf32> to vector<8x512xf32>
    %58 = arith.addf %56, %57 : vector<8x512xf32>
    %59 = vector.extract_strided_slice %58 {offsets = [0, 0], sizes = [8, 384], strides = [1, 1]} : vector<8x512xf32> to vector<8x384xf32>
    %60 = arith.negf %59 : vector<8x384xf32>
    %61 = math.exp %60 : vector<8x384xf32>
    %cst_26 = arith.constant 1.000000e+00 : f32
    %62 = vector.broadcast %cst_26 : f32 to vector<8x384xf32>
    %63 = arith.addf %62, %61 : vector<8x384xf32>
    %64 = arith.divf %62, %63 : vector<8x384xf32>
    %65 = vector.extract_strided_slice %58 {offsets = [0, 384], sizes = [8, 128], strides = [1, 1]} : vector<8x512xf32> to vector<8x128xf32>
    %66 = math.tanh %65 : vector<8x128xf32>
    %67 = vector.extract_strided_slice %64 {offsets = [0, 0], sizes = [8, 128], strides = [1, 1]} : vector<8x384xf32> to vector<8x128xf32>
    %68 = vector.extract_strided_slice %64 {offsets = [0, 128], sizes = [8, 128], strides = [1, 1]} : vector<8x384xf32> to vector<8x128xf32>
    %69 = vector.extract_strided_slice %64 {offsets = [0, 256], sizes = [8, 128], strides = [1, 1]} : vector<8x384xf32> to vector<8x128xf32>
    %70 = arith.mulf %68, %10 : vector<8x128xf32>
    %71 = arith.mulf %67, %66 : vector<8x128xf32>
    %72 = arith.addf %70, %71 : vector<8x128xf32>
    %73 = math.tanh %72 : vector<8x128xf32>
    %74 = arith.mulf %69, %73 : vector<8x128xf32>
    %c2_i32 = arith.constant 2 : i32
    %c0_27 = arith.constant 0 : index
    %c0_28 = arith.constant 0 : index
    %75 = vector.load %arg3[%c0_27, %c0_28] : memref<128x1024xf32, #tpu.memory_space<vmem>>, vector<128x1024xf32>
    %cst_29 = arith.constant dense<0.000000e+00> : vector<8x1024xf32>
    %76 = tpu.matmul %54, %75, %cst_29 {dimension_numbers = #tpu.dot_dimension_numbers<[1], [0], [0], [1], [0, 0, 1, 1], [], []>} : vector<8x128xf32>, vector<128x1024xf32>, vector<8x1024xf32> -> vector<8x1024xf32>
    %c0_30 = arith.constant 0 : index
    %c0_31 = arith.constant 0 : index
    %77 = vector.load %arg4[%c0_30, %c0_31] : memref<128x512xf32, #tpu.memory_space<vmem>>, vector<128x512xf32>
    %cst_32 = arith.constant dense<0.000000e+00> : vector<8x512xf32>
    %78 = tpu.matmul %74, %77, %cst_32 {dimension_numbers = #tpu.dot_dimension_numbers<[1], [0], [0], [1], [0, 0, 1, 1], [], []>} : vector<8x128xf32>, vector<128x512xf32>, vector<8x512xf32> -> vector<8x512xf32>
    %79 = vector.extract_strided_slice %76 {offsets = [0, 0], sizes = [8, 512], strides = [1, 1]} : vector<8x1024xf32> to vector<8x512xf32>
    %80 = arith.index_cast %c2_i32 : i32 to index
    %c0_33 = arith.constant 0 : index
    %c0_34 = arith.constant 0 : index
    %81 = vector.load %arg10[%80, %c0_33, %c0_34] : memref<8x8x512xf32, #tpu.memory_space<vmem>>, vector<1x8x512xf32>
    %82 = vector.shape_cast %81 : vector<1x8x512xf32> to vector<8x512xf32>
    %83 = arith.addf %79, %82 : vector<8x512xf32>
    %84 = vector.extract_strided_slice %83 {offsets = [0, 0], sizes = [8, 384], strides = [1, 1]} : vector<8x512xf32> to vector<8x384xf32>
    %85 = arith.negf %84 : vector<8x384xf32>
    %86 = math.exp %85 : vector<8x384xf32>
    %cst_35 = arith.constant 1.000000e+00 : f32
    %87 = vector.broadcast %cst_35 : f32 to vector<8x384xf32>
    %88 = arith.addf %87, %86 : vector<8x384xf32>
    %89 = arith.divf %87, %88 : vector<8x384xf32>
    %90 = vector.extract_strided_slice %83 {offsets = [0, 384], sizes = [8, 128], strides = [1, 1]} : vector<8x512xf32> to vector<8x128xf32>
    %91 = math.tanh %90 : vector<8x128xf32>
    %92 = vector.extract_strided_slice %89 {offsets = [0, 0], sizes = [8, 128], strides = [1, 1]} : vector<8x384xf32> to vector<8x128xf32>
    %93 = vector.extract_strided_slice %89 {offsets = [0, 128], sizes = [8, 128], strides = [1, 1]} : vector<8x384xf32> to vector<8x128xf32>
    %94 = vector.extract_strided_slice %89 {offsets = [0, 256], sizes = [8, 128], strides = [1, 1]} : vector<8x384xf32> to vector<8x128xf32>
    %95 = arith.mulf %93, %52 : vector<8x128xf32>
    %96 = arith.mulf %92, %91 : vector<8x128xf32>
    %97 = arith.addf %95, %96 : vector<8x128xf32>
    %98 = math.tanh %97 : vector<8x128xf32>
    %99 = arith.mulf %94, %98 : vector<8x128xf32>
    %100 = vector.extract_strided_slice %76 {offsets = [0, 512], sizes = [8, 512], strides = [1, 1]} : vector<8x1024xf32> to vector<8x512xf32>
    %101 = arith.addf %100, %78 : vector<8x512xf32>
    %102 = vector.broadcast %9 : vector<1x512xf32> to vector<8x512xf32>
    %103 = arith.addf %101, %102 : vector<8x512xf32>
    %104 = vector.extract_strided_slice %103 {offsets = [0, 0], sizes = [8, 384], strides = [1, 1]} : vector<8x512xf32> to vector<8x384xf32>
    %105 = arith.negf %104 : vector<8x384xf32>
    %106 = math.exp %105 : vector<8x384xf32>
    %cst_36 = arith.constant 1.000000e+00 : f32
    %107 = vector.broadcast %cst_36 : f32 to vector<8x384xf32>
    %108 = arith.addf %107, %106 : vector<8x384xf32>
    %109 = arith.divf %107, %108 : vector<8x384xf32>
    %110 = vector.extract_strided_slice %103 {offsets = [0, 384], sizes = [8, 128], strides = [1, 1]} : vector<8x512xf32> to vector<8x128xf32>
    %111 = math.tanh %110 : vector<8x128xf32>
    %112 = vector.extract_strided_slice %109 {offsets = [0, 0], sizes = [8, 128], strides = [1, 1]} : vector<8x384xf32> to vector<8x128xf32>
    %113 = vector.extract_strided_slice %109 {offsets = [0, 128], sizes = [8, 128], strides = [1, 1]} : vector<8x384xf32> to vector<8x128xf32>
    %114 = vector.extract_strided_slice %109 {offsets = [0, 256], sizes = [8, 128], strides = [1, 1]} : vector<8x384xf32> to vector<8x128xf32>
    %115 = arith.mulf %113, %72 : vector<8x128xf32>
    %116 = arith.mulf %112, %111 : vector<8x128xf32>
    %117 = arith.addf %115, %116 : vector<8x128xf32>
    %118 = math.tanh %117 : vector<8x128xf32>
    %119 = arith.mulf %114, %118 : vector<8x128xf32>
    %c3_i32 = arith.constant 3 : i32
    %c0_37 = arith.constant 0 : index
    %c0_38 = arith.constant 0 : index
    %120 = vector.load %arg3[%c0_37, %c0_38] : memref<128x1024xf32, #tpu.memory_space<vmem>>, vector<128x1024xf32>
    %cst_39 = arith.constant dense<0.000000e+00> : vector<8x1024xf32>
    %121 = tpu.matmul %99, %120, %cst_39 {dimension_numbers = #tpu.dot_dimension_numbers<[1], [0], [0], [1], [0, 0, 1, 1], [], []>} : vector<8x128xf32>, vector<128x1024xf32>, vector<8x1024xf32> -> vector<8x1024xf32>
    %c0_40 = arith.constant 0 : index
    %c0_41 = arith.constant 0 : index
    %122 = vector.load %arg4[%c0_40, %c0_41] : memref<128x512xf32, #tpu.memory_space<vmem>>, vector<128x512xf32>
    %cst_42 = arith.constant dense<0.000000e+00> : vector<8x512xf32>
    %123 = tpu.matmul %119, %122, %cst_42 {dimension_numbers = #tpu.dot_dimension_numbers<[1], [0], [0], [1], [0, 0, 1, 1], [], []>} : vector<8x128xf32>, vector<128x512xf32>, vector<8x512xf32> -> vector<8x512xf32>
    %124 = vector.extract_strided_slice %121 {offsets = [0, 0], sizes = [8, 512], strides = [1, 1]} : vector<8x1024xf32> to vector<8x512xf32>
    %125 = arith.index_cast %c3_i32 : i32 to index
    %c0_43 = arith.constant 0 : index
    %c0_44 = arith.constant 0 : index
    %126 = vector.load %arg10[%125, %c0_43, %c0_44] : memref<8x8x512xf32, #tpu.memory_space<vmem>>, vector<1x8x512xf32>
    %127 = vector.shape_cast %126 : vector<1x8x512xf32> to vector<8x512xf32>
    %128 = arith.addf %124, %127 : vector<8x512xf32>
    %129 = vector.extract_strided_slice %128 {offsets = [0, 0], sizes = [8, 384], strides = [1, 1]} : vector<8x512xf32> to vector<8x384xf32>
    %130 = arith.negf %129 : vector<8x384xf32>
    %131 = math.exp %130 : vector<8x384xf32>
    %cst_45 = arith.constant 1.000000e+00 : f32
    %132 = vector.broadcast %cst_45 : f32 to vector<8x384xf32>
    %133 = arith.addf %132, %131 : vector<8x384xf32>
    %134 = arith.divf %132, %133 : vector<8x384xf32>
    %135 = vector.extract_strided_slice %128 {offsets = [0, 384], sizes = [8, 128], strides = [1, 1]} : vector<8x512xf32> to vector<8x128xf32>
    %136 = math.tanh %135 : vector<8x128xf32>
    %137 = vector.extract_strided_slice %134 {offsets = [0, 0], sizes = [8, 128], strides = [1, 1]} : vector<8x384xf32> to vector<8x128xf32>
    %138 = vector.extract_strided_slice %134 {offsets = [0, 128], sizes = [8, 128], strides = [1, 1]} : vector<8x384xf32> to vector<8x128xf32>
    %139 = vector.extract_strided_slice %134 {offsets = [0, 256], sizes = [8, 128], strides = [1, 1]} : vector<8x384xf32> to vector<8x128xf32>
    %140 = arith.mulf %138, %97 : vector<8x128xf32>
    %141 = arith.mulf %137, %136 : vector<8x128xf32>
    %142 = arith.addf %140, %141 : vector<8x128xf32>
    %143 = math.tanh %142 : vector<8x128xf32>
    %144 = arith.mulf %139, %143 : vector<8x128xf32>
    %145 = vector.extract_strided_slice %121 {offsets = [0, 512], sizes = [8, 512], strides = [1, 1]} : vector<8x1024xf32> to vector<8x512xf32>
    %146 = arith.addf %145, %123 : vector<8x512xf32>
    %147 = vector.broadcast %9 : vector<1x512xf32> to vector<8x512xf32>
    %148 = arith.addf %146, %147 : vector<8x512xf32>
    %149 = vector.extract_strided_slice %148 {offsets = [0, 0], sizes = [8, 384], strides = [1, 1]} : vector<8x512xf32> to vector<8x384xf32>
    %150 = arith.negf %149 : vector<8x384xf32>
    %151 = math.exp %150 : vector<8x384xf32>
    %cst_46 = arith.constant 1.000000e+00 : f32
    %152 = vector.broadcast %cst_46 : f32 to vector<8x384xf32>
    %153 = arith.addf %152, %151 : vector<8x384xf32>
    %154 = arith.divf %152, %153 : vector<8x384xf32>
    %155 = vector.extract_strided_slice %148 {offsets = [0, 384], sizes = [8, 128], strides = [1, 1]} : vector<8x512xf32> to vector<8x128xf32>
    %156 = math.tanh %155 : vector<8x128xf32>
    %157 = vector.extract_strided_slice %154 {offsets = [0, 0], sizes = [8, 128], strides = [1, 1]} : vector<8x384xf32> to vector<8x128xf32>
    %158 = vector.extract_strided_slice %154 {offsets = [0, 128], sizes = [8, 128], strides = [1, 1]} : vector<8x384xf32> to vector<8x128xf32>
    %159 = vector.extract_strided_slice %154 {offsets = [0, 256], sizes = [8, 128], strides = [1, 1]} : vector<8x384xf32> to vector<8x128xf32>
    %160 = arith.mulf %158, %117 : vector<8x128xf32>
    %161 = arith.mulf %157, %156 : vector<8x128xf32>
    %162 = arith.addf %160, %161 : vector<8x128xf32>
    %163 = math.tanh %162 : vector<8x128xf32>
    %164 = arith.mulf %159, %163 : vector<8x128xf32>
    %c4_i32 = arith.constant 4 : i32
    %c0_47 = arith.constant 0 : index
    %c0_48 = arith.constant 0 : index
    %165 = vector.load %arg3[%c0_47, %c0_48] : memref<128x1024xf32, #tpu.memory_space<vmem>>, vector<128x1024xf32>
    %cst_49 = arith.constant dense<0.000000e+00> : vector<8x1024xf32>
    %166 = tpu.matmul %144, %165, %cst_49 {dimension_numbers = #tpu.dot_dimension_numbers<[1], [0], [0], [1], [0, 0, 1, 1], [], []>} : vector<8x128xf32>, vector<128x1024xf32>, vector<8x1024xf32> -> vector<8x1024xf32>
    %c0_50 = arith.constant 0 : index
    %c0_51 = arith.constant 0 : index
    %167 = vector.load %arg4[%c0_50, %c0_51] : memref<128x512xf32, #tpu.memory_space<vmem>>, vector<128x512xf32>
    %cst_52 = arith.constant dense<0.000000e+00> : vector<8x512xf32>
    %168 = tpu.matmul %164, %167, %cst_52 {dimension_numbers = #tpu.dot_dimension_numbers<[1], [0], [0], [1], [0, 0, 1, 1], [], []>} : vector<8x128xf32>, vector<128x512xf32>, vector<8x512xf32> -> vector<8x512xf32>
    %169 = vector.extract_strided_slice %166 {offsets = [0, 0], sizes = [8, 512], strides = [1, 1]} : vector<8x1024xf32> to vector<8x512xf32>
    %170 = arith.index_cast %c4_i32 : i32 to index
    %c0_53 = arith.constant 0 : index
    %c0_54 = arith.constant 0 : index
    %171 = vector.load %arg10[%170, %c0_53, %c0_54] : memref<8x8x512xf32, #tpu.memory_space<vmem>>, vector<1x8x512xf32>
    %172 = vector.shape_cast %171 : vector<1x8x512xf32> to vector<8x512xf32>
    %173 = arith.addf %169, %172 : vector<8x512xf32>
    %174 = vector.extract_strided_slice %173 {offsets = [0, 0], sizes = [8, 384], strides = [1, 1]} : vector<8x512xf32> to vector<8x384xf32>
    %175 = arith.negf %174 : vector<8x384xf32>
    %176 = math.exp %175 : vector<8x384xf32>
    %cst_55 = arith.constant 1.000000e+00 : f32
    %177 = vector.broadcast %cst_55 : f32 to vector<8x384xf32>
    %178 = arith.addf %177, %176 : vector<8x384xf32>
    %179 = arith.divf %177, %178 : vector<8x384xf32>
    %180 = vector.extract_strided_slice %173 {offsets = [0, 384], sizes = [8, 128], strides = [1, 1]} : vector<8x512xf32> to vector<8x128xf32>
    %181 = math.tanh %180 : vector<8x128xf32>
    %182 = vector.extract_strided_slice %179 {offsets = [0, 0], sizes = [8, 128], strides = [1, 1]} : vector<8x384xf32> to vector<8x128xf32>
    %183 = vector.extract_strided_slice %179 {offsets = [0, 128], sizes = [8, 128], strides = [1, 1]} : vector<8x384xf32> to vector<8x128xf32>
    %184 = vector.extract_strided_slice %179 {offsets = [0, 256], sizes = [8, 128], strides = [1, 1]} : vector<8x384xf32> to vector<8x128xf32>
    %185 = arith.mulf %183, %142 : vector<8x128xf32>
    %186 = arith.mulf %182, %181 : vector<8x128xf32>
    %187 = arith.addf %185, %186 : vector<8x128xf32>
    %188 = math.tanh %187 : vector<8x128xf32>
    %189 = arith.mulf %184, %188 : vector<8x128xf32>
    %190 = vector.extract_strided_slice %166 {offsets = [0, 512], sizes = [8, 512], strides = [1, 1]} : vector<8x1024xf32> to vector<8x512xf32>
    %191 = arith.addf %190, %168 : vector<8x512xf32>
    %192 = vector.broadcast %9 : vector<1x512xf32> to vector<8x512xf32>
    %193 = arith.addf %191, %192 : vector<8x512xf32>
    %194 = vector.extract_strided_slice %193 {offsets = [0, 0], sizes = [8, 384], strides = [1, 1]} : vector<8x512xf32> to vector<8x384xf32>
    %195 = arith.negf %194 : vector<8x384xf32>
    %196 = math.exp %195 : vector<8x384xf32>
    %cst_56 = arith.constant 1.000000e+00 : f32
    %197 = vector.broadcast %cst_56 : f32 to vector<8x384xf32>
    %198 = arith.addf %197, %196 : vector<8x384xf32>
    %199 = arith.divf %197, %198 : vector<8x384xf32>
    %200 = vector.extract_strided_slice %193 {offsets = [0, 384], sizes = [8, 128], strides = [1, 1]} : vector<8x512xf32> to vector<8x128xf32>
    %201 = math.tanh %200 : vector<8x128xf32>
    %202 = vector.extract_strided_slice %199 {offsets = [0, 0], sizes = [8, 128], strides = [1, 1]} : vector<8x384xf32> to vector<8x128xf32>
    %203 = vector.extract_strided_slice %199 {offsets = [0, 128], sizes = [8, 128], strides = [1, 1]} : vector<8x384xf32> to vector<8x128xf32>
    %204 = vector.extract_strided_slice %199 {offsets = [0, 256], sizes = [8, 128], strides = [1, 1]} : vector<8x384xf32> to vector<8x128xf32>
    %205 = arith.mulf %203, %162 : vector<8x128xf32>
    %206 = arith.mulf %202, %201 : vector<8x128xf32>
    %207 = arith.addf %205, %206 : vector<8x128xf32>
    %208 = math.tanh %207 : vector<8x128xf32>
    %209 = arith.mulf %204, %208 : vector<8x128xf32>
    %c5_i32 = arith.constant 5 : i32
    %c0_57 = arith.constant 0 : index
    %c0_58 = arith.constant 0 : index
    %210 = vector.load %arg3[%c0_57, %c0_58] : memref<128x1024xf32, #tpu.memory_space<vmem>>, vector<128x1024xf32>
    %cst_59 = arith.constant dense<0.000000e+00> : vector<8x1024xf32>
    %211 = tpu.matmul %189, %210, %cst_59 {dimension_numbers = #tpu.dot_dimension_numbers<[1], [0], [0], [1], [0, 0, 1, 1], [], []>} : vector<8x128xf32>, vector<128x1024xf32>, vector<8x1024xf32> -> vector<8x1024xf32>
    %c0_60 = arith.constant 0 : index
    %c0_61 = arith.constant 0 : index
    %212 = vector.load %arg4[%c0_60, %c0_61] : memref<128x512xf32, #tpu.memory_space<vmem>>, vector<128x512xf32>
    %cst_62 = arith.constant dense<0.000000e+00> : vector<8x512xf32>
    %213 = tpu.matmul %209, %212, %cst_62 {dimension_numbers = #tpu.dot_dimension_numbers<[1], [0], [0], [1], [0, 0, 1, 1], [], []>} : vector<8x128xf32>, vector<128x512xf32>, vector<8x512xf32> -> vector<8x512xf32>
    %214 = vector.extract_strided_slice %211 {offsets = [0, 0], sizes = [8, 512], strides = [1, 1]} : vector<8x1024xf32> to vector<8x512xf32>
    %215 = arith.index_cast %c5_i32 : i32 to index
    %c0_63 = arith.constant 0 : index
    %c0_64 = arith.constant 0 : index
    %216 = vector.load %arg10[%215, %c0_63, %c0_64] : memref<8x8x512xf32, #tpu.memory_space<vmem>>, vector<1x8x512xf32>
    %217 = vector.shape_cast %216 : vector<1x8x512xf32> to vector<8x512xf32>
    %218 = arith.addf %214, %217 : vector<8x512xf32>
    %219 = vector.extract_strided_slice %218 {offsets = [0, 0], sizes = [8, 384], strides = [1, 1]} : vector<8x512xf32> to vector<8x384xf32>
    %220 = arith.negf %219 : vector<8x384xf32>
    %221 = math.exp %220 : vector<8x384xf32>
    %cst_65 = arith.constant 1.000000e+00 : f32
    %222 = vector.broadcast %cst_65 : f32 to vector<8x384xf32>
    %223 = arith.addf %222, %221 : vector<8x384xf32>
    %224 = arith.divf %222, %223 : vector<8x384xf32>
    %225 = vector.extract_strided_slice %218 {offsets = [0, 384], sizes = [8, 128], strides = [1, 1]} : vector<8x512xf32> to vector<8x128xf32>
    %226 = math.tanh %225 : vector<8x128xf32>
    %227 = vector.extract_strided_slice %224 {offsets = [0, 0], sizes = [8, 128], strides = [1, 1]} : vector<8x384xf32> to vector<8x128xf32>
    %228 = vector.extract_strided_slice %224 {offsets = [0, 128], sizes = [8, 128], strides = [1, 1]} : vector<8x384xf32> to vector<8x128xf32>
    %229 = vector.extract_strided_slice %224 {offsets = [0, 256], sizes = [8, 128], strides = [1, 1]} : vector<8x384xf32> to vector<8x128xf32>
    %230 = arith.mulf %228, %187 : vector<8x128xf32>
    %231 = arith.mulf %227, %226 : vector<8x128xf32>
    %232 = arith.addf %230, %231 : vector<8x128xf32>
    %233 = math.tanh %232 : vector<8x128xf32>
    %234 = arith.mulf %229, %233 : vector<8x128xf32>
    %235 = vector.extract_strided_slice %211 {offsets = [0, 512], sizes = [8, 512], strides = [1, 1]} : vector<8x1024xf32> to vector<8x512xf32>
    %236 = arith.addf %235, %213 : vector<8x512xf32>
    %237 = vector.broadcast %9 : vector<1x512xf32> to vector<8x512xf32>
    %238 = arith.addf %236, %237 : vector<8x512xf32>
    %239 = vector.extract_strided_slice %238 {offsets = [0, 0], sizes = [8, 384], strides = [1, 1]} : vector<8x512xf32> to vector<8x384xf32>
    %240 = arith.negf %239 : vector<8x384xf32>
    %241 = math.exp %240 : vector<8x384xf32>
    %cst_66 = arith.constant 1.000000e+00 : f32
    %242 = vector.broadcast %cst_66 : f32 to vector<8x384xf32>
    %243 = arith.addf %242, %241 : vector<8x384xf32>
    %244 = arith.divf %242, %243 : vector<8x384xf32>
    %245 = vector.extract_strided_slice %238 {offsets = [0, 384], sizes = [8, 128], strides = [1, 1]} : vector<8x512xf32> to vector<8x128xf32>
    %246 = math.tanh %245 : vector<8x128xf32>
    %247 = vector.extract_strided_slice %244 {offsets = [0, 0], sizes = [8, 128], strides = [1, 1]} : vector<8x384xf32> to vector<8x128xf32>
    %248 = vector.extract_strided_slice %244 {offsets = [0, 128], sizes = [8, 128], strides = [1, 1]} : vector<8x384xf32> to vector<8x128xf32>
    %249 = vector.extract_strided_slice %244 {offsets = [0, 256], sizes = [8, 128], strides = [1, 1]} : vector<8x384xf32> to vector<8x128xf32>
    %250 = arith.mulf %248, %207 : vector<8x128xf32>
    %251 = arith.mulf %247, %246 : vector<8x128xf32>
    %252 = arith.addf %250, %251 : vector<8x128xf32>
    %253 = math.tanh %252 : vector<8x128xf32>
    %254 = arith.mulf %249, %253 : vector<8x128xf32>
    %c6_i32 = arith.constant 6 : i32
    %c0_67 = arith.constant 0 : index
    %c0_68 = arith.constant 0 : index
    %255 = vector.load %arg3[%c0_67, %c0_68] : memref<128x1024xf32, #tpu.memory_space<vmem>>, vector<128x1024xf32>
    %cst_69 = arith.constant dense<0.000000e+00> : vector<8x1024xf32>
    %256 = tpu.matmul %234, %255, %cst_69 {dimension_numbers = #tpu.dot_dimension_numbers<[1], [0], [0], [1], [0, 0, 1, 1], [], []>} : vector<8x128xf32>, vector<128x1024xf32>, vector<8x1024xf32> -> vector<8x1024xf32>
    %c0_70 = arith.constant 0 : index
    %c0_71 = arith.constant 0 : index
    %257 = vector.load %arg4[%c0_70, %c0_71] : memref<128x512xf32, #tpu.memory_space<vmem>>, vector<128x512xf32>
    %cst_72 = arith.constant dense<0.000000e+00> : vector<8x512xf32>
    %258 = tpu.matmul %254, %257, %cst_72 {dimension_numbers = #tpu.dot_dimension_numbers<[1], [0], [0], [1], [0, 0, 1, 1], [], []>} : vector<8x128xf32>, vector<128x512xf32>, vector<8x512xf32> -> vector<8x512xf32>
    %259 = vector.extract_strided_slice %256 {offsets = [0, 0], sizes = [8, 512], strides = [1, 1]} : vector<8x1024xf32> to vector<8x512xf32>
    %260 = arith.index_cast %c6_i32 : i32 to index
    %c0_73 = arith.constant 0 : index
    %c0_74 = arith.constant 0 : index
    %261 = vector.load %arg10[%260, %c0_73, %c0_74] : memref<8x8x512xf32, #tpu.memory_space<vmem>>, vector<1x8x512xf32>
    %262 = vector.shape_cast %261 : vector<1x8x512xf32> to vector<8x512xf32>
    %263 = arith.addf %259, %262 : vector<8x512xf32>
    %264 = vector.extract_strided_slice %263 {offsets = [0, 0], sizes = [8, 384], strides = [1, 1]} : vector<8x512xf32> to vector<8x384xf32>
    %265 = arith.negf %264 : vector<8x384xf32>
    %266 = math.exp %265 : vector<8x384xf32>
    %cst_75 = arith.constant 1.000000e+00 : f32
    %267 = vector.broadcast %cst_75 : f32 to vector<8x384xf32>
    %268 = arith.addf %267, %266 : vector<8x384xf32>
    %269 = arith.divf %267, %268 : vector<8x384xf32>
    %270 = vector.extract_strided_slice %263 {offsets = [0, 384], sizes = [8, 128], strides = [1, 1]} : vector<8x512xf32> to vector<8x128xf32>
    %271 = math.tanh %270 : vector<8x128xf32>
    %272 = vector.extract_strided_slice %269 {offsets = [0, 0], sizes = [8, 128], strides = [1, 1]} : vector<8x384xf32> to vector<8x128xf32>
    %273 = vector.extract_strided_slice %269 {offsets = [0, 128], sizes = [8, 128], strides = [1, 1]} : vector<8x384xf32> to vector<8x128xf32>
    %274 = vector.extract_strided_slice %269 {offsets = [0, 256], sizes = [8, 128], strides = [1, 1]} : vector<8x384xf32> to vector<8x128xf32>
    %275 = arith.mulf %273, %232 : vector<8x128xf32>
    %276 = arith.mulf %272, %271 : vector<8x128xf32>
    %277 = arith.addf %275, %276 : vector<8x128xf32>
    %278 = math.tanh %277 : vector<8x128xf32>
    %279 = arith.mulf %274, %278 : vector<8x128xf32>
    %280 = vector.extract_strided_slice %256 {offsets = [0, 512], sizes = [8, 512], strides = [1, 1]} : vector<8x1024xf32> to vector<8x512xf32>
    %281 = arith.addf %280, %258 : vector<8x512xf32>
    %282 = vector.broadcast %9 : vector<1x512xf32> to vector<8x512xf32>
    %283 = arith.addf %281, %282 : vector<8x512xf32>
    %284 = vector.extract_strided_slice %283 {offsets = [0, 0], sizes = [8, 384], strides = [1, 1]} : vector<8x512xf32> to vector<8x384xf32>
    %285 = arith.negf %284 : vector<8x384xf32>
    %286 = math.exp %285 : vector<8x384xf32>
    %cst_76 = arith.constant 1.000000e+00 : f32
    %287 = vector.broadcast %cst_76 : f32 to vector<8x384xf32>
    %288 = arith.addf %287, %286 : vector<8x384xf32>
    %289 = arith.divf %287, %288 : vector<8x384xf32>
    %290 = vector.extract_strided_slice %283 {offsets = [0, 384], sizes = [8, 128], strides = [1, 1]} : vector<8x512xf32> to vector<8x128xf32>
    %291 = math.tanh %290 : vector<8x128xf32>
    %292 = vector.extract_strided_slice %289 {offsets = [0, 0], sizes = [8, 128], strides = [1, 1]} : vector<8x384xf32> to vector<8x128xf32>
    %293 = vector.extract_strided_slice %289 {offsets = [0, 128], sizes = [8, 128], strides = [1, 1]} : vector<8x384xf32> to vector<8x128xf32>
    %294 = vector.extract_strided_slice %289 {offsets = [0, 256], sizes = [8, 128], strides = [1, 1]} : vector<8x384xf32> to vector<8x128xf32>
    %295 = arith.mulf %293, %252 : vector<8x128xf32>
    %296 = arith.mulf %292, %291 : vector<8x128xf32>
    %297 = arith.addf %295, %296 : vector<8x128xf32>
    %298 = math.tanh %297 : vector<8x128xf32>
    %299 = arith.mulf %294, %298 : vector<8x128xf32>
    %c7_i32 = arith.constant 7 : i32
    %c0_77 = arith.constant 0 : index
    %c0_78 = arith.constant 0 : index
    %300 = vector.load %arg3[%c0_77, %c0_78] : memref<128x1024xf32, #tpu.memory_space<vmem>>, vector<128x1024xf32>
    %cst_79 = arith.constant dense<0.000000e+00> : vector<8x1024xf32>
    %301 = tpu.matmul %279, %300, %cst_79 {dimension_numbers = #tpu.dot_dimension_numbers<[1], [0], [0], [1], [0, 0, 1, 1], [], []>} : vector<8x128xf32>, vector<128x1024xf32>, vector<8x1024xf32> -> vector<8x1024xf32>
    %c0_80 = arith.constant 0 : index
    %c0_81 = arith.constant 0 : index
    %302 = vector.load %arg4[%c0_80, %c0_81] : memref<128x512xf32, #tpu.memory_space<vmem>>, vector<128x512xf32>
    %cst_82 = arith.constant dense<0.000000e+00> : vector<8x512xf32>
    %303 = tpu.matmul %299, %302, %cst_82 {dimension_numbers = #tpu.dot_dimension_numbers<[1], [0], [0], [1], [0, 0, 1, 1], [], []>} : vector<8x128xf32>, vector<128x512xf32>, vector<8x512xf32> -> vector<8x512xf32>
    %304 = vector.extract_strided_slice %301 {offsets = [0, 0], sizes = [8, 512], strides = [1, 1]} : vector<8x1024xf32> to vector<8x512xf32>
    %305 = arith.index_cast %c7_i32 : i32 to index
    %c0_83 = arith.constant 0 : index
    %c0_84 = arith.constant 0 : index
    %306 = vector.load %arg10[%305, %c0_83, %c0_84] : memref<8x8x512xf32, #tpu.memory_space<vmem>>, vector<1x8x512xf32>
    %307 = vector.shape_cast %306 : vector<1x8x512xf32> to vector<8x512xf32>
    %308 = arith.addf %304, %307 : vector<8x512xf32>
    %309 = vector.extract_strided_slice %308 {offsets = [0, 0], sizes = [8, 384], strides = [1, 1]} : vector<8x512xf32> to vector<8x384xf32>
    %310 = arith.negf %309 : vector<8x384xf32>
    %311 = math.exp %310 : vector<8x384xf32>
    %cst_85 = arith.constant 1.000000e+00 : f32
    %312 = vector.broadcast %cst_85 : f32 to vector<8x384xf32>
    %313 = arith.addf %312, %311 : vector<8x384xf32>
    %314 = arith.divf %312, %313 : vector<8x384xf32>
    %315 = vector.extract_strided_slice %308 {offsets = [0, 384], sizes = [8, 128], strides = [1, 1]} : vector<8x512xf32> to vector<8x128xf32>
    %316 = math.tanh %315 : vector<8x128xf32>
    %317 = vector.extract_strided_slice %314 {offsets = [0, 0], sizes = [8, 128], strides = [1, 1]} : vector<8x384xf32> to vector<8x128xf32>
    %318 = vector.extract_strided_slice %314 {offsets = [0, 128], sizes = [8, 128], strides = [1, 1]} : vector<8x384xf32> to vector<8x128xf32>
    %319 = vector.extract_strided_slice %314 {offsets = [0, 256], sizes = [8, 128], strides = [1, 1]} : vector<8x384xf32> to vector<8x128xf32>
    %320 = arith.mulf %318, %277 : vector<8x128xf32>
    %321 = arith.mulf %317, %316 : vector<8x128xf32>
    %322 = arith.addf %320, %321 : vector<8x128xf32>
    %323 = math.tanh %322 : vector<8x128xf32>
    %324 = arith.mulf %319, %323 : vector<8x128xf32>
    %325 = vector.extract_strided_slice %301 {offsets = [0, 512], sizes = [8, 512], strides = [1, 1]} : vector<8x1024xf32> to vector<8x512xf32>
    %326 = arith.addf %325, %303 : vector<8x512xf32>
    %327 = vector.broadcast %9 : vector<1x512xf32> to vector<8x512xf32>
    %328 = arith.addf %326, %327 : vector<8x512xf32>
    %329 = vector.extract_strided_slice %328 {offsets = [0, 0], sizes = [8, 384], strides = [1, 1]} : vector<8x512xf32> to vector<8x384xf32>
    %330 = arith.negf %329 : vector<8x384xf32>
    %331 = math.exp %330 : vector<8x384xf32>
    %cst_86 = arith.constant 1.000000e+00 : f32
    %332 = vector.broadcast %cst_86 : f32 to vector<8x384xf32>
    %333 = arith.addf %332, %331 : vector<8x384xf32>
    %334 = arith.divf %332, %333 : vector<8x384xf32>
    %335 = vector.extract_strided_slice %328 {offsets = [0, 384], sizes = [8, 128], strides = [1, 1]} : vector<8x512xf32> to vector<8x128xf32>
    %336 = math.tanh %335 : vector<8x128xf32>
    %337 = vector.extract_strided_slice %334 {offsets = [0, 0], sizes = [8, 128], strides = [1, 1]} : vector<8x384xf32> to vector<8x128xf32>
    %338 = vector.extract_strided_slice %334 {offsets = [0, 128], sizes = [8, 128], strides = [1, 1]} : vector<8x384xf32> to vector<8x128xf32>
    %339 = vector.extract_strided_slice %334 {offsets = [0, 256], sizes = [8, 128], strides = [1, 1]} : vector<8x384xf32> to vector<8x128xf32>
    %340 = arith.mulf %338, %297 : vector<8x128xf32>
    %341 = arith.mulf %337, %336 : vector<8x128xf32>
    %342 = arith.addf %340, %341 : vector<8x128xf32>
    %343 = math.tanh %342 : vector<8x128xf32>
    %344 = arith.mulf %339, %343 : vector<8x128xf32>
    %c7_i32_87 = arith.constant 7 : i32
    %c0_88 = arith.constant 0 : index
    %c512 = arith.constant 512 : index
    %345 = vector.load %arg3[%c0_88, %c512] : memref<128x1024xf32, #tpu.memory_space<vmem>>, vector<128x512xf32>
    %cst_89 = arith.constant dense<0.000000e+00> : vector<8x512xf32>
    %346 = tpu.matmul %324, %345, %cst_89 {dimension_numbers = #tpu.dot_dimension_numbers<[1], [0], [0], [1], [0, 0, 1, 1], [], []>} : vector<8x128xf32>, vector<128x512xf32>, vector<8x512xf32> -> vector<8x512xf32>
    %c0_90 = arith.constant 0 : index
    %c0_91 = arith.constant 0 : index
    %347 = vector.load %arg4[%c0_90, %c0_91] : memref<128x512xf32, #tpu.memory_space<vmem>>, vector<128x512xf32>
    %cst_92 = arith.constant dense<0.000000e+00> : vector<8x512xf32>
    %348 = tpu.matmul %344, %347, %cst_92 {dimension_numbers = #tpu.dot_dimension_numbers<[1], [0], [0], [1], [0, 0, 1, 1], [], []>} : vector<8x128xf32>, vector<128x512xf32>, vector<8x512xf32> -> vector<8x512xf32>
    %349 = arith.addf %346, %348 : vector<8x512xf32>
    %350 = vector.broadcast %9 : vector<1x512xf32> to vector<8x512xf32>
    %351 = arith.addf %349, %350 : vector<8x512xf32>
    %352 = vector.extract_strided_slice %351 {offsets = [0, 0], sizes = [8, 384], strides = [1, 1]} : vector<8x512xf32> to vector<8x384xf32>
    %353 = arith.negf %352 : vector<8x384xf32>
    %354 = math.exp %353 : vector<8x384xf32>
    %cst_93 = arith.constant 1.000000e+00 : f32
    %355 = vector.broadcast %cst_93 : f32 to vector<8x384xf32>
    %356 = arith.addf %355, %354 : vector<8x384xf32>
    %357 = arith.divf %355, %356 : vector<8x384xf32>
    %358 = vector.extract_strided_slice %351 {offsets = [0, 384], sizes = [8, 128], strides = [1, 1]} : vector<8x512xf32> to vector<8x128xf32>
    %359 = math.tanh %358 : vector<8x128xf32>
    %360 = vector.extract_strided_slice %357 {offsets = [0, 0], sizes = [8, 128], strides = [1, 1]} : vector<8x384xf32> to vector<8x128xf32>
    %361 = vector.extract_strided_slice %357 {offsets = [0, 128], sizes = [8, 128], strides = [1, 1]} : vector<8x384xf32> to vector<8x128xf32>
    %362 = vector.extract_strided_slice %357 {offsets = [0, 256], sizes = [8, 128], strides = [1, 1]} : vector<8x384xf32> to vector<8x128xf32>
    %363 = arith.mulf %361, %342 : vector<8x128xf32>
    %364 = arith.mulf %360, %359 : vector<8x128xf32>
    %365 = arith.addf %363, %364 : vector<8x128xf32>
    %366 = math.tanh %365 : vector<8x128xf32>
    %367 = arith.mulf %362, %366 : vector<8x128xf32>
    %c0_94 = arith.constant 0 : index
    %c0_95 = arith.constant 0 : index
    %368 = vector.load %arg8[%c0_94, %c0_95] : memref<8x1xi32, #tpu.memory_space<vmem>>, vector<8x1xi32>
    %c8_i32 = arith.constant 8 : i32
    %369 = vector.broadcast %c8_i32 : i32 to vector<8x1xi32>
    %370 = arith.cmpi eq, %368, %369 : vector<8x1xi32>
    %371 = arith.extui %370 : vector<8x1xi1> to vector<8x1xi32>
    %372 = arith.sitofp %371 : vector<8x1xi32> to vector<8x1xf32>
    %373 = vector.broadcast %372 : vector<8x1xf32> to vector<8x128xf32>
    %374 = arith.mulf %367, %373 : vector<8x128xf32>
    %c0_96 = arith.constant 0 : index
    %c0_97 = arith.constant 0 : index
    %375 = vector.load %arg6[%c0_96, %c0_97] : memref<128x128xf32, #tpu.memory_space<vmem>>, vector<128x128xf32>
    %cst_98 = arith.constant dense<0.000000e+00> : vector<8x128xf32>
    %376 = tpu.matmul %374, %375, %cst_98 {dimension_numbers = #tpu.dot_dimension_numbers<[1], [0], [0], [1], [0, 0, 1, 1], [], []>} : vector<8x128xf32>, vector<128x128xf32>, vector<8x128xf32> -> vector<8x128xf32>
    %c0_99 = arith.constant 0 : index
    %c0_100 = arith.constant 0 : index
    %377 = vector.load %arg7[%c0_99, %c0_100] : memref<1x128xf32, #tpu.memory_space<vmem>>, vector<1x128xf32>
    %378 = vector.broadcast %377 : vector<1x128xf32> to vector<8x128xf32>
    %379 = arith.addf %376, %378 : vector<8x128xf32>
    %c0_101 = arith.constant 0 : index
    %c0_102 = arith.constant 0 : index
    %380 = vector.load %arg9[%c0_101, %c0_102] : memref<8x128xf32, #tpu.memory_space<vmem>>, vector<8x128xf32>
    tpu.vector_store %arg9[%c0_101, %c0_102], %379 {strides = array<i32>} : memref<8x128xf32, #tpu.memory_space<vmem>>, vector<8x128xf32>,
    return
  }
}

</mosaic_0001>

<llo_original>
// kernel: tpu_custom_call.1
$region0: #{tpu_custom_call.1}
  #allocation0 [shape = 'u32[]', space=smem, size = 0x4, offset = 0x4, fixed_abs, tag = 'smem constant byte address 0x4 - core index']
  #allocation1 [shape = 'u32[72,128]{1,0:T(1,128)}', space=vmem, size = 0x9000, scoped, tag = 'internal scratch']
  #allocation2 [shape = 'f32[8,8,512]{2,1,0:T(8,128)}', space=vmem, size = 0x20000, scoped, tag = 'scratch operand']
  %s0 = inlined_call_operand.hbm [shape: f32[8,8,128], index: 0, kind: input, shape index: {}]
  %s1 = inlined_call_operand.hbm [shape: f32[128,512], index: 1, kind: input, shape index: {}]
  %s2 = inlined_call_operand.vmem [shape: f32[1,512], index: 2, kind: input, shape index: {}]
  %s3 = inlined_call_operand.hbm [shape: f32[128,1024], index: 3, kind: input, shape index: {}]
  %s4 = inlined_call_operand.hbm [shape: f32[128,512], index: 4, kind: input, shape index: {}]
  %s5 = inlined_call_operand.vmem [shape: f32[1,512], index: 5, kind: input, shape index: {}]
  %s6 = inlined_call_operand.hbm [shape: f32[128,128], index: 6, kind: input, shape index: {}]
  %s7 = inlined_call_operand.vmem [shape: f32[1,128], index: 7, kind: input, shape index: {}]
  %s8 = inlined_call_operand.vmem [shape: s32[8,1], index: 8, kind: input, shape index: {}]
  %s9 = inlined_call_operand.hbm [shape: f32[8,128], index: 9, kind: output, shape index: {}]
  %s10 = sld [smem:[#allocation0]]
  $region66: #{tpu_custom_call.1} parent=0
    _
  %s12 = ssub.s32 1, %s10
  %s13 = scalar_select 0, %s12, %s10
  $region1: #{tpu_custom_call.1} parent=0
    #allocation3 [shape = 'u8[32768]{0}', space=vmem, size = 0x8000, scoped, tag = 'input window, operand 0, single buffered']
    #allocation4 [shape = 's32[1]{0}', space=sflag, size = 0x4, scoped, tag = 'scoped memory for tpu_custom_call.1']
    #allocation5 [shape = 's32[1]{0}', space=sflag, size = 0x4, scoped, tag = 'scoped memory for tpu_custom_call.1']
    #allocation6 [shape = 'u8[262144]{0}', space=vmem, size = 0x40000, scoped, tag = 'input window, operand 1, single buffered']
    #allocation7 [shape = 's32[1]{0}', space=sflag, size = 0x4, scoped, tag = 'scoped memory for tpu_custom_call.1']
    #allocation8 [shape = 'u8[524288]{0}', space=vmem, size = 0x80000, scoped, tag = 'input window, operand 3, single buffered']
    #allocation9 [shape = 'u8[262144]{0}', space=vmem, size = 0x40000, scoped, tag = 'input window, operand 4, single buffered']
    #allocation10 [shape = 's32[1]{0}', space=sflag, size = 0x4, scoped, tag = 'scoped memory for tpu_custom_call.1']
    #allocation11 [shape = 'u8[65536]{0}', space=vmem, size = 0x10000, scoped, tag = 'input window, operand 6, single buffered']
    #allocation12 [shape = 'u8[4096]{0}', space=vmem, size = 0x1000, scoped, tag = 'output window, operand 0, single buffered']
    %14 = vsyncpa [#allocation4], 0
    %15 = vsyncpa [#allocation7], 0
    %16 = vsyncpa [#allocation10], 0
    %17 = vsyncpa [#allocation5], 0
    // Predicated region
    $region2: #{tpu_custom_call.1} parent=1 // pred_check
      _
    $region3: #{tpu_custom_call.1} parent=1 // pred_check_branch
      %19 = sbr.rel (0) target = $region5
    $region4: #{tpu_custom_call.1} parent=1 // pred_region
      %21 = vsyncadd [#allocation4], 0
      %s22 = sshll.u32 %s0, 4
      %s23 = int_to_ptr.hbm [resolvable:$true] %s22
      %s24 = sshll.u32 [#allocation3], 4
      %s25 = int_to_ptr.vmem [resolvable:$true] %s24
      %30 = dma.hbm_to_vmem [thread:$0]  %s23, 1024, %s25, [#allocation4], 128, 128, 8
    $region5: #{tpu_custom_call.1} parent=1 // pred_fallthru
      _
    // Predicated region
    $region6: #{tpu_custom_call.1} parent=1 // pred_check
      _
    $region7: #{tpu_custom_call.1} parent=1 // pred_check_branch
      %32 = sbr.rel (0) target = $region9
    $region8: #{tpu_custom_call.1} parent=1 // pred_region
      %34 = vsyncadd [#allocation7], 0
      %s35 = sshll.u32 %s1, 4
      %s36 = int_to_ptr.hbm [resolvable:$true] %s35
      %s37 = sshll.u32 [#allocation6], 4
      %s38 = int_to_ptr.vmem [resolvable:$true] %s37
      %43 = dma.hbm_to_vmem [thread:$0]  %s36, 8192, %s38, [#allocation7], 512, 512, 32
    $region9: #{tpu_custom_call.1} parent=1 // pred_fallthru
      _
    // Predicated region
    $region10: #{tpu_custom_call.1} parent=1 // pred_check
      _
    $region11: #{tpu_custom_call.1} parent=1 // pred_check_branch
      %45 = sbr.rel (0) target = $region13
    $region12: #{tpu_custom_call.1} parent=1 // pred_region
      _
    $region13: #{tpu_custom_call.1} parent=1 // pred_fallthru
      _
    // Predicated region
    $region14: #{tpu_custom_call.1} parent=1 // pred_check
      _
    $region15: #{tpu_custom_call.1} parent=1 // pred_check_branch
      %47 = sbr.rel (0) target = $region17
    $region16: #{tpu_custom_call.1} parent=1 // pred_region
      %49 = vsyncadd [#allocation7], 0
      %s50 = sshll.u32 %s3, 4
      %s51 = int_to_ptr.hbm [resolvable:$true] %s50
      %s52 = sshll.u32 [#allocation8], 4
      %s53 = int_to_ptr.vmem [resolvable:$true] %s52
      %58 = dma.hbm_to_vmem [thread:$0]  %s51, 16384, %s53, [#allocation7], 1024, 1024, 64
    $region17: #{tpu_custom_call.1} parent=1 // pred_fallthru
      _
    // Predicated region
    $region18: #{tpu_custom_call.1} parent=1 // pred_check
      _
    $region19: #{tpu_custom_call.1} parent=1 // pred_check_branch
      %60 = sbr.rel (0) target = $region21
    $region20: #{tpu_custom_call.1} parent=1 // pred_region
      %62 = vsyncadd [#allocation10], 0
      %s63 = sshll.u32 %s4, 4
      %s64 = int_to_ptr.hbm [resolvable:$true] %s63
      %s65 = sshll.u32 [#allocation9], 4
      %s66 = int_to_ptr.vmem [resolvable:$true] %s65
      %71 = dma.hbm_to_vmem [thread:$0]  %s64, 8192, %s66, [#allocation10], 512, 512, 32
    $region21: #{tpu_custom_call.1} parent=1 // pred_fallthru
      _
    // Predicated region
    $region22: #{tpu_custom_call.1} parent=1 // pred_check
      _
    $region23: #{tpu_custom_call.1} parent=1 // pred_check_branch
      %73 = sbr.rel (0) target = $region25
    $region24: #{tpu_custom_call.1} parent=1 // pred_region
      _
    $region25: #{tpu_custom_call.1} parent=1 // pred_fallthru
      _
    // Predicated region
    $region26: #{tpu_custom_call.1} parent=1 // pred_check
      _
    $region27: #{tpu_custom_call.1} parent=1 // pred_check_branch
      %75 = sbr.rel (0) target = $region29
    $region28: #{tpu_custom_call.1} parent=1 // pred_region
      %77 = vsyncadd [#allocation10], 0
      %s78 = sshll.u32 %s6, 4
      %s79 = int_to_ptr.hbm [resolvable:$true] %s78
      %s80 = sshll.u32 [#allocation11], 4
      %s81 = int_to_ptr.vmem [resolvable:$true] %s80
      %86 = dma.hbm_to_vmem [thread:$0]  %s79, 2048, %s81, [#allocation10], 128, 128, 8
    $region29: #{tpu_custom_call.1} parent=1 // pred_fallthru
      _
    // Predicated region
    $region30: #{tpu_custom_call.1} parent=1 // pred_check
      _
    $region31: #{tpu_custom_call.1} parent=1 // pred_check_branch
      %88 = sbr.rel (0) target = $region33
    $region32: #{tpu_custom_call.1} parent=1 // pred_region
      _
    $region33: #{tpu_custom_call.1} parent=1 // pred_fallthru
      _
    // Predicated region
    $region34: #{tpu_custom_call.1} parent=1 // pred_check
      _
    $region35: #{tpu_custom_call.1} parent=1 // pred_check_branch
      %90 = sbr.rel (0) target = $region37
    $region36: #{tpu_custom_call.1} parent=1 // pred_region
      _
    $region37: #{tpu_custom_call.1} parent=1 // pred_fallthru
      _
    // Predicated region
    $region38: #{tpu_custom_call.1} parent=1 // pred_check
      _
    $region39: #{tpu_custom_call.1} parent=1 // pred_check_branch
      %92 = sbr.rel (0) target = $region41
    $region40: #{tpu_custom_call.1} parent=1 // pred_region
      %94 = dma.done [#allocation4], 1024
    $region41: #{tpu_custom_call.1} parent=1 // pred_fallthru
      _
    // Predicated region
    $region42: #{tpu_custom_call.1} parent=1 // pred_check
      _
    $region43: #{tpu_custom_call.1} parent=1 // pred_check_branch
      %96 = sbr.rel (0) target = $region45
    $region44: #{tpu_custom_call.1} parent=1 // pred_region
      %98 = dma.done [#allocation7], 8192
    $region45: #{tpu_custom_call.1} parent=1 // pred_fallthru
      _
    // Predicated region
    $region46: #{tpu_custom_call.1} parent=1 // pred_check
      _
    $region47: #{tpu_custom_call.1} parent=1 // pred_check_branch
      %100 = sbr.rel (0) target = $region49
    $region48: #{tpu_custom_call.1} parent=1 // pred_region
      %102 = dma.done [#allocation7], 16384
    $region49: #{tpu_custom_call.1} parent=1 // pred_fallthru
      _
    // Predicated region
    $region50: #{tpu_custom_call.1} parent=1 // pred_check
      _
    $region51: #{tpu_custom_call.1} parent=1 // pred_check_branch
      %104 = sbr.rel (0) target = $region53
    $region52: #{tpu_custom_call.1} parent=1 // pred_region
      %106 = dma.done [#allocation10], 8192
    $region53: #{tpu_custom_call.1} parent=1 // pred_fallthru
      _
    // Predicated region
    $region54: #{tpu_custom_call.1} parent=1 // pred_check
      _
    $region55: #{tpu_custom_call.1} parent=1 // pred_check_branch
      %108 = sbr.rel (0) target = $region57
    $region56: #{tpu_custom_call.1} parent=1 // pred_region
      %110 = dma.done [#allocation10], 2048
    $region57: #{tpu_custom_call.1} parent=1 // pred_fallthru
      _
    %v111 = vld [vmem:[#allocation3] sm:$0xff]
    %v112 = vld [vmem:[#allocation3 + $0x8] sm:$0xff]
    %v113 = vld [vmem:[#allocation3 + $0x10] sm:$0xff]
    %v114 = vld [vmem:[#allocation3 + $0x18] sm:$0xff]
    %v115 = vld [vmem:[#allocation3 + $0x20] sm:$0xff]
    %v116 = vld [vmem:[#allocation3 + $0x28] sm:$0xff]
    %v117 = vld [vmem:[#allocation3 + $0x30] sm:$0xff]
    %v118 = vld [vmem:[#allocation3 + $0x38] sm:$0xff]
    %v119 = vld [vmem:[#allocation6] sm:$0xff]
    %v120 = vld [vmem:[#allocation6 + $0x8] sm:$0xff]
    %v121 = vld [vmem:[#allocation6 + $0x10] sm:$0xff]
    %v122 = vld [vmem:[#allocation6 + $0x18] sm:$0xff]
    %v123 = vld [vmem:[#allocation6 + $0x20] sm:$0xff]
    %v124 = vld [vmem:[#allocation6 + $0x28] sm:$0xff]
    %v125 = vld [vmem:[#allocation6 + $0x30] sm:$0xff]
    %v126 = vld [vmem:[#allocation6 + $0x38] sm:$0xff]
    %v127 = vld [vmem:[#allocation6 + $0x40] sm:$0xff]
    %v128 = vld [vmem:[#allocation6 + $0x48] sm:$0xff]
    %v129 = vld [vmem:[#allocation6 + $0x50] sm:$0xff]
    %v130 = vld [vmem:[#allocation6 + $0x58] sm:$0xff]
    %v131 = vld [vmem:[#allocation6 + $0x60] sm:$0xff]
    %v132 = vld [vmem:[#allocation6 + $0x68] sm:$0xff]
    %v133 = vld [vmem:[#allocation6 + $0x70] sm:$0xff]
    %v134 = vld [vmem:[#allocation6 + $0x78] sm:$0xff]
    %v135 = vld [vmem:[#allocation6 + $0x80] sm:$0xff]
    %v136 = vld [vmem:[#allocation6 + $0x88] sm:$0xff]
    %v137 = vld [vmem:[#allocation6 + $0x90] sm:$0xff]
    %v138 = vld [vmem:[#allocation6 + $0x98] sm:$0xff]
    %v139 = vld [vmem:[#allocation6 + $0xa0] sm:$0xff]
    %v140 = vld [vmem:[#allocation6 + $0xa8] sm:$0xff]
    %v141 = vld [vmem:[#allocation6 + $0xb0] sm:$0xff]
    %v142 = vld [vmem:[#allocation6 + $0xb8] sm:$0xff]
    %v143 = vld [vmem:[#allocation6 + $0xc0] sm:$0xff]
    %v144 = vld [vmem:[#allocation6 + $0xc8] sm:$0xff]
    %v145 = vld [vmem:[#allocation6 + $0xd0] sm:$0xff]
    %v146 = vld [vmem:[#allocation6 + $0xd8] sm:$0xff]
    %v147 = vld [vmem:[#allocation6 + $0xe0] sm:$0xff]
    %v148 = vld [vmem:[#allocation6 + $0xe8] sm:$0xff]
    %v149 = vld [vmem:[#allocation6 + $0xf0] sm:$0xff]
    %v150 = vld [vmem:[#allocation6 + $0xf8] sm:$0xff]
    %v151 = vld [vmem:[#allocation6 + $0x100] sm:$0xff]
    %v152 = vld [vmem:[#allocation6 + $0x108] sm:$0xff]
    %v153 = vld [vmem:[#allocation6 + $0x110] sm:$0xff]
    %v154 = vld [vmem:[#allocation6 + $0x118] sm:$0xff]
    %v155 = vld [vmem:[#allocation6 + $0x120] sm:$0xff]
    %v156 = vld [vmem:[#allocation6 + $0x128] sm:$0xff]
    %v157 = vld [vmem:[#allocation6 + $0x130] sm:$0xff]
    %v158 = vld [vmem:[#allocation6 + $0x138] sm:$0xff]
    %v159 = vld [vmem:[#allocation6 + $0x140] sm:$0xff]
    %v160 = vld [vmem:[#allocation6 + $0x148] sm:$0xff]
    %v161 = vld [vmem:[#allocation6 + $0x150] sm:$0xff]
    %v162 = vld [vmem:[#allocation6 + $0x158] sm:$0xff]
    %v163 = vld [vmem:[#allocation6 + $0x160] sm:$0xff]
    %v164 = vld [vmem:[#allocation6 + $0x168] sm:$0xff]
    %v165 = vld [vmem:[#allocation6 + $0x170] sm:$0xff]
    %v166 = vld [vmem:[#allocation6 + $0x178] sm:$0xff]
    %v167 = vld [vmem:[#allocation6 + $0x180] sm:$0xff]
    %v168 = vld [vmem:[#allocation6 + $0x188] sm:$0xff]
    %v169 = vld [vmem:[#allocation6 + $0x190] sm:$0xff]
    %v170 = vld [vmem:[#allocation6 + $0x198] sm:$0xff]
    %v171 = vld [vmem:[#allocation6 + $0x1a0] sm:$0xff]
    %v172 = vld [vmem:[#allocation6 + $0x1a8] sm:$0xff]
    %v173 = vld [vmem:[#allocation6 + $0x1b0] sm:$0xff]
    %v174 = vld [vmem:[#allocation6 + $0x1b8] sm:$0xff]
    %v175 = vld [vmem:[#allocation6 + $0x1c0] sm:$0xff]
    %v176 = vld [vmem:[#allocation6 + $0x1c8] sm:$0xff]
    %v177 = vld [vmem:[#allocation6 + $0x1d0] sm:$0xff]
    %v178 = vld [vmem:[#allocation6 + $0x1d8] sm:$0xff]
    %v179 = vld [vmem:[#allocation6 + $0x1e0] sm:$0xff]
    %v180 = vld [vmem:[#allocation6 + $0x1e8] sm:$0xff]
    %v181 = vld [vmem:[#allocation6 + $0x1f0] sm:$0xff]
    %v182 = vld [vmem:[#allocation6 + $0x1f8] sm:$0xff]
    %v183 = vld [vmem:[%s2] sm:$0xf]
    %v185 = vperm.slane %v183, 0
    %v186 = vperm.slane %v183, 1
    %v187 = vperm.slane %v183, 2
    %v188 = vperm.slane %v183, 3
    %193 = vmatpush.msra.mxu0 %v179
    %194 = vmatpush.msra.mxu0 %v175
    %195 = vmatpush.msra.mxu0 %v171
    %196 = vmatpush.msra.mxu0 %v167
    %197 = vmatpush.msra.mxu0 %v163
    %198 = vmatpush.msra.mxu0 %v159
    %199 = vmatpush.msra.mxu0 %v155
    %200 = vmatpush.msra.mxu0 %v151
    %201 = vmatpush.msra.mxu0 %v147
    %202 = vmatpush.msra.mxu0 %v143
    %203 = vmatpush.msra.mxu0 %v139
    %204 = vmatpush.msra.mxu0 %v135
    %205 = vmatpush.msra.mxu0 %v131
    %206 = vmatpush.msra.mxu0 %v127
    %207 = vmatpush.msra.mxu0 %v123
    %208 = vmatpush.msra.mxu0 %v119
    %209 = vmatmul.f32.gmra.mxu0 %v111
    %v210 = vpop.f32.mrf.mxu0
    %v211 = vadd.f32 %v185, %v210
    %212 = vmatmul.f32.gmra.mxu0 %v112
    %v213 = vpop.f32.mrf.mxu0
    %v214 = vadd.f32 %v185, %v213
    %215 = vmatmul.f32.gmra.mxu0 %v113
    %v216 = vpop.f32.mrf.mxu0
    %v217 = vadd.f32 %v185, %v216
    %218 = vmatmul.f32.gmra.mxu0 %v114
    %v219 = vpop.f32.mrf.mxu0
    %v220 = vadd.f32 %v185, %v219
    %221 = vmatmul.f32.gmra.mxu0 %v115
    %v222 = vpop.f32.mrf.mxu0
    %v223 = vadd.f32 %v185, %v222
    %224 = vmatmul.f32.gmra.mxu0 %v116
    %v225 = vpop.f32.mrf.mxu0
    %v226 = vadd.f32 %v185, %v225
    %227 = vmatmul.f32.gmra.mxu0 %v117
    %v228 = vpop.f32.mrf.mxu0
    %v229 = vadd.f32 %v185, %v228
    %230 = vmatmul.f32.gmra.mxu0 %v118
    %v231 = vpop.f32.mrf.mxu0
    %v232 = vadd.f32 %v185, %v231
    %233 = vdwg.mxu0
    %234 = vmatpush.msra.mxu0 %v180
    %235 = vmatpush.msra.mxu0 %v176
    %236 = vmatpush.msra.mxu0 %v172
    %237 = vmatpush.msra.mxu0 %v168
    %238 = vmatpush.msra.mxu0 %v164
    %239 = vmatpush.msra.mxu0 %v160
    %240 = vmatpush.msra.mxu0 %v156
    %241 = vmatpush.msra.mxu0 %v152
    %242 = vmatpush.msra.mxu0 %v148
    %243 = vmatpush.msra.mxu0 %v144
    %244 = vmatpush.msra.mxu0 %v140
    %245 = vmatpush.msra.mxu0 %v136
    %246 = vmatpush.msra.mxu0 %v132
    %247 = vmatpush.msra.mxu0 %v128
    %248 = vmatpush.msra.mxu0 %v124
    %249 = vmatpush.msra.mxu0 %v120
    %250 = vmatmul.f32.gmra.mxu0 %v111
    %v251 = vpop.f32.mrf.mxu0
    %v252 = vadd.f32 %v186, %v251
    %253 = vmatmul.f32.gmra.mxu0 %v112
    %v254 = vpop.f32.mrf.mxu0
    %v255 = vadd.f32 %v186, %v254
    %256 = vmatmul.f32.gmra.mxu0 %v113
    %v257 = vpop.f32.mrf.mxu0
    %v258 = vadd.f32 %v186, %v257
    %259 = vmatmul.f32.gmra.mxu0 %v114
    %v260 = vpop.f32.mrf.mxu0
    %v261 = vadd.f32 %v186, %v260
    %262 = vmatmul.f32.gmra.mxu0 %v115
    %v263 = vpop.f32.mrf.mxu0
    %v264 = vadd.f32 %v186, %v263
    %265 = vmatmul.f32.gmra.mxu0 %v116
    %v266 = vpop.f32.mrf.mxu0
    %v267 = vadd.f32 %v186, %v266
    %268 = vmatmul.f32.gmra.mxu0 %v117
    %v269 = vpop.f32.mrf.mxu0
    %v270 = vadd.f32 %v186, %v269
    %271 = vmatmul.f32.gmra.mxu0 %v118
    %v272 = vpop.f32.mrf.mxu0
    %v273 = vadd.f32 %v186, %v272
    %274 = vdwg.mxu0
    %275 = vmatpush.msra.mxu0 %v181
    %276 = vmatpush.msra.mxu0 %v177
    %277 = vmatpush.msra.mxu0 %v173
    %278 = vmatpush.msra.mxu0 %v169
    %279 = vmatpush.msra.mxu0 %v165
    %280 = vmatpush.msra.mxu0 %v161
    %281 = vmatpush.msra.mxu0 %v157
    %282 = vmatpush.msra.mxu0 %v153
    %283 = vmatpush.msra.mxu0 %v149
    %284 = vmatpush.msra.mxu0 %v145
    %285 = vmatpush.msra.mxu0 %v141
    %286 = vmatpush.msra.mxu0 %v137
    %287 = vmatpush.msra.mxu0 %v133
    %288 = vmatpush.msra.mxu0 %v129
    %289 = vmatpush.msra.mxu0 %v125
    %290 = vmatpush.msra.mxu0 %v121
    %291 = vmatmul.f32.gmra.mxu0 %v111
    %v292 = vpop.f32.mrf.mxu0
    %v293 = vadd.f32 %v187, %v292
    %294 = vmatmul.f32.gmra.mxu0 %v112
    %v295 = vpop.f32.mrf.mxu0
    %v296 = vadd.f32 %v187, %v295
    %297 = vmatmul.f32.gmra.mxu0 %v113
    %v298 = vpop.f32.mrf.mxu0
    %v299 = vadd.f32 %v187, %v298
    %300 = vmatmul.f32.gmra.mxu0 %v114
    %v301 = vpop.f32.mrf.mxu0
    %v302 = vadd.f32 %v187, %v301
    %303 = vmatmul.f32.gmra.mxu0 %v115
    %v304 = vpop.f32.mrf.mxu0
    %v305 = vadd.f32 %v187, %v304
    %306 = vmatmul.f32.gmra.mxu0 %v116
    %v307 = vpop.f32.mrf.mxu0
    %v308 = vadd.f32 %v187, %v307
    %309 = vmatmul.f32.gmra.mxu0 %v117
    %v310 = vpop.f32.mrf.mxu0
    %v311 = vadd.f32 %v187, %v310
    %312 = vmatmul.f32.gmra.mxu0 %v118
    %v313 = vpop.f32.mrf.mxu0
    %v314 = vadd.f32 %v187, %v313
    %315 = vdwg.mxu0
    %316 = vmatpush.msra.mxu0 %v182
    %317 = vmatpush.msra.mxu0 %v178
    %318 = vmatpush.msra.mxu0 %v174
    %319 = vmatpush.msra.mxu0 %v170
    %320 = vmatpush.msra.mxu0 %v166
    %321 = vmatpush.msra.mxu0 %v162
    %322 = vmatpush.msra.mxu0 %v158
    %323 = vmatpush.msra.mxu0 %v154
    %324 = vmatpush.msra.mxu0 %v150
    %325 = vmatpush.msra.mxu0 %v146
    %326 = vmatpush.msra.mxu0 %v142
    %327 = vmatpush.msra.mxu0 %v138
    %328 = vmatpush.msra.mxu0 %v134
    %329 = vmatpush.msra.mxu0 %v130
    %330 = vmatpush.msra.mxu0 %v126
    %331 = vmatpush.msra.mxu0 %v122
    %332 = vmatmul.f32.gmra.mxu0 %v111
    %v333 = vpop.f32.mrf.mxu0
    %v334 = vadd.f32 %v188, %v333
    %335 = vmatmul.f32.gmra.mxu0 %v112
    %v336 = vpop.f32.mrf.mxu0
    %v337 = vadd.f32 %v188, %v336
    %338 = vmatmul.f32.gmra.mxu0 %v113
    %v339 = vpop.f32.mrf.mxu0
    %v340 = vadd.f32 %v188, %v339
    %341 = vmatmul.f32.gmra.mxu0 %v114
    %v342 = vpop.f32.mrf.mxu0
    %v343 = vadd.f32 %v188, %v342
    %344 = vmatmul.f32.gmra.mxu0 %v115
    %v345 = vpop.f32.mrf.mxu0
    %v346 = vadd.f32 %v188, %v345
    %347 = vmatmul.f32.gmra.mxu0 %v116
    %v348 = vpop.f32.mrf.mxu0
    %v349 = vadd.f32 %v188, %v348
    %350 = vmatmul.f32.gmra.mxu0 %v117
    %v351 = vpop.f32.mrf.mxu0
    %v352 = vadd.f32 %v188, %v351
    %353 = vmatmul.f32.gmra.mxu0 %v118
    %v354 = vpop.f32.mrf.mxu0
    %v355 = vadd.f32 %v188, %v354
    %356 = vdwg.mxu0
    %357 = vst [vmem:[#allocation2] sm:$0xff] %v211
    %358 = vst [vmem:[#allocation2 + $0x8] sm:$0xff] %v252
    %359 = vst [vmem:[#allocation2 + $0x10] sm:$0xff] %v293
    %360 = vst [vmem:[#allocation2 + $0x18] sm:$0xff] %v334
    %361 = vst [vmem:[#allocation2 + $0x20] sm:$0xff] %v214
    %362 = vst [vmem:[#allocation2 + $0x28] sm:$0xff] %v255
    %363 = vst [vmem:[#allocation2 + $0x30] sm:$0xff] %v296
    %364 = vst [vmem:[#allocation2 + $0x38] sm:$0xff] %v337
    %365 = vst [vmem:[#allocation2 + $0x40] sm:$0xff] %v217
    %366 = vst [vmem:[#allocation2 + $0x48] sm:$0xff] %v258
    %367 = vst [vmem:[#allocation2 + $0x50] sm:$0xff] %v299
    %368 = vst [vmem:[#allocation2 + $0x58] sm:$0xff] %v340
    %369 = vst [vmem:[#allocation2 + $0x60] sm:$0xff] %v220
    %370 = vst [vmem:[#allocation2 + $0x68] sm:$0xff] %v261
    %371 = vst [vmem:[#allocation2 + $0x70] sm:$0xff] %v302
    %372 = vst [vmem:[#allocation2 + $0x78] sm:$0xff] %v343
    %373 = vst [vmem:[#allocation2 + $0x80] sm:$0xff] %v223
    %374 = vst [vmem:[#allocation2 + $0x88] sm:$0xff] %v264
    %375 = vst [vmem:[#allocation2 + $0x90] sm:$0xff] %v305
    %376 = vst [vmem:[#allocation2 + $0x98] sm:$0xff] %v346
    %377 = vst [vmem:[#allocation2 + $0xa0] sm:$0xff] %v226
    %378 = vst [vmem:[#allocation2 + $0xa8] sm:$0xff] %v267
    %379 = vst [vmem:[#allocation2 + $0xb0] sm:$0xff] %v308
    %380 = vst [vmem:[#allocation2 + $0xb8] sm:$0xff] %v349
    %381 = vst [vmem:[#allocation2 + $0xc0] sm:$0xff] %v229
    %382 = vst [vmem:[#allocation2 + $0xc8] sm:$0xff] %v270
    %383 = vst [vmem:[#allocation2 + $0xd0] sm:$0xff] %v311
    %384 = vst [vmem:[#allocation2 + $0xd8] sm:$0xff] %v352
    %385 = vst [vmem:[#allocation2 + $0xe0] sm:$0xff] %v232
    %386 = vst [vmem:[#allocation2 + $0xe8] sm:$0xff] %v273
    %387 = vst [vmem:[#allocation2 + $0xf0] sm:$0xff] %v314
    %388 = vst [vmem:[#allocation2 + $0xf8] sm:$0xff] %v355
    %v389 = vld [vmem:[%s5] sm:$0xf]
    %v390 = vld [vmem:[#allocation2] sm:$0xff]
    %v391 = vld [vmem:[#allocation2 + $0x8] sm:$0xff]
    %v392 = vld [vmem:[#allocation2 + $0x10] sm:$0xff]
    %v393 = vld [vmem:[#allocation2 + $0x18] sm:$0xff]
    %v394 = vxor.u32 %v390, 2147483648
    %v395 = vxor.u32 %v391, 2147483648
    %v396 = vxor.u32 %v392, 2147483648
    %v397 = vmul.f32 %v394, 1.442695
    %v398 = vpow.pop %v397
    %v399 = vmul.f32 %v395, 1.442695
    %v400 = vpow.pop %v399
    %v401 = vmul.f32 %v396, 1.442695
    %v402 = vpow.pop %v401
    %v403 = vadd.f32 %v398, 1.0
    %v404 = vadd.f32 %v400, 1.0
    %v405 = vadd.f32 %v402, 1.0
    %v406 = vrcp.pop %v403
    %v407 = vmul.f32 %v403, %v406
    %v408 = vsub.f32 1.0, %v407
    %v409 = vmul.f32 %v406, %v408
    %v410 = vadd.f32 %v406, %v409
    %vm411 = vweird.f32 %v403
    %vm412 = vweird.f32 %v406
    %vm413 = vmor %vm411, %vm412
    %v414 = vsel %vm413, %v406, %v410
    %v415 = vand.u32 2147483647, %v403
    %vm416 = vcmp.eq.f32.partialorder %v415, 8.507059e+37
    %v417 = vand.u32 %v403, 2147483648
    %v418 = vor.u32 1.1754944e-38, %v417
    %v419 = vsel %vm416, %v418, %v414
    %v420 = vmul.f32 1.0, %v419
    %v421 = vrcp.pop %v404
    %v422 = vmul.f32 %v404, %v421
    %v423 = vsub.f32 1.0, %v422
    %v424 = vmul.f32 %v421, %v423
    %v425 = vadd.f32 %v421, %v424
    %vm426 = vweird.f32 %v404
    %vm427 = vweird.f32 %v421
    %vm428 = vmor %vm426, %vm427
    %v429 = vsel %vm428, %v421, %v425
    %v430 = vand.u32 2147483647, %v404
    %vm431 = vcmp.eq.f32.partialorder %v430, 8.507059e+37
    %v432 = vand.u32 %v404, 2147483648
    %v433 = vor.u32 1.1754944e-38, %v432
    %v434 = vsel %vm431, %v433, %v429
    %v435 = vmul.f32 1.0, %v434
    %v436 = vrcp.pop %v405
    %v437 = vmul.f32 %v405, %v436
    %v438 = vsub.f32 1.0, %v437
    %v439 = vmul.f32 %v436, %v438
    %v440 = vadd.f32 %v436, %v439
    %vm441 = vweird.f32 %v405
    %vm442 = vweird.f32 %v436
    %vm443 = vmor %vm441, %vm442
    %v444 = vsel %vm443, %v436, %v440
    %v445 = vand.u32 2147483647, %v405
    %vm446 = vcmp.eq.f32.partialorder %v445, 8.507059e+37
    %v447 = vand.u32 %v405, 2147483648
    %v448 = vor.u32 1.1754944e-38, %v447
    %v449 = vsel %vm446, %v448, %v444
    %v450 = vmul.f32 1.0, %v449
    %v451 = vtanh.pop %v393
    %v452 = vmul.f32 %v435, 0.0
    %v453 = vmul.f32 %v420, %v451
    %v454 = vadd.f32 %v452, %v453
    %v455 = vtanh.pop %v454
    %v456 = vmul.f32 %v450, %v455
    %v457 = vld [vmem:[#allocation8] sm:$0xff]
    %v458 = vld [vmem:[#allocation8 + $0x8] sm:$0xff]
    %v459 = vld [vmem:[#allocation8 + $0x10] sm:$0xff]
    %v460 = vld [vmem:[#allocation8 + $0x18] sm:$0xff]
    %v461 = vld [vmem:[#allocation8 + $0x20] sm:$0xff]
    %v462 = vld [vmem:[#allocation8 + $0x28] sm:$0xff]
    %v463 = vld [vmem:[#allocation8 + $0x30] sm:$0xff]
    %v464 = vld [vmem:[#allocation8 + $0x38] sm:$0xff]
    %v465 = vld [vmem:[#allocation8 + $0x40] sm:$0xff]
    %v466 = vld [vmem:[#allocation8 + $0x48] sm:$0xff]
    %v467 = vld [vmem:[#allocation8 + $0x50] sm:$0xff]
    %v468 = vld [vmem:[#allocation8 + $0x58] sm:$0xff]
    %v469 = vld [vmem:[#allocation8 + $0x60] sm:$0xff]
    %v470 = vld [vmem:[#allocation8 + $0x68] sm:$0xff]
    %v471 = vld [vmem:[#allocation8 + $0x70] sm:$0xff]
    %v472 = vld [vmem:[#allocation8 + $0x78] sm:$0xff]
    %v473 = vld [vmem:[#allocation8 + $0x80] sm:$0xff]
    %v474 = vld [vmem:[#allocation8 + $0x88] sm:$0xff]
    %v475 = vld [vmem:[#allocation8 + $0x90] sm:$0xff]
    %v476 = vld [vmem:[#allocation8 + $0x98] sm:$0xff]
    %v477 = vld [vmem:[#allocation8 + $0xa0] sm:$0xff]
    %v478 = vld [vmem:[#allocation8 + $0xa8] sm:$0xff]
    %v479 = vld [vmem:[#allocation8 + $0xb0] sm:$0xff]
    %v480 = vld [vmem:[#allocation8 + $0xb8] sm:$0xff]
    %v481 = vld [vmem:[#allocation8 + $0xc0] sm:$0xff]
    %v482 = vld [vmem:[#allocation8 + $0xc8] sm:$0xff]
    %v483 = vld [vmem:[#allocation8 + $0xd0] sm:$0xff]
    %v484 = vld [vmem:[#allocation8 + $0xd8] sm:$0xff]
    %v485 = vld [vmem:[#allocation8 + $0xe0] sm:$0xff]
    %v486 = vld [vmem:[#allocation8 + $0xe8] sm:$0xff]
    %v487 = vld [vmem:[#allocation8 + $0xf0] sm:$0xff]
    %v488 = vld [vmem:[#allocation8 + $0xf8] sm:$0xff]
    %v489 = vld [vmem:[#allocation8 + $0x100] sm:$0xff]
    %v490 = vld [vmem:[#allocation8 + $0x108] sm:$0xff]
    %v491 = vld [vmem:[#allocation8 + $0x110] sm:$0xff]
    %v492 = vld [vmem:[#allocation8 + $0x118] sm:$0xff]
    %v493 = vld [vmem:[#allocation8 + $0x120] sm:$0xff]
    %v494 = vld [vmem:[#allocation8 + $0x128] sm:$0xff]
    %v495 = vld [vmem:[#allocation8 + $0x130] sm:$0xff]
    %v496 = vld [vmem:[#allocation8 + $0x138] sm:$0xff]
    %v497 = vld [vmem:[#allocation8 + $0x140] sm:$0xff]
    %v498 = vld [vmem:[#allocation8 + $0x148] sm:$0xff]
    %v499 = vld [vmem:[#allocation8 + $0x150] sm:$0xff]
    %v500 = vld [vmem:[#allocation8 + $0x158] sm:$0xff]
    %v501 = vld [vmem:[#allocation8 + $0x160] sm:$0xff]
    %v502 = vld [vmem:[#allocation8 + $0x168] sm:$0xff]
    %v503 = vld [vmem:[#allocation8 + $0x170] sm:$0xff]
    %v504 = vld [vmem:[#allocation8 + $0x178] sm:$0xff]
    %v505 = vld [vmem:[#allocation8 + $0x180] sm:$0xff]
    %v506 = vld [vmem:[#allocation8 + $0x188] sm:$0xff]
    %v507 = vld [vmem:[#allocation8 + $0x190] sm:$0xff]
    %v508 = vld [vmem:[#allocation8 + $0x198] sm:$0xff]
    %v509 = vld [vmem:[#allocation8 + $0x1a0] sm:$0xff]
    %v510 = vld [vmem:[#allocation8 + $0x1a8] sm:$0xff]
    %v511 = vld [vmem:[#allocation8 + $0x1b0] sm:$0xff]
    %v512 = vld [vmem:[#allocation8 + $0x1b8] sm:$0xff]
    %v513 = vld [vmem:[#allocation8 + $0x1c0] sm:$0xff]
    %v514 = vld [vmem:[#allocation8 + $0x1c8] sm:$0xff]
    %v515 = vld [vmem:[#allocation8 + $0x1d0] sm:$0xff]
    %v516 = vld [vmem:[#allocation8 + $0x1d8] sm:$0xff]
    %v517 = vld [vmem:[#allocation8 + $0x1e0] sm:$0xff]
    %v518 = vld [vmem:[#allocation8 + $0x1e8] sm:$0xff]
    %v519 = vld [vmem:[#allocation8 + $0x1f0] sm:$0xff]
    %v520 = vld [vmem:[#allocation8 + $0x1f8] sm:$0xff]
    %v521 = vld [vmem:[#allocation8 + $0x200] sm:$0xff]
    %v522 = vld [vmem:[#allocation8 + $0x208] sm:$0xff]
    %v523 = vld [vmem:[#allocation8 + $0x210] sm:$0xff]
    %v524 = vld [vmem:[#allocation8 + $0x218] sm:$0xff]
    %v525 = vld [vmem:[#allocation8 + $0x220] sm:$0xff]
    %v526 = vld [vmem:[#allocation8 + $0x228] sm:$0xff]
    %v527 = vld [vmem:[#allocation8 + $0x230] sm:$0xff]
    %v528 = vld [vmem:[#allocation8 + $0x238] sm:$0xff]
    %v529 = vld [vmem:[#allocation8 + $0x240] sm:$0xff]
    %v530 = vld [vmem:[#allocation8 + $0x248] sm:$0xff]
    %v531 = vld [vmem:[#allocation8 + $0x250] sm:$0xff]
    %v532 = vld [vmem:[#allocation8 + $0x258] sm:$0xff]
    %v533 = vld [vmem:[#allocation8 + $0x260] sm:$0xff]
    %v534 = vld [vmem:[#allocation8 + $0x268] sm:$0xff]
    %v535 = vld [vmem:[#allocation8 + $0x270] sm:$0xff]
    %v536 = vld [vmem:[#allocation8 + $0x278] sm:$0xff]
    %v537 = vld [vmem:[#allocation8 + $0x280] sm:$0xff]
    %v538 = vld [vmem:[#allocation8 + $0x288] sm:$0xff]
    %v539 = vld [vmem:[#allocation8 + $0x290] sm:$0xff]
    %v540 = vld [vmem:[#allocation8 + $0x298] sm:$0xff]
    %v541 = vld [vmem:[#allocation8 + $0x2a0] sm:$0xff]
    %v542 = vld [vmem:[#allocation8 + $0x2a8] sm:$0xff]
    %v543 = vld [vmem:[#allocation8 + $0x2b0] sm:$0xff]
    %v544 = vld [vmem:[#allocation8 + $0x2b8] sm:$0xff]
    %v545 = vld [vmem:[#allocation8 + $0x2c0] sm:$0xff]
    %v546 = vld [vmem:[#allocation8 + $0x2c8] sm:$0xff]
    %v547 = vld [vmem:[#allocation8 + $0x2d0] sm:$0xff]
    %v548 = vld [vmem:[#allocation8 + $0x2d8] sm:$0xff]
    %v549 = vld [vmem:[#allocation8 + $0x2e0] sm:$0xff]
    %v550 = vld [vmem:[#allocation8 + $0x2e8] sm:$0xff]
    %v551 = vld [vmem:[#allocation8 + $0x2f0] sm:$0xff]
    %v552 = vld [vmem:[#allocation8 + $0x2f8] sm:$0xff]
    %v553 = vld [vmem:[#allocation8 + $0x300] sm:$0xff]
    %v554 = vld [vmem:[#allocation8 + $0x308] sm:$0xff]
    %v555 = vld [vmem:[#allocation8 + $0x310] sm:$0xff]
    %v556 = vld [vmem:[#allocation8 + $0x318] sm:$0xff]
    %v557 = vld [vmem:[#allocation8 + $0x320] sm:$0xff]
    %v558 = vld [vmem:[#allocation8 + $0x328] sm:$0xff]
    %v559 = vld [vmem:[#allocation8 + $0x330] sm:$0xff]
    %v560 = vld [vmem:[#allocation8 + $0x338] sm:$0xff]
    %v561 = vld [vmem:[#allocation8 + $0x340] sm:$0xff]
    %v562 = vld [vmem:[#allocation8 + $0x348] sm:$0xff]
    %v563 = vld [vmem:[#allocation8 + $0x350] sm:$0xff]
    %v564 = vld [vmem:[#allocation8 + $0x358] sm:$0xff]
    %v565 = vld [vmem:[#allocation8 + $0x360] sm:$0xff]
    %v566 = vld [vmem:[#allocation8 + $0x368] sm:$0xff]
    %v567 = vld [vmem:[#allocation8 + $0x370] sm:$0xff]
    %v568 = vld [vmem:[#allocation8 + $0x378] sm:$0xff]
    %v569 = vld [vmem:[#allocation8 + $0x380] sm:$0xff]
    %v570 = vld [vmem:[#allocation8 + $0x388] sm:$0xff]
    %v571 = vld [vmem:[#allocation8 + $0x390] sm:$0xff]
    %v572 = vld [vmem:[#allocation8 + $0x398] sm:$0xff]
    %v573 = vld [vmem:[#allocation8 + $0x3a0] sm:$0xff]
    %v574 = vld [vmem:[#allocation8 + $0x3a8] sm:$0xff]
    %v575 = vld [vmem:[#allocation8 + $0x3b0] sm:$0xff]
    %v576 = vld [vmem:[#allocation8 + $0x3b8] sm:$0xff]
    %v577 = vld [vmem:[#allocation8 + $0x3c0] sm:$0xff]
    %v578 = vld [vmem:[#allocation8 + $0x3c8] sm:$0xff]
    %v579 = vld [vmem:[#allocation8 + $0x3d0] sm:$0xff]
    %v580 = vld [vmem:[#allocation8 + $0x3d8] sm:$0xff]
    %v581 = vld [vmem:[#allocation8 + $0x3e0] sm:$0xff]
    %v582 = vld [vmem:[#allocation8 + $0x3e8] sm:$0xff]
    %v583 = vld [vmem:[#allocation8 + $0x3f0] sm:$0xff]
    %v584 = vld [vmem:[#allocation8 + $0x3f8] sm:$0xff]
    %585 = vmatpush.msra.mxu0 %v577
    %586 = vmatpush.msra.mxu0 %v569
    %587 = vmatpush.msra.mxu0 %v561
    %588 = vmatpush.msra.mxu0 %v553
    %589 = vmatpush.msra.mxu0 %v545
    %590 = vmatpush.msra.mxu0 %v537
    %591 = vmatpush.msra.mxu0 %v529
    %592 = vmatpush.msra.mxu0 %v521
    %593 = vmatpush.msra.mxu0 %v513
    %594 = vmatpush.msra.mxu0 %v505
    %595 = vmatpush.msra.mxu0 %v497
    %596 = vmatpush.msra.mxu0 %v489
    %597 = vmatpush.msra.mxu0 %v481
    %598 = vmatpush.msra.mxu0 %v473
    %599 = vmatpush.msra.mxu0 %v465
    %600 = vmatpush.msra.mxu0 %v457
    %601 = vmatmul.f32.gmra.mxu0 %v456
    %v602 = vpop.f32.mrf.mxu0
    %v603 = vadd.f32 0.0, %v602
    %604 = vdwg.mxu0
    %605 = vmatpush.msra.mxu0 %v578
    %606 = vmatpush.msra.mxu0 %v570
    %607 = vmatpush.msra.mxu0 %v562
    %608 = vmatpush.msra.mxu0 %v554
    %609 = vmatpush.msra.mxu0 %v546
    %610 = vmatpush.msra.mxu0 %v538
    %611 = vmatpush.msra.mxu0 %v530
    %612 = vmatpush.msra.mxu0 %v522
    %613 = vmatpush.msra.mxu0 %v514
    %614 = vmatpush.msra.mxu0 %v506
    %615 = vmatpush.msra.mxu0 %v498
    %616 = vmatpush.msra.mxu0 %v490
    %617 = vmatpush.msra.mxu0 %v482
    %618 = vmatpush.msra.mxu0 %v474
    %619 = vmatpush.msra.mxu0 %v466
    %620 = vmatpush.msra.mxu0 %v458
    %621 = vmatmul.f32.gmra.mxu0 %v456
    %v622 = vpop.f32.mrf.mxu0
    %v623 = vadd.f32 0.0, %v622
    %624 = vdwg.mxu0
    %625 = vmatpush.msra.mxu0 %v579
    %626 = vmatpush.msra.mxu0 %v571
    %627 = vmatpush.msra.mxu0 %v563
    %628 = vmatpush.msra.mxu0 %v555
    %629 = vmatpush.msra.mxu0 %v547
    %630 = vmatpush.msra.mxu0 %v539
    %631 = vmatpush.msra.mxu0 %v531
    %632 = vmatpush.msra.mxu0 %v523
    %633 = vmatpush.msra.mxu0 %v515
    %634 = vmatpush.msra.mxu0 %v507
    %635 = vmatpush.msra.mxu0 %v499
    %636 = vmatpush.msra.mxu0 %v491
    %637 = vmatpush.msra.mxu0 %v483
    %638 = vmatpush.msra.mxu0 %v475
    %639 = vmatpush.msra.mxu0 %v467
    %640 = vmatpush.msra.mxu0 %v459
    %641 = vmatmul.f32.gmra.mxu0 %v456
    %v642 = vpop.f32.mrf.mxu0
    %v643 = vadd.f32 0.0, %v642
    %644 = vdwg.mxu0
    %645 = vmatpush.msra.mxu0 %v580
    %646 = vmatpush.msra.mxu0 %v572
    %647 = vmatpush.msra.mxu0 %v564
    %648 = vmatpush.msra.mxu0 %v556
    %649 = vmatpush.msra.mxu0 %v548
    %650 = vmatpush.msra.mxu0 %v540
    %651 = vmatpush.msra.mxu0 %v532
    %652 = vmatpush.msra.mxu0 %v524
    %653 = vmatpush.msra.mxu0 %v516
    %654 = vmatpush.msra.mxu0 %v508
    %655 = vmatpush.msra.mxu0 %v500
    %656 = vmatpush.msra.mxu0 %v492
    %657 = vmatpush.msra.mxu0 %v484
    %658 = vmatpush.msra.mxu0 %v476
    %659 = vmatpush.msra.mxu0 %v468
    %660 = vmatpush.msra.mxu0 %v460
    %661 = vmatmul.f32.gmra.mxu0 %v456
    %v662 = vpop.f32.mrf.mxu0
    %v663 = vadd.f32 0.0, %v662
    %664 = vdwg.mxu0
    %665 = vmatpush.msra.mxu0 %v581
    %666 = vmatpush.msra.mxu0 %v573
    %667 = vmatpush.msra.mxu0 %v565
    %668 = vmatpush.msra.mxu0 %v557
    %669 = vmatpush.msra.mxu0 %v549
    %670 = vmatpush.msra.mxu0 %v541
    %671 = vmatpush.msra.mxu0 %v533
    %672 = vmatpush.msra.mxu0 %v525
    %673 = vmatpush.msra.mxu0 %v517
    %674 = vmatpush.msra.mxu0 %v509
    %675 = vmatpush.msra.mxu0 %v501
    %676 = vmatpush.msra.mxu0 %v493
    %677 = vmatpush.msra.mxu0 %v485
    %678 = vmatpush.msra.mxu0 %v477
    %679 = vmatpush.msra.mxu0 %v469
    %680 = vmatpush.msra.mxu0 %v461
    %681 = vmatmul.f32.gmra.mxu0 %v456
    %v682 = vpop.f32.mrf.mxu0
    %v683 = vadd.f32 0.0, %v682
    %684 = vdwg.mxu0
    %685 = vmatpush.msra.mxu0 %v582
    %686 = vmatpush.msra.mxu0 %v574
    %687 = vmatpush.msra.mxu0 %v566
    %688 = vmatpush.msra.mxu0 %v558
    %689 = vmatpush.msra.mxu0 %v550
    %690 = vmatpush.msra.mxu0 %v542
    %691 = vmatpush.msra.mxu0 %v534
    %692 = vmatpush.msra.mxu0 %v526
    %693 = vmatpush.msra.mxu0 %v518
    %694 = vmatpush.msra.mxu0 %v510
    %695 = vmatpush.msra.mxu0 %v502
    %696 = vmatpush.msra.mxu0 %v494
    %697 = vmatpush.msra.mxu0 %v486
    %698 = vmatpush.msra.mxu0 %v478
    %699 = vmatpush.msra.mxu0 %v470
    %700 = vmatpush.msra.mxu0 %v462
    %701 = vmatmul.f32.gmra.mxu0 %v456
    %v702 = vpop.f32.mrf.mxu0
    %v703 = vadd.f32 0.0, %v702
    %704 = vdwg.mxu0
    %705 = vmatpush.msra.mxu0 %v583
    %706 = vmatpush.msra.mxu0 %v575
    %707 = vmatpush.msra.mxu0 %v567
    %708 = vmatpush.msra.mxu0 %v559
    %709 = vmatpush.msra.mxu0 %v551
    %710 = vmatpush.msra.mxu0 %v543
    %711 = vmatpush.msra.mxu0 %v535
    %712 = vmatpush.msra.mxu0 %v527
    %713 = vmatpush.msra.mxu0 %v519
    %714 = vmatpush.msra.mxu0 %v511
    %715 = vmatpush.msra.mxu0 %v503
    %716 = vmatpush.msra.mxu0 %v495
    %717 = vmatpush.msra.mxu0 %v487
    %718 = vmatpush.msra.mxu0 %v479
    %719 = vmatpush.msra.mxu0 %v471
    %720 = vmatpush.msra.mxu0 %v463
    %721 = vmatmul.f32.gmra.mxu0 %v456
    %v722 = vpop.f32.mrf.mxu0
    %v723 = vadd.f32 0.0, %v722
    %724 = vdwg.mxu0
    %725 = vmatpush.msra.mxu0 %v584
    %726 = vmatpush.msra.mxu0 %v576
    %727 = vmatpush.msra.mxu0 %v568
    %728 = vmatpush.msra.mxu0 %v560
    %729 = vmatpush.msra.mxu0 %v552
    %730 = vmatpush.msra.mxu0 %v544
    %731 = vmatpush.msra.mxu0 %v536
    %732 = vmatpush.msra.mxu0 %v528
    %733 = vmatpush.msra.mxu0 %v520
    %734 = vmatpush.msra.mxu0 %v512
    %735 = vmatpush.msra.mxu0 %v504
    %736 = vmatpush.msra.mxu0 %v496
    %737 = vmatpush.msra.mxu0 %v488
    %738 = vmatpush.msra.mxu0 %v480
    %739 = vmatpush.msra.mxu0 %v472
    %740 = vmatpush.msra.mxu0 %v464
    %741 = vmatmul.f32.gmra.mxu0 %v456
    %v742 = vpop.f32.mrf.mxu0
    %v743 = vadd.f32 0.0, %v742
    %744 = vdwg.mxu0
    %v745 = vld [vmem:[#allocation9] sm:$0xff]
    %v746 = vld [vmem:[#allocation9 + $0x8] sm:$0xff]
    %v747 = vld [vmem:[#allocation9 + $0x10] sm:$0xff]
    %v748 = vld [vmem:[#allocation9 + $0x18] sm:$0xff]
    %v749 = vld [vmem:[#allocation9 + $0x20] sm:$0xff]
    %v750 = vld [vmem:[#allocation9 + $0x28] sm:$0xff]
    %v751 = vld [vmem:[#allocation9 + $0x30] sm:$0xff]
    %v752 = vld [vmem:[#allocation9 + $0x38] sm:$0xff]
    %v753 = vld [vmem:[#allocation9 + $0x40] sm:$0xff]
    %v754 = vld [vmem:[#allocation9 + $0x48] sm:$0xff]
    %v755 = vld [vmem:[#allocation9 + $0x50] sm:$0xff]
    %v756 = vld [vmem:[#allocation9 + $0x58] sm:$0xff]
    %v757 = vld [vmem:[#allocation9 + $0x60] sm:$0xff]
    %v758 = vld [vmem:[#allocation9 + $0x68] sm:$0xff]
    %v759 = vld [vmem:[#allocation9 + $0x70] sm:$0xff]
    %v760 = vld [vmem:[#allocation9 + $0x78] sm:$0xff]
    %v761 = vld [vmem:[#allocation9 + $0x80] sm:$0xff]
    %v762 = vld [vmem:[#allocation9 + $0x88] sm:$0xff]
    %v763 = vld [vmem:[#allocation9 + $0x90] sm:$0xff]
    %v764 = vld [vmem:[#allocation9 + $0x98] sm:$0xff]
    %v765 = vld [vmem:[#allocation9 + $0xa0] sm:$0xff]
    %v766 = vld [vmem:[#allocation9 + $0xa8] sm:$0xff]
    %v767 = vld [vmem:[#allocation9 + $0xb0] sm:$0xff]
    %v768 = vld [vmem:[#allocation9 + $0xb8] sm:$0xff]
    %v769 = vld [vmem:[#allocation9 + $0xc0] sm:$0xff]
    %v770 = vld [vmem:[#allocation9 + $0xc8] sm:$0xff]
    %v771 = vld [vmem:[#allocation9 + $0xd0] sm:$0xff]
    %v772 = vld [vmem:[#allocation9 + $0xd8] sm:$0xff]
    %v773 = vld [vmem:[#allocation9 + $0xe0] sm:$0xff]
    %v774 = vld [vmem:[#allocation9 + $0xe8] sm:$0xff]
    %v775 = vld [vmem:[#allocation9 + $0xf0] sm:$0xff]
    %v776 = vld [vmem:[#allocation9 + $0xf8] sm:$0xff]
    %v777 = vld [vmem:[#allocation9 + $0x100] sm:$0xff]
    %v778 = vld [vmem:[#allocation9 + $0x108] sm:$0xff]
    %v779 = vld [vmem:[#allocation9 + $0x110] sm:$0xff]
    %v780 = vld [vmem:[#allocation9 + $0x118] sm:$0xff]
    %v781 = vld [vmem:[#allocation9 + $0x120] sm:$0xff]
    %v782 = vld [vmem:[#allocation9 + $0x128] sm:$0xff]
    %v783 = vld [vmem:[#allocation9 + $0x130] sm:$0xff]
    %v784 = vld [vmem:[#allocation9 + $0x138] sm:$0xff]
    %v785 = vld [vmem:[#allocation9 + $0x140] sm:$0xff]
    %v786 = vld [vmem:[#allocation9 + $0x148] sm:$0xff]
    %v787 = vld [vmem:[#allocation9 + $0x150] sm:$0xff]
    %v788 = vld [vmem:[#allocation9 + $0x158] sm:$0xff]
    %v789 = vld [vmem:[#allocation9 + $0x160] sm:$0xff]
    %v790 = vld [vmem:[#allocation9 + $0x168] sm:$0xff]
    %v791 = vld [vmem:[#allocation9 + $0x170] sm:$0xff]
    %v792 = vld [vmem:[#allocation9 + $0x178] sm:$0xff]
    %v793 = vld [vmem:[#allocation9 + $0x180] sm:$0xff]
    %v794 = vld [vmem:[#allocation9 + $0x188] sm:$0xff]
    %v795 = vld [vmem:[#allocation9 + $0x190] sm:$0xff]
    %v796 = vld [vmem:[#allocation9 + $0x198] sm:$0xff]
    %v797 = vld [vmem:[#allocation9 + $0x1a0] sm:$0xff]
    %v798 = vld [vmem:[#allocation9 + $0x1a8] sm:$0xff]
    %v799 = vld [vmem:[#allocation9 + $0x1b0] sm:$0xff]
    %v800 = vld [vmem:[#allocation9 + $0x1b8] sm:$0xff]
    %v801 = vld [vmem:[#allocation9 + $0x1c0] sm:$0xff]
    %v802 = vld [vmem:[#allocation9 + $0x1c8] sm:$0xff]
    %v803 = vld [vmem:[#allocation9 + $0x1d0] sm:$0xff]
    %v804 = vld [vmem:[#allocation9 + $0x1d8] sm:$0xff]
    %v805 = vld [vmem:[#allocation9 + $0x1e0] sm:$0xff]
    %v806 = vld [vmem:[#allocation9 + $0x1e8] sm:$0xff]
    %v807 = vld [vmem:[#allocation9 + $0x1f0] sm:$0xff]
    %v808 = vld [vmem:[#allocation9 + $0x1f8] sm:$0xff]
    %809 = vmatpush.msra.mxu0 %v805
    %810 = vmatpush.msra.mxu0 %v801
    %811 = vmatpush.msra.mxu0 %v797
    %812 = vmatpush.msra.mxu0 %v793
    %813 = vmatpush.msra.mxu0 %v789
    %814 = vmatpush.msra.mxu0 %v785
    %815 = vmatpush.msra.mxu0 %v781
    %816 = vmatpush.msra.mxu0 %v777
    %817 = vmatpush.msra.mxu0 %v773
    %818 = vmatpush.msra.mxu0 %v769
    %819 = vmatpush.msra.mxu0 %v765
    %820 = vmatpush.msra.mxu0 %v761
    %821 = vmatpush.msra.mxu0 %v757
    %822 = vmatpush.msra.mxu0 %v753
    %823 = vmatpush.msra.mxu0 %v749
    %824 = vmatpush.msra.mxu0 %v745
    %825 = vmatmul.f32.gmra.mxu0 0.0
    %v826 = vpop.f32.mrf.mxu0
    %v827 = vadd.f32 0.0, %v826
    %828 = vdwg.mxu0
    %829 = vmatpush.msra.mxu0 %v806
    %830 = vmatpush.msra.mxu0 %v802
    %831 = vmatpush.msra.mxu0 %v798
    %832 = vmatpush.msra.mxu0 %v794
    %833 = vmatpush.msra.mxu0 %v790
    %834 = vmatpush.msra.mxu0 %v786
    %835 = vmatpush.msra.mxu0 %v782
    %836 = vmatpush.msra.mxu0 %v778
    %837 = vmatpush.msra.mxu0 %v774
    %838 = vmatpush.msra.mxu0 %v770
    %839 = vmatpush.msra.mxu0 %v766
    %840 = vmatpush.msra.mxu0 %v762
    %841 = vmatpush.msra.mxu0 %v758
    %842 = vmatpush.msra.mxu0 %v754
    %843 = vmatpush.msra.mxu0 %v750
    %844 = vmatpush.msra.mxu0 %v746
    %845 = vmatmul.f32.gmra.mxu0 0.0
    %v846 = vpop.f32.mrf.mxu0
    %v847 = vadd.f32 0.0, %v846
    %848 = vdwg.mxu0
    %849 = vmatpush.msra.mxu0 %v807
    %850 = vmatpush.msra.mxu0 %v803
    %851 = vmatpush.msra.mxu0 %v799
    %852 = vmatpush.msra.mxu0 %v795
    %853 = vmatpush.msra.mxu0 %v791
    %854 = vmatpush.msra.mxu0 %v787
    %855 = vmatpush.msra.mxu0 %v783
    %856 = vmatpush.msra.mxu0 %v779
    %857 = vmatpush.msra.mxu0 %v775
    %858 = vmatpush.msra.mxu0 %v771
    %859 = vmatpush.msra.mxu0 %v767
    %860 = vmatpush.msra.mxu0 %v763
    %861 = vmatpush.msra.mxu0 %v759
    %862 = vmatpush.msra.mxu0 %v755
    %863 = vmatpush.msra.mxu0 %v751
    %864 = vmatpush.msra.mxu0 %v747
    %865 = vmatmul.f32.gmra.mxu0 0.0
    %v866 = vpop.f32.mrf.mxu0
    %v867 = vadd.f32 0.0, %v866
    %868 = vdwg.mxu0
    %869 = vmatpush.msra.mxu0 %v808
    %870 = vmatpush.msra.mxu0 %v804
    %871 = vmatpush.msra.mxu0 %v800
    %872 = vmatpush.msra.mxu0 %v796
    %873 = vmatpush.msra.mxu0 %v792
    %874 = vmatpush.msra.mxu0 %v788
    %875 = vmatpush.msra.mxu0 %v784
    %876 = vmatpush.msra.mxu0 %v780
    %877 = vmatpush.msra.mxu0 %v776
    %878 = vmatpush.msra.mxu0 %v772
    %879 = vmatpush.msra.mxu0 %v768
    %880 = vmatpush.msra.mxu0 %v764
    %881 = vmatpush.msra.mxu0 %v760
    %882 = vmatpush.msra.mxu0 %v756
    %883 = vmatpush.msra.mxu0 %v752
    %884 = vmatpush.msra.mxu0 %v748
    %885 = vmatmul.f32.gmra.mxu0 0.0
    %v886 = vpop.f32.mrf.mxu0
    %v887 = vadd.f32 0.0, %v886
    %888 = vdwg.mxu0
    %s889 = scalar_lea.vmem [#allocation2], 32
    %v890 = vld [vmem:[%s889] sm:$0xff]
    %v891 = vld [vmem:[%s889 + $0x8] sm:$0xff]
    %v892 = vld [vmem:[%s889 + $0x10] sm:$0xff]
    %v893 = vld [vmem:[%s889 + $0x18] sm:$0xff]
    %v894 = vadd.f32 %v603, %v890
    %v895 = vadd.f32 %v623, %v891
    %v896 = vadd.f32 %v643, %v892
    %v897 = vadd.f32 %v663, %v893
    %v898 = vxor.u32 %v894, 2147483648
    %v899 = vxor.u32 %v895, 2147483648
    %v900 = vxor.u32 %v896, 2147483648
    %v901 = vmul.f32 %v898, 1.442695
    %v902 = vpow.pop %v901
    %v903 = vmul.f32 %v899, 1.442695
    %v904 = vpow.pop %v903
    %v905 = vmul.f32 %v900, 1.442695
    %v906 = vpow.pop %v905
    %v907 = vadd.f32 %v902, 1.0
    %v908 = vadd.f32 %v904, 1.0
    %v909 = vadd.f32 %v906, 1.0
    %v910 = vrcp.pop %v907
    %v911 = vmul.f32 %v907, %v910
    %v912 = vsub.f32 1.0, %v911
    %v913 = vmul.f32 %v910, %v912
    %v914 = vadd.f32 %v910, %v913
    %vm915 = vweird.f32 %v907
    %vm916 = vweird.f32 %v910
    %vm917 = vmor %vm915, %vm916
    %v918 = vsel %vm917, %v910, %v914
    %v919 = vand.u32 2147483647, %v907
    %vm920 = vcmp.eq.f32.partialorder %v919, 8.507059e+37
    %v921 = vand.u32 %v907, 2147483648
    %v922 = vor.u32 1.1754944e-38, %v921
    %v923 = vsel %vm920, %v922, %v918
    %v924 = vmul.f32 1.0, %v923
    %v925 = vrcp.pop %v908
    %v926 = vmul.f32 %v908, %v925
    %v927 = vsub.f32 1.0, %v926
    %v928 = vmul.f32 %v925, %v927
    %v929 = vadd.f32 %v925, %v928
    %vm930 = vweird.f32 %v908
    %vm931 = vweird.f32 %v925
    %vm932 = vmor %vm930, %vm931
    %v933 = vsel %vm932, %v925, %v929
    %v934 = vand.u32 2147483647, %v908
    %vm935 = vcmp.eq.f32.partialorder %v934, 8.507059e+37
    %v936 = vand.u32 %v908, 2147483648
    %v937 = vor.u32 1.1754944e-38, %v936
    %v938 = vsel %vm935, %v937, %v933
    %v939 = vmul.f32 1.0, %v938
    %v940 = vrcp.pop %v909
    %v941 = vmul.f32 %v909, %v940
    %v942 = vsub.f32 1.0, %v941
    %v943 = vmul.f32 %v940, %v942
    %v944 = vadd.f32 %v940, %v943
    %vm945 = vweird.f32 %v909
    %vm946 = vweird.f32 %v940
    %vm947 = vmor %vm945, %vm946
    %v948 = vsel %vm947, %v940, %v944
    %v949 = vand.u32 2147483647, %v909
    %vm950 = vcmp.eq.f32.partialorder %v949, 8.507059e+37
    %v951 = vand.u32 %v909, 2147483648
    %v952 = vor.u32 1.1754944e-38, %v951
    %v953 = vsel %vm950, %v952, %v948
    %v954 = vmul.f32 1.0, %v953
    %v955 = vtanh.pop %v897
    %v956 = vmul.f32 %v939, %v454
    %v957 = vmul.f32 %v924, %v955
    %v958 = vadd.f32 %v956, %v957
    %v959 = vtanh.pop %v958
    %v960 = vmul.f32 %v954, %v959
    %v961 = vadd.f32 %v683, %v827
    %v962 = vadd.f32 %v703, %v847
    %v963 = vadd.f32 %v723, %v867
    %v964 = vadd.f32 %v743, %v887
    %v966 = vperm.slane %v389, 0
    %v967 = vperm.slane %v389, 1
    %v968 = vperm.slane %v389, 2
    %v969 = vperm.slane %v389, 3
    %v974 = vadd.f32 %v961, %v966
    %v975 = vadd.f32 %v962, %v967
    %v976 = vadd.f32 %v963, %v968
    %v977 = vadd.f32 %v964, %v969
    %v978 = vxor.u32 %v974, 2147483648
    %v979 = vxor.u32 %v975, 2147483648
    %v980 = vxor.u32 %v976, 2147483648
    %v981 = vmul.f32 %v978, 1.442695
    %v982 = vpow.pop %v981
    %v983 = vmul.f32 %v979, 1.442695
    %v984 = vpow.pop %v983
    %v985 = vmul.f32 %v980, 1.442695
    %v986 = vpow.pop %v985
    %v987 = vadd.f32 %v982, 1.0
    %v988 = vadd.f32 %v984, 1.0
    %v989 = vadd.f32 %v986, 1.0
    %v990 = vrcp.pop %v987
    %v991 = vmul.f32 %v987, %v990
    %v992 = vsub.f32 1.0, %v991
    %v993 = vmul.f32 %v990, %v992
    %v994 = vadd.f32 %v990, %v993
    %vm995 = vweird.f32 %v987
    %vm996 = vweird.f32 %v990
    %vm997 = vmor %vm995, %vm996
    %v998 = vsel %vm997, %v990, %v994
    %v999 = vand.u32 2147483647, %v987
    %vm1000 = vcmp.eq.f32.partialorder %v999, 8.507059e+37
    %v1001 = vand.u32 %v987, 2147483648
    %v1002 = vor.u32 1.1754944e-38, %v1001
    %v1003 = vsel %vm1000, %v1002, %v998
    %v1004 = vmul.f32 1.0, %v1003
    %v1005 = vrcp.pop %v988
    %v1006 = vmul.f32 %v988, %v1005
    %v1007 = vsub.f32 1.0, %v1006
    %v1008 = vmul.f32 %v1005, %v1007
    %v1009 = vadd.f32 %v1005, %v1008
    %vm1010 = vweird.f32 %v988
    %vm1011 = vweird.f32 %v1005
    %vm1012 = vmor %vm1010, %vm1011
    %v1013 = vsel %vm1012, %v1005, %v1009
    %v1014 = vand.u32 2147483647, %v988
    %vm1015 = vcmp.eq.f32.partialorder %v1014, 8.507059e+37
    %v1016 = vand.u32 %v988, 2147483648
    %v1017 = vor.u32 1.1754944e-38, %v1016
    %v1018 = vsel %vm1015, %v1017, %v1013
    %v1019 = vmul.f32 1.0, %v1018
    %v1020 = vrcp.pop %v989
    %v1021 = vmul.f32 %v989, %v1020
    %v1022 = vsub.f32 1.0, %v1021
    %v1023 = vmul.f32 %v1020, %v1022
    %v1024 = vadd.f32 %v1020, %v1023
    %vm1025 = vweird.f32 %v989
    %vm1026 = vweird.f32 %v1020
    %vm1027 = vmor %vm1025, %vm1026
    %v1028 = vsel %vm1027, %v1020, %v1024
    %v1029 = vand.u32 2147483647, %v989
    %vm1030 = vcmp.eq.f32.partialorder %v1029, 8.507059e+37
    %v1031 = vand.u32 %v989, 2147483648
    %v1032 = vor.u32 1.1754944e-38, %v1031
    %v1033 = vsel %vm1030, %v1032, %v1028
    %v1034 = vmul.f32 1.0, %v1033
    %v1035 = vtanh.pop %v977
    %v1036 = vmul.f32 %v1019, 0.0
    %v1037 = vmul.f32 %v1004, %v1035
    %v1038 = vadd.f32 %v1036, %v1037
    %v1039 = vtanh.pop %v1038
    %v1040 = vmul.f32 %v1034, %v1039
    %1041 = vmatpush.msra.mxu0 %v577
    %1042 = vmatpush.msra.mxu0 %v569
    %1043 = vmatpush.msra.mxu0 %v561
    %1044 = vmatpush.msra.mxu0 %v553
    %1045 = vmatpush.msra.mxu0 %v545
    %1046 = vmatpush.msra.mxu0 %v537
    %1047 = vmatpush.msra.mxu0 %v529
    %1048 = vmatpush.msra.mxu0 %v521
    %1049 = vmatpush.msra.mxu0 %v513
    %1050 = vmatpush.msra.mxu0 %v505
    %1051 = vmatpush.msra.mxu0 %v497
    %1052 = vmatpush.msra.mxu0 %v489
    %1053 = vmatpush.msra.mxu0 %v481
    %1054 = vmatpush.msra.mxu0 %v473
    %1055 = vmatpush.msra.mxu0 %v465
    %1056 = vmatpush.msra.mxu0 %v457
    %1057 = vmatmul.f32.gmra.mxu0 %v960
    %v1058 = vpop.f32.mrf.mxu0
    %v1059 = vadd.f32 0.0, %v1058
    %1060 = vdwg.mxu0
    %1061 = vmatpush.msra.mxu0 %v578
    %1062 = vmatpush.msra.mxu0 %v570
    %1063 = vmatpush.msra.mxu0 %v562
    %1064 = vmatpush.msra.mxu0 %v554
    %1065 = vmatpush.msra.mxu0 %v546
    %1066 = vmatpush.msra.mxu0 %v538
    %1067 = vmatpush.msra.mxu0 %v530
    %1068 = vmatpush.msra.mxu0 %v522
    %1069 = vmatpush.msra.mxu0 %v514
    %1070 = vmatpush.msra.mxu0 %v506
    %1071 = vmatpush.msra.mxu0 %v498
    %1072 = vmatpush.msra.mxu0 %v490
    %1073 = vmatpush.msra.mxu0 %v482
    %1074 = vmatpush.msra.mxu0 %v474
    %1075 = vmatpush.msra.mxu0 %v466
    %1076 = vmatpush.msra.mxu0 %v458
    %1077 = vmatmul.f32.gmra.mxu0 %v960
    %v1078 = vpop.f32.mrf.mxu0
    %v1079 = vadd.f32 0.0, %v1078
    %1080 = vdwg.mxu0
    %1081 = vmatpush.msra.mxu0 %v579
    %1082 = vmatpush.msra.mxu0 %v571
    %1083 = vmatpush.msra.mxu0 %v563
    %1084 = vmatpush.msra.mxu0 %v555
    %1085 = vmatpush.msra.mxu0 %v547
    %1086 = vmatpush.msra.mxu0 %v539
    %1087 = vmatpush.msra.mxu0 %v531
    %1088 = vmatpush.msra.mxu0 %v523
    %1089 = vmatpush.msra.mxu0 %v515
    %1090 = vmatpush.msra.mxu0 %v507
    %1091 = vmatpush.msra.mxu0 %v499
    %1092 = vmatpush.msra.mxu0 %v491
    %1093 = vmatpush.msra.mxu0 %v483
    %1094 = vmatpush.msra.mxu0 %v475
    %1095 = vmatpush.msra.mxu0 %v467
    %1096 = vmatpush.msra.mxu0 %v459
    %1097 = vmatmul.f32.gmra.mxu0 %v960
    %v1098 = vpop.f32.mrf.mxu0
    %v1099 = vadd.f32 0.0, %v1098
    %1100 = vdwg.mxu0
    %1101 = vmatpush.msra.mxu0 %v580
    %1102 = vmatpush.msra.mxu0 %v572
    %1103 = vmatpush.msra.mxu0 %v564
    %1104 = vmatpush.msra.mxu0 %v556
    %1105 = vmatpush.msra.mxu0 %v548
    %1106 = vmatpush.msra.mxu0 %v540
    %1107 = vmatpush.msra.mxu0 %v532
    %1108 = vmatpush.msra.mxu0 %v524
    %1109 = vmatpush.msra.mxu0 %v516
    %1110 = vmatpush.msra.mxu0 %v508
    %1111 = vmatpush.msra.mxu0 %v500
    %1112 = vmatpush.msra.mxu0 %v492
    %1113 = vmatpush.msra.mxu0 %v484
    %1114 = vmatpush.msra.mxu0 %v476
    %1115 = vmatpush.msra.mxu0 %v468
    %1116 = vmatpush.msra.mxu0 %v460
    %1117 = vmatmul.f32.gmra.mxu0 %v960
    %v1118 = vpop.f32.mrf.mxu0
    %v1119 = vadd.f32 0.0, %v1118
    %1120 = vdwg.mxu0
    %1121 = vmatpush.msra.mxu0 %v581
    %1122 = vmatpush.msra.mxu0 %v573
    %1123 = vmatpush.msra.mxu0 %v565
    %1124 = vmatpush.msra.mxu0 %v557
    %1125 = vmatpush.msra.mxu0 %v549
    %1126 = vmatpush.msra.mxu0 %v541
    %1127 = vmatpush.msra.mxu0 %v533
    %1128 = vmatpush.msra.mxu0 %v525
    %1129 = vmatpush.msra.mxu0 %v517
    %1130 = vmatpush.msra.mxu0 %v509
    %1131 = vmatpush.msra.mxu0 %v501
    %1132 = vmatpush.msra.mxu0 %v493
    %1133 = vmatpush.msra.mxu0 %v485
    %1134 = vmatpush.msra.mxu0 %v477
    %1135 = vmatpush.msra.mxu0 %v469
    %1136 = vmatpush.msra.mxu0 %v461
    %1137 = vmatmul.f32.gmra.mxu0 %v960
    %v1138 = vpop.f32.mrf.mxu0
    %v1139 = vadd.f32 0.0, %v1138
    %1140 = vdwg.mxu0
    %1141 = vmatpush.msra.mxu0 %v582
    %1142 = vmatpush.msra.mxu0 %v574
    %1143 = vmatpush.msra.mxu0 %v566
    %1144 = vmatpush.msra.mxu0 %v558
    %1145 = vmatpush.msra.mxu0 %v550
    %1146 = vmatpush.msra.mxu0 %v542
    %1147 = vmatpush.msra.mxu0 %v534
    %1148 = vmatpush.msra.mxu0 %v526
    %1149 = vmatpush.msra.mxu0 %v518
    %1150 = vmatpush.msra.mxu0 %v510
    %1151 = vmatpush.msra.mxu0 %v502
    %1152 = vmatpush.msra.mxu0 %v494
    %1153 = vmatpush.msra.mxu0 %v486
    %1154 = vmatpush.msra.mxu0 %v478
    %1155 = vmatpush.msra.mxu0 %v470
    %1156 = vmatpush.msra.mxu0 %v462
    %1157 = vmatmul.f32.gmra.mxu0 %v960
    %v1158 = vpop.f32.mrf.mxu0
    %v1159 = vadd.f32 0.0, %v1158
    %1160 = vdwg.mxu0
    %1161 = vmatpush.msra.mxu0 %v583
    %1162 = vmatpush.msra.mxu0 %v575
    %1163 = vmatpush.msra.mxu0 %v567
    %1164 = vmatpush.msra.mxu0 %v559
    %1165 = vmatpush.msra.mxu0 %v551
    %1166 = vmatpush.msra.mxu0 %v543
    %1167 = vmatpush.msra.mxu0 %v535
    %1168 = vmatpush.msra.mxu0 %v527
    %1169 = vmatpush.msra.mxu0 %v519
    %1170 = vmatpush.msra.mxu0 %v511
    %1171 = vmatpush.msra.mxu0 %v503
    %1172 = vmatpush.msra.mxu0 %v495
    %1173 = vmatpush.msra.mxu0 %v487
    %1174 = vmatpush.msra.mxu0 %v479
    %1175 = vmatpush.msra.mxu0 %v471
    %1176 = vmatpush.msra.mxu0 %v463
    %1177 = vmatmul.f32.gmra.mxu0 %v960
    %v1178 = vpop.f32.mrf.mxu0
    %v1179 = vadd.f32 0.0, %v1178
    %1180 = vdwg.mxu0
    %1181 = vmatpush.msra.mxu0 %v584
    %1182 = vmatpush.msra.mxu0 %v576
    %1183 = vmatpush.msra.mxu0 %v568
    %1184 = vmatpush.msra.mxu0 %v560
    %1185 = vmatpush.msra.mxu0 %v552
    %1186 = vmatpush.msra.mxu0 %v544
    %1187 = vmatpush.msra.mxu0 %v536
    %1188 = vmatpush.msra.mxu0 %v528
    %1189 = vmatpush.msra.mxu0 %v520
    %1190 = vmatpush.msra.mxu0 %v512
    %1191 = vmatpush.msra.mxu0 %v504
    %1192 = vmatpush.msra.mxu0 %v496
    %1193 = vmatpush.msra.mxu0 %v488
    %1194 = vmatpush.msra.mxu0 %v480
    %1195 = vmatpush.msra.mxu0 %v472
    %1196 = vmatpush.msra.mxu0 %v464
    %1197 = vmatmul.f32.gmra.mxu0 %v960
    %v1198 = vpop.f32.mrf.mxu0
    %v1199 = vadd.f32 0.0, %v1198
    %1200 = vdwg.mxu0
    %1201 = vmatpush.msra.mxu0 %v805
    %1202 = vmatpush.msra.mxu0 %v801
    %1203 = vmatpush.msra.mxu0 %v797
    %1204 = vmatpush.msra.mxu0 %v793
    %1205 = vmatpush.msra.mxu0 %v789
    %1206 = vmatpush.msra.mxu0 %v785
    %1207 = vmatpush.msra.mxu0 %v781
    %1208 = vmatpush.msra.mxu0 %v777
    %1209 = vmatpush.msra.mxu0 %v773
    %1210 = vmatpush.msra.mxu0 %v769
    %1211 = vmatpush.msra.mxu0 %v765
    %1212 = vmatpush.msra.mxu0 %v761
    %1213 = vmatpush.msra.mxu0 %v757
    %1214 = vmatpush.msra.mxu0 %v753
    %1215 = vmatpush.msra.mxu0 %v749
    %1216 = vmatpush.msra.mxu0 %v745
    %1217 = vmatmul.f32.gmra.mxu0 %v1040
    %v1218 = vpop.f32.mrf.mxu0
    %v1219 = vadd.f32 0.0, %v1218
    %1220 = vdwg.mxu0
    %1221 = vmatpush.msra.mxu0 %v806
    %1222 = vmatpush.msra.mxu0 %v802
    %1223 = vmatpush.msra.mxu0 %v798
    %1224 = vmatpush.msra.mxu0 %v794
    %1225 = vmatpush.msra.mxu0 %v790
    %1226 = vmatpush.msra.mxu0 %v786
    %1227 = vmatpush.msra.mxu0 %v782
    %1228 = vmatpush.msra.mxu0 %v778
    %1229 = vmatpush.msra.mxu0 %v774
    %1230 = vmatpush.msra.mxu0 %v770
    %1231 = vmatpush.msra.mxu0 %v766
    %1232 = vmatpush.msra.mxu0 %v762
    %1233 = vmatpush.msra.mxu0 %v758
    %1234 = vmatpush.msra.mxu0 %v754
    %1235 = vmatpush.msra.mxu0 %v750
    %1236 = vmatpush.msra.mxu0 %v746
    %1237 = vmatmul.f32.gmra.mxu0 %v1040
    %v1238 = vpop.f32.mrf.mxu0
    %v1239 = vadd.f32 0.0, %v1238
    %1240 = vdwg.mxu0
    %1241 = vmatpush.msra.mxu0 %v807
    %1242 = vmatpush.msra.mxu0 %v803
    %1243 = vmatpush.msra.mxu0 %v799
    %1244 = vmatpush.msra.mxu0 %v795
    %1245 = vmatpush.msra.mxu0 %v791
    %1246 = vmatpush.msra.mxu0 %v787
    %1247 = vmatpush.msra.mxu0 %v783
    %1248 = vmatpush.msra.mxu0 %v779
    %1249 = vmatpush.msra.mxu0 %v775
    %1250 = vmatpush.msra.mxu0 %v771
    %1251 = vmatpush.msra.mxu0 %v767
    %1252 = vmatpush.msra.mxu0 %v763
    %1253 = vmatpush.msra.mxu0 %v759
    %1254 = vmatpush.msra.mxu0 %v755
    %1255 = vmatpush.msra.mxu0 %v751
    %1256 = vmatpush.msra.mxu0 %v747
    %1257 = vmatmul.f32.gmra.mxu0 %v1040
    %v1258 = vpop.f32.mrf.mxu0
    %v1259 = vadd.f32 0.0, %v1258
    %1260 = vdwg.mxu0
    %1261 = vmatpush.msra.mxu0 %v808
    %1262 = vmatpush.msra.mxu0 %v804
    %1263 = vmatpush.msra.mxu0 %v800
    %1264 = vmatpush.msra.mxu0 %v796
    %1265 = vmatpush.msra.mxu0 %v792
    %1266 = vmatpush.msra.mxu0 %v788
    %1267 = vmatpush.msra.mxu0 %v784
    %1268 = vmatpush.msra.mxu0 %v780
    %1269 = vmatpush.msra.mxu0 %v776
    %1270 = vmatpush.msra.mxu0 %v772
    %1271 = vmatpush.msra.mxu0 %v768
    %1272 = vmatpush.msra.mxu0 %v764
    %1273 = vmatpush.msra.mxu0 %v760
    %1274 = vmatpush.msra.mxu0 %v756
    %1275 = vmatpush.msra.mxu0 %v752
    %1276 = vmatpush.msra.mxu0 %v748
    %1277 = vmatmul.f32.gmra.mxu0 %v1040
    %v1278 = vpop.f32.mrf.mxu0
    %v1279 = vadd.f32 0.0, %v1278
    %1280 = vdwg.mxu0
    %s1281 = scalar_lea.vmem [#allocation2], 64
    %v1282 = vld [vmem:[%s1281] sm:$0xff]
    %v1283 = vld [vmem:[%s1281 + $0x8] sm:$0xff]
    %v1284 = vld [vmem:[%s1281 + $0x10] sm:$0xff]
    %v1285 = vld [vmem:[%s1281 + $0x18] sm:$0xff]
    %v1286 = vadd.f32 %v1059, %v1282
    %v1287 = vadd.f32 %v1079, %v1283
    %v1288 = vadd.f32 %v1099, %v1284
    %v1289 = vadd.f32 %v1119, %v1285
    %v1290 = vxor.u32 %v1286, 2147483648
    %v1291 = vxor.u32 %v1287, 2147483648
    %v1292 = vxor.u32 %v1288, 2147483648
    %v1293 = vmul.f32 %v1290, 1.442695
    %v1294 = vpow.pop %v1293
    %v1295 = vmul.f32 %v1291, 1.442695
    %v1296 = vpow.pop %v1295
    %v1297 = vmul.f32 %v1292, 1.442695
    %v1298 = vpow.pop %v1297
    %v1299 = vadd.f32 %v1294, 1.0
    %v1300 = vadd.f32 %v1296, 1.0
    %v1301 = vadd.f32 %v1298, 1.0
    %v1302 = vrcp.pop %v1299
    %v1303 = vmul.f32 %v1299, %v1302
    %v1304 = vsub.f32 1.0, %v1303
    %v1305 = vmul.f32 %v1302, %v1304
    %v1306 = vadd.f32 %v1302, %v1305
    %vm1307 = vweird.f32 %v1299
    %vm1308 = vweird.f32 %v1302
    %vm1309 = vmor %vm1307, %vm1308
    %v1310 = vsel %vm1309, %v1302, %v1306
    %v1311 = vand.u32 2147483647, %v1299
    %vm1312 = vcmp.eq.f32.partialorder %v1311, 8.507059e+37
    %v1313 = vand.u32 %v1299, 2147483648
    %v1314 = vor.u32 1.1754944e-38, %v1313
    %v1315 = vsel %vm1312, %v1314, %v1310
    %v1316 = vmul.f32 1.0, %v1315
    %v1317 = vrcp.pop %v1300
    %v1318 = vmul.f32 %v1300, %v1317
    %v1319 = vsub.f32 1.0, %v1318
    %v1320 = vmul.f32 %v1317, %v1319
    %v1321 = vadd.f32 %v1317, %v1320
    %vm1322 = vweird.f32 %v1300
    %vm1323 = vweird.f32 %v1317
    %vm1324 = vmor %vm1322, %vm1323
    %v1325 = vsel %vm1324, %v1317, %v1321
    %v1326 = vand.u32 2147483647, %v1300
    %vm1327 = vcmp.eq.f32.partialorder %v1326, 8.507059e+37
    %v1328 = vand.u32 %v1300, 2147483648
    %v1329 = vor.u32 1.1754944e-38, %v1328
    %v1330 = vsel %vm1327, %v1329, %v1325
    %v1331 = vmul.f32 1.0, %v1330
    %v1332 = vrcp.pop %v1301
    %v1333 = vmul.f32 %v1301, %v1332
    %v1334 = vsub.f32 1.0, %v1333
    %v1335 = vmul.f32 %v1332, %v1334
    %v1336 = vadd.f32 %v1332, %v1335
    %vm1337 = vweird.f32 %v1301
    %vm1338 = vweird.f32 %v1332
    %vm1339 = vmor %vm1337, %vm1338
    %v1340 = vsel %vm1339, %v1332, %v1336
    %v1341 = vand.u32 2147483647, %v1301
    %vm1342 = vcmp.eq.f32.partialorder %v1341, 8.507059e+37
    %v1343 = vand.u32 %v1301, 2147483648
    %v1344 = vor.u32 1.1754944e-38, %v1343
    %v1345 = vsel %vm1342, %v1344, %v1340
    %v1346 = vmul.f32 1.0, %v1345
    %v1347 = vtanh.pop %v1289
    %v1348 = vmul.f32 %v1331, %v958
    %v1349 = vmul.f32 %v1316, %v1347
    %v1350 = vadd.f32 %v1348, %v1349
    %v1351 = vtanh.pop %v1350
    %v1352 = vmul.f32 %v1346, %v1351
    %v1353 = vadd.f32 %v1139, %v1219
    %v1354 = vadd.f32 %v1159, %v1239
    %v1355 = vadd.f32 %v1179, %v1259
    %v1356 = vadd.f32 %v1199, %v1279
    %v1357 = vadd.f32 %v1353, %v966
    %v1358 = vadd.f32 %v1354, %v967
    %v1359 = vadd.f32 %v1355, %v968
    %v1360 = vadd.f32 %v1356, %v969
    %v1361 = vxor.u32 %v1357, 2147483648
    %v1362 = vxor.u32 %v1358, 2147483648
    %v1363 = vxor.u32 %v1359, 2147483648
    %v1364 = vmul.f32 %v1361, 1.442695
    %v1365 = vpow.pop %v1364
    %v1366 = vmul.f32 %v1362, 1.442695
    %v1367 = vpow.pop %v1366
    %v1368 = vmul.f32 %v1363, 1.442695
    %v1369 = vpow.pop %v1368
    %v1370 = vadd.f32 %v1365, 1.0
    %v1371 = vadd.f32 %v1367, 1.0
    %v1372 = vadd.f32 %v1369, 1.0
    %v1373 = vrcp.pop %v1370
    %v1374 = vmul.f32 %v1370, %v1373
    %v1375 = vsub.f32 1.0, %v1374
    %v1376 = vmul.f32 %v1373, %v1375
    %v1377 = vadd.f32 %v1373, %v1376
    %vm1378 = vweird.f32 %v1370
    %vm1379 = vweird.f32 %v1373
    %vm1380 = vmor %vm1378, %vm1379
    %v1381 = vsel %vm1380, %v1373, %v1377
    %v1382 = vand.u32 2147483647, %v1370
    %vm1383 = vcmp.eq.f32.partialorder %v1382, 8.507059e+37
    %v1384 = vand.u32 %v1370, 2147483648
    %v1385 = vor.u32 1.1754944e-38, %v1384
    %v1386 = vsel %vm1383, %v1385, %v1381
    %v1387 = vmul.f32 1.0, %v1386
    %v1388 = vrcp.pop %v1371
    %v1389 = vmul.f32 %v1371, %v1388
    %v1390 = vsub.f32 1.0, %v1389
    %v1391 = vmul.f32 %v1388, %v1390
    %v1392 = vadd.f32 %v1388, %v1391
    %vm1393 = vweird.f32 %v1371
    %vm1394 = vweird.f32 %v1388
    %vm1395 = vmor %vm1393, %vm1394
    %v1396 = vsel %vm1395, %v1388, %v1392
    %v1397 = vand.u32 2147483647, %v1371
    %vm1398 = vcmp.eq.f32.partialorder %v1397, 8.507059e+37
    %v1399 = vand.u32 %v1371, 2147483648
    %v1400 = vor.u32 1.1754944e-38, %v1399
    %v1401 = vsel %vm1398, %v1400, %v1396
    %v1402 = vmul.f32 1.0, %v1401
    %v1403 = vrcp.pop %v1372
    %v1404 = vmul.f32 %v1372, %v1403
    %v1405 = vsub.f32 1.0, %v1404
    %v1406 = vmul.f32 %v1403, %v1405
    %v1407 = vadd.f32 %v1403, %v1406
    %vm1408 = vweird.f32 %v1372
    %vm1409 = vweird.f32 %v1403
    %vm1410 = vmor %vm1408, %vm1409
    %v1411 = vsel %vm1410, %v1403, %v1407
    %v1412 = vand.u32 2147483647, %v1372
    %vm1413 = vcmp.eq.f32.partialorder %v1412, 8.507059e+37
    %v1414 = vand.u32 %v1372, 2147483648
    %v1415 = vor.u32 1.1754944e-38, %v1414
    %v1416 = vsel %vm1413, %v1415, %v1411
    %v1417 = vmul.f32 1.0, %v1416
    %v1418 = vtanh.pop %v1360
    %v1419 = vmul.f32 %v1402, %v1038
    %v1420 = vmul.f32 %v1387, %v1418
    %v1421 = vadd.f32 %v1419, %v1420
    %v1422 = vtanh.pop %v1421
    %v1423 = vmul.f32 %v1417, %v1422
    %1424 = vmatpush.msra.mxu0 %v577
    %1425 = vmatpush.msra.mxu0 %v569
    %1426 = vmatpush.msra.mxu0 %v561
    %1427 = vmatpush.msra.mxu0 %v553
    %1428 = vmatpush.msra.mxu0 %v545
    %1429 = vmatpush.msra.mxu0 %v537
    %1430 = vmatpush.msra.mxu0 %v529
    %1431 = vmatpush.msra.mxu0 %v521
    %1432 = vmatpush.msra.mxu0 %v513
    %1433 = vmatpush.msra.mxu0 %v505
    %1434 = vmatpush.msra.mxu0 %v497
    %1435 = vmatpush.msra.mxu0 %v489
    %1436 = vmatpush.msra.mxu0 %v481
    %1437 = vmatpush.msra.mxu0 %v473
    %1438 = vmatpush.msra.mxu0 %v465
    %1439 = vmatpush.msra.mxu0 %v457
    %1440 = vmatmul.f32.gmra.mxu0 %v1352
    %v1441 = vpop.f32.mrf.mxu0
    %v1442 = vadd.f32 0.0, %v1441
    %1443 = vdwg.mxu0
    %1444 = vmatpush.msra.mxu0 %v578
    %1445 = vmatpush.msra.mxu0 %v570
    %1446 = vmatpush.msra.mxu0 %v562
    %1447 = vmatpush.msra.mxu0 %v554
    %1448 = vmatpush.msra.mxu0 %v546
    %1449 = vmatpush.msra.mxu0 %v538
    %1450 = vmatpush.msra.mxu0 %v530
    %1451 = vmatpush.msra.mxu0 %v522
    %1452 = vmatpush.msra.mxu0 %v514
    %1453 = vmatpush.msra.mxu0 %v506
    %1454 = vmatpush.msra.mxu0 %v498
    %1455 = vmatpush.msra.mxu0 %v490
    %1456 = vmatpush.msra.mxu0 %v482
    %1457 = vmatpush.msra.mxu0 %v474
    %1458 = vmatpush.msra.mxu0 %v466
    %1459 = vmatpush.msra.mxu0 %v458
    %1460 = vmatmul.f32.gmra.mxu0 %v1352
    %v1461 = vpop.f32.mrf.mxu0
    %v1462 = vadd.f32 0.0, %v1461
    %1463 = vdwg.mxu0
    %1464 = vmatpush.msra.mxu0 %v579
    %1465 = vmatpush.msra.mxu0 %v571
    %1466 = vmatpush.msra.mxu0 %v563
    %1467 = vmatpush.msra.mxu0 %v555
    %1468 = vmatpush.msra.mxu0 %v547
    %1469 = vmatpush.msra.mxu0 %v539
    %1470 = vmatpush.msra.mxu0 %v531
    %1471 = vmatpush.msra.mxu0 %v523
    %1472 = vmatpush.msra.mxu0 %v515
    %1473 = vmatpush.msra.mxu0 %v507
    %1474 = vmatpush.msra.mxu0 %v499
    %1475 = vmatpush.msra.mxu0 %v491
    %1476 = vmatpush.msra.mxu0 %v483
    %1477 = vmatpush.msra.mxu0 %v475
    %1478 = vmatpush.msra.mxu0 %v467
    %1479 = vmatpush.msra.mxu0 %v459
    %1480 = vmatmul.f32.gmra.mxu0 %v1352
    %v1481 = vpop.f32.mrf.mxu0
    %v1482 = vadd.f32 0.0, %v1481
    %1483 = vdwg.mxu0
    %1484 = vmatpush.msra.mxu0 %v580
    %1485 = vmatpush.msra.mxu0 %v572
    %1486 = vmatpush.msra.mxu0 %v564
    %1487 = vmatpush.msra.mxu0 %v556
    %1488 = vmatpush.msra.mxu0 %v548
    %1489 = vmatpush.msra.mxu0 %v540
    %1490 = vmatpush.msra.mxu0 %v532
    %1491 = vmatpush.msra.mxu0 %v524
    %1492 = vmatpush.msra.mxu0 %v516
    %1493 = vmatpush.msra.mxu0 %v508
    %1494 = vmatpush.msra.mxu0 %v500
    %1495 = vmatpush.msra.mxu0 %v492
    %1496 = vmatpush.msra.mxu0 %v484
    %1497 = vmatpush.msra.mxu0 %v476
    %1498 = vmatpush.msra.mxu0 %v468
    %1499 = vmatpush.msra.mxu0 %v460
    %1500 = vmatmul.f32.gmra.mxu0 %v1352
    %v1501 = vpop.f32.mrf.mxu0
    %v1502 = vadd.f32 0.0, %v1501
    %1503 = vdwg.mxu0
    %1504 = vmatpush.msra.mxu0 %v581
    %1505 = vmatpush.msra.mxu0 %v573
    %1506 = vmatpush.msra.mxu0 %v565
    %1507 = vmatpush.msra.mxu0 %v557
    %1508 = vmatpush.msra.mxu0 %v549
    %1509 = vmatpush.msra.mxu0 %v541
    %1510 = vmatpush.msra.mxu0 %v533
    %1511 = vmatpush.msra.mxu0 %v525
    %1512 = vmatpush.msra.mxu0 %v517
    %1513 = vmatpush.msra.mxu0 %v509
    %1514 = vmatpush.msra.mxu0 %v501
    %1515 = vmatpush.msra.mxu0 %v493
    %1516 = vmatpush.msra.mxu0 %v485
    %1517 = vmatpush.msra.mxu0 %v477
    %1518 = vmatpush.msra.mxu0 %v469
    %1519 = vmatpush.msra.mxu0 %v461
    %1520 = vmatmul.f32.gmra.mxu0 %v1352
    %v1521 = vpop.f32.mrf.mxu0
    %v1522 = vadd.f32 0.0, %v1521
    %1523 = vdwg.mxu0
    %1524 = vmatpush.msra.mxu0 %v582
    %1525 = vmatpush.msra.mxu0 %v574
    %1526 = vmatpush.msra.mxu0 %v566
    %1527 = vmatpush.msra.mxu0 %v558
    %1528 = vmatpush.msra.mxu0 %v550
    %1529 = vmatpush.msra.mxu0 %v542
    %1530 = vmatpush.msra.mxu0 %v534
    %1531 = vmatpush.msra.mxu0 %v526
    %1532 = vmatpush.msra.mxu0 %v518
    %1533 = vmatpush.msra.mxu0 %v510
    %1534 = vmatpush.msra.mxu0 %v502
    %1535 = vmatpush.msra.mxu0 %v494
    %1536 = vmatpush.msra.mxu0 %v486
    %1537 = vmatpush.msra.mxu0 %v478
    %1538 = vmatpush.msra.mxu0 %v470
    %1539 = vmatpush.msra.mxu0 %v462
    %1540 = vmatmul.f32.gmra.mxu0 %v1352
    %v1541 = vpop.f32.mrf.mxu0
    %v1542 = vadd.f32 0.0, %v1541
    %1543 = vdwg.mxu0
    %1544 = vmatpush.msra.mxu0 %v583
    %1545 = vmatpush.msra.mxu0 %v575
    %1546 = vmatpush.msra.mxu0 %v567
    %1547 = vmatpush.msra.mxu0 %v559
    %1548 = vmatpush.msra.mxu0 %v551
    %1549 = vmatpush.msra.mxu0 %v543
    %1550 = vmatpush.msra.mxu0 %v535
    %1551 = vmatpush.msra.mxu0 %v527
    %1552 = vmatpush.msra.mxu0 %v519
    %1553 = vmatpush.msra.mxu0 %v511
    %1554 = vmatpush.msra.mxu0 %v503
    %1555 = vmatpush.msra.mxu0 %v495
    %1556 = vmatpush.msra.mxu0 %v487
    %1557 = vmatpush.msra.mxu0 %v479
    %1558 = vmatpush.msra.mxu0 %v471
    %1559 = vmatpush.msra.mxu0 %v463
    %1560 = vmatmul.f32.gmra.mxu0 %v1352
    %v1561 = vpop.f32.mrf.mxu0
    %v1562 = vadd.f32 0.0, %v1561
    %1563 = vdwg.mxu0
    %1564 = vmatpush.msra.mxu0 %v584
    %1565 = vmatpush.msra.mxu0 %v576
    %1566 = vmatpush.msra.mxu0 %v568
    %1567 = vmatpush.msra.mxu0 %v560
    %1568 = vmatpush.msra.mxu0 %v552
    %1569 = vmatpush.msra.mxu0 %v544
    %1570 = vmatpush.msra.mxu0 %v536
    %1571 = vmatpush.msra.mxu0 %v528
    %1572 = vmatpush.msra.mxu0 %v520
    %1573 = vmatpush.msra.mxu0 %v512
    %1574 = vmatpush.msra.mxu0 %v504
    %1575 = vmatpush.msra.mxu0 %v496
    %1576 = vmatpush.msra.mxu0 %v488
    %1577 = vmatpush.msra.mxu0 %v480
    %1578 = vmatpush.msra.mxu0 %v472
    %1579 = vmatpush.msra.mxu0 %v464
    %1580 = vmatmul.f32.gmra.mxu0 %v1352
    %v1581 = vpop.f32.mrf.mxu0
    %v1582 = vadd.f32 0.0, %v1581
    %1583 = vdwg.mxu0
    %1584 = vmatpush.msra.mxu0 %v805
    %1585 = vmatpush.msra.mxu0 %v801
    %1586 = vmatpush.msra.mxu0 %v797
    %1587 = vmatpush.msra.mxu0 %v793
    %1588 = vmatpush.msra.mxu0 %v789
    %1589 = vmatpush.msra.mxu0 %v785
    %1590 = vmatpush.msra.mxu0 %v781
    %1591 = vmatpush.msra.mxu0 %v777
    %1592 = vmatpush.msra.mxu0 %v773
    %1593 = vmatpush.msra.mxu0 %v769
    %1594 = vmatpush.msra.mxu0 %v765
    %1595 = vmatpush.msra.mxu0 %v761
    %1596 = vmatpush.msra.mxu0 %v757
    %1597 = vmatpush.msra.mxu0 %v753
    %1598 = vmatpush.msra.mxu0 %v749
    %1599 = vmatpush.msra.mxu0 %v745
    %1600 = vmatmul.f32.gmra.mxu0 %v1423
    %v1601 = vpop.f32.mrf.mxu0
    %v1602 = vadd.f32 0.0, %v1601
    %1603 = vdwg.mxu0
    %1604 = vmatpush.msra.mxu0 %v806
    %1605 = vmatpush.msra.mxu0 %v802
    %1606 = vmatpush.msra.mxu0 %v798
    %1607 = vmatpush.msra.mxu0 %v794
    %1608 = vmatpush.msra.mxu0 %v790
    %1609 = vmatpush.msra.mxu0 %v786
    %1610 = vmatpush.msra.mxu0 %v782
    %1611 = vmatpush.msra.mxu0 %v778
    %1612 = vmatpush.msra.mxu0 %v774
    %1613 = vmatpush.msra.mxu0 %v770
    %1614 = vmatpush.msra.mxu0 %v766
    %1615 = vmatpush.msra.mxu0 %v762
    %1616 = vmatpush.msra.mxu0 %v758
    %1617 = vmatpush.msra.mxu0 %v754
    %1618 = vmatpush.msra.mxu0 %v750
    %1619 = vmatpush.msra.mxu0 %v746
    %1620 = vmatmul.f32.gmra.mxu0 %v1423
    %v1621 = vpop.f32.mrf.mxu0
    %v1622 = vadd.f32 0.0, %v1621
    %1623 = vdwg.mxu0
    %1624 = vmatpush.msra.mxu0 %v807
    %1625 = vmatpush.msra.mxu0 %v803
    %1626 = vmatpush.msra.mxu0 %v799
    %1627 = vmatpush.msra.mxu0 %v795
    %1628 = vmatpush.msra.mxu0 %v791
    %1629 = vmatpush.msra.mxu0 %v787
    %1630 = vmatpush.msra.mxu0 %v783
    %1631 = vmatpush.msra.mxu0 %v779
    %1632 = vmatpush.msra.mxu0 %v775
    %1633 = vmatpush.msra.mxu0 %v771
    %1634 = vmatpush.msra.mxu0 %v767
    %1635 = vmatpush.msra.mxu0 %v763
    %1636 = vmatpush.msra.mxu0 %v759
    %1637 = vmatpush.msra.mxu0 %v755
    %1638 = vmatpush.msra.mxu0 %v751
    %1639 = vmatpush.msra.mxu0 %v747
    %1640 = vmatmul.f32.gmra.mxu0 %v1423
    %v1641 = vpop.f32.mrf.mxu0
    %v1642 = vadd.f32 0.0, %v1641
    %1643 = vdwg.mxu0
    %1644 = vmatpush.msra.mxu0 %v808
    %1645 = vmatpush.msra.mxu0 %v804
    %1646 = vmatpush.msra.mxu0 %v800
    %1647 = vmatpush.msra.mxu0 %v796
    %1648 = vmatpush.msra.mxu0 %v792
    %1649 = vmatpush.msra.mxu0 %v788
    %1650 = vmatpush.msra.mxu0 %v784
    %1651 = vmatpush.msra.mxu0 %v780
    %1652 = vmatpush.msra.mxu0 %v776
    %1653 = vmatpush.msra.mxu0 %v772
    %1654 = vmatpush.msra.mxu0 %v768
    %1655 = vmatpush.msra.mxu0 %v764
    %1656 = vmatpush.msra.mxu0 %v760
    %1657 = vmatpush.msra.mxu0 %v756
    %1658 = vmatpush.msra.mxu0 %v752
    %1659 = vmatpush.msra.mxu0 %v748
    %1660 = vmatmul.f32.gmra.mxu0 %v1423
    %v1661 = vpop.f32.mrf.mxu0
    %v1662 = vadd.f32 0.0, %v1661
    %1663 = vdwg.mxu0
    %s1664 = scalar_lea.vmem [#allocation2], 96
    %v1665 = vld [vmem:[%s1664] sm:$0xff]
    %v1666 = vld [vmem:[%s1664 + $0x8] sm:$0xff]
    %v1667 = vld [vmem:[%s1664 + $0x10] sm:$0xff]
    %v1668 = vld [vmem:[%s1664 + $0x18] sm:$0xff]
    %v1669 = vadd.f32 %v1442, %v1665
    %v1670 = vadd.f32 %v1462, %v1666
    %v1671 = vadd.f32 %v1482, %v1667
    %v1672 = vadd.f32 %v1502, %v1668
    %v1673 = vxor.u32 %v1669, 2147483648
    %v1674 = vxor.u32 %v1670, 2147483648
    %v1675 = vxor.u32 %v1671, 2147483648
    %v1676 = vmul.f32 %v1673, 1.442695
    %v1677 = vpow.pop %v1676
    %v1678 = vmul.f32 %v1674, 1.442695
    %v1679 = vpow.pop %v1678
    %v1680 = vmul.f32 %v1675, 1.442695
    %v1681 = vpow.pop %v1680
    %v1682 = vadd.f32 %v1677, 1.0
    %v1683 = vadd.f32 %v1679, 1.0
    %v1684 = vadd.f32 %v1681, 1.0
    %v1685 = vrcp.pop %v1682
    %v1686 = vmul.f32 %v1682, %v1685
    %v1687 = vsub.f32 1.0, %v1686
    %v1688 = vmul.f32 %v1685, %v1687
    %v1689 = vadd.f32 %v1685, %v1688
    %vm1690 = vweird.f32 %v1682
    %vm1691 = vweird.f32 %v1685
    %vm1692 = vmor %vm1690, %vm1691
    %v1693 = vsel %vm1692, %v1685, %v1689
    %v1694 = vand.u32 2147483647, %v1682
    %vm1695 = vcmp.eq.f32.partialorder %v1694, 8.507059e+37
    %v1696 = vand.u32 %v1682, 2147483648
    %v1697 = vor.u32 1.1754944e-38, %v1696
    %v1698 = vsel %vm1695, %v1697, %v1693
    %v1699 = vmul.f32 1.0, %v1698
    %v1700 = vrcp.pop %v1683
    %v1701 = vmul.f32 %v1683, %v1700
    %v1702 = vsub.f32 1.0, %v1701
    %v1703 = vmul.f32 %v1700, %v1702
    %v1704 = vadd.f32 %v1700, %v1703
    %vm1705 = vweird.f32 %v1683
    %vm1706 = vweird.f32 %v1700
    %vm1707 = vmor %vm1705, %vm1706
    %v1708 = vsel %vm1707, %v1700, %v1704
    %v1709 = vand.u32 2147483647, %v1683
    %vm1710 = vcmp.eq.f32.partialorder %v1709, 8.507059e+37
    %v1711 = vand.u32 %v1683, 2147483648
    %v1712 = vor.u32 1.1754944e-38, %v1711
    %v1713 = vsel %vm1710, %v1712, %v1708
    %v1714 = vmul.f32 1.0, %v1713
    %v1715 = vrcp.pop %v1684
    %v1716 = vmul.f32 %v1684, %v1715
    %v1717 = vsub.f32 1.0, %v1716
    %v1718 = vmul.f32 %v1715, %v1717
    %v1719 = vadd.f32 %v1715, %v1718
    %vm1720 = vweird.f32 %v1684
    %vm1721 = vweird.f32 %v1715
    %vm1722 = vmor %vm1720, %vm1721
    %v1723 = vsel %vm1722, %v1715, %v1719
    %v1724 = vand.u32 2147483647, %v1684
    %vm1725 = vcmp.eq.f32.partialorder %v1724, 8.507059e+37
    %v1726 = vand.u32 %v1684, 2147483648
    %v1727 = vor.u32 1.1754944e-38, %v1726
    %v1728 = vsel %vm1725, %v1727, %v1723
    %v1729 = vmul.f32 1.0, %v1728
    %v1730 = vtanh.pop %v1672
    %v1731 = vmul.f32 %v1714, %v1350
    %v1732 = vmul.f32 %v1699, %v1730
    %v1733 = vadd.f32 %v1731, %v1732
    %v1734 = vtanh.pop %v1733
    %v1735 = vmul.f32 %v1729, %v1734
    %v1736 = vadd.f32 %v1522, %v1602
    %v1737 = vadd.f32 %v1542, %v1622
    %v1738 = vadd.f32 %v1562, %v1642
    %v1739 = vadd.f32 %v1582, %v1662
    %v1740 = vadd.f32 %v1736, %v966
    %v1741 = vadd.f32 %v1737, %v967
    %v1742 = vadd.f32 %v1738, %v968
    %v1743 = vadd.f32 %v1739, %v969
    %v1744 = vxor.u32 %v1740, 2147483648
    %v1745 = vxor.u32 %v1741, 2147483648
    %v1746 = vxor.u32 %v1742, 2147483648
    %v1747 = vmul.f32 %v1744, 1.442695
    %v1748 = vpow.pop %v1747
    %v1749 = vmul.f32 %v1745, 1.442695
    %v1750 = vpow.pop %v1749
    %v1751 = vmul.f32 %v1746, 1.442695
    %v1752 = vpow.pop %v1751
    %v1753 = vadd.f32 %v1748, 1.0
    %v1754 = vadd.f32 %v1750, 1.0
    %v1755 = vadd.f32 %v1752, 1.0
    %v1756 = vrcp.pop %v1753
    %v1757 = vmul.f32 %v1753, %v1756
    %v1758 = vsub.f32 1.0, %v1757
    %v1759 = vmul.f32 %v1756, %v1758
    %v1760 = vadd.f32 %v1756, %v1759
    %vm1761 = vweird.f32 %v1753
    %vm1762 = vweird.f32 %v1756
    %vm1763 = vmor %vm1761, %vm1762
    %v1764 = vsel %vm1763, %v1756, %v1760
    %v1765 = vand.u32 2147483647, %v1753
    %vm1766 = vcmp.eq.f32.partialorder %v1765, 8.507059e+37
    %v1767 = vand.u32 %v1753, 2147483648
    %v1768 = vor.u32 1.1754944e-38, %v1767
    %v1769 = vsel %vm1766, %v1768, %v1764
    %v1770 = vmul.f32 1.0, %v1769
    %v1771 = vrcp.pop %v1754
    %v1772 = vmul.f32 %v1754, %v1771
    %v1773 = vsub.f32 1.0, %v1772
    %v1774 = vmul.f32 %v1771, %v1773
    %v1775 = vadd.f32 %v1771, %v1774
    %vm1776 = vweird.f32 %v1754
    %vm1777 = vweird.f32 %v1771
    %vm1778 = vmor %vm1776, %vm1777
    %v1779 = vsel %vm1778, %v1771, %v1775
    %v1780 = vand.u32 2147483647, %v1754
    %vm1781 = vcmp.eq.f32.partialorder %v1780, 8.507059e+37
    %v1782 = vand.u32 %v1754, 2147483648
    %v1783 = vor.u32 1.1754944e-38, %v1782
    %v1784 = vsel %vm1781, %v1783, %v1779
    %v1785 = vmul.f32 1.0, %v1784
    %v1786 = vrcp.pop %v1755
    %v1787 = vmul.f32 %v1755, %v1786
    %v1788 = vsub.f32 1.0, %v1787
    %v1789 = vmul.f32 %v1786, %v1788
    %v1790 = vadd.f32 %v1786, %v1789
    %vm1791 = vweird.f32 %v1755
    %vm1792 = vweird.f32 %v1786
    %vm1793 = vmor %vm1791, %vm1792
    %v1794 = vsel %vm1793, %v1786, %v1790
    %v1795 = vand.u32 2147483647, %v1755
    %vm1796 = vcmp.eq.f32.partialorder %v1795, 8.507059e+37
    %v1797 = vand.u32 %v1755, 2147483648
    %v1798 = vor.u32 1.1754944e-38, %v1797
    %v1799 = vsel %vm1796, %v1798, %v1794
    %v1800 = vmul.f32 1.0, %v1799
    %v1801 = vtanh.pop %v1743
    %v1802 = vmul.f32 %v1785, %v1421
    %v1803 = vmul.f32 %v1770, %v1801
    %v1804 = vadd.f32 %v1802, %v1803
    %v1805 = vtanh.pop %v1804
    %v1806 = vmul.f32 %v1800, %v1805
    %1807 = vmatpush.msra.mxu0 %v577
    %1808 = vmatpush.msra.mxu0 %v569
    %1809 = vmatpush.msra.mxu0 %v561
    %1810 = vmatpush.msra.mxu0 %v553
    %1811 = vmatpush.msra.mxu0 %v545
    %1812 = vmatpush.msra.mxu0 %v537
    %1813 = vmatpush.msra.mxu0 %v529
    %1814 = vmatpush.msra.mxu0 %v521
    %1815 = vmatpush.msra.mxu0 %v513
    %1816 = vmatpush.msra.mxu0 %v505
    %1817 = vmatpush.msra.mxu0 %v497
    %1818 = vmatpush.msra.mxu0 %v489
    %1819 = vmatpush.msra.mxu0 %v481
    %1820 = vmatpush.msra.mxu0 %v473
    %1821 = vmatpush.msra.mxu0 %v465
    %1822 = vmatpush.msra.mxu0 %v457
    %1823 = vmatmul.f32.gmra.mxu0 %v1735
    %v1824 = vpop.f32.mrf.mxu0
    %v1825 = vadd.f32 0.0, %v1824
    %1826 = vdwg.mxu0
    %1827 = vmatpush.msra.mxu0 %v578
    %1828 = vmatpush.msra.mxu0 %v570
    %1829 = vmatpush.msra.mxu0 %v562
    %1830 = vmatpush.msra.mxu0 %v554
    %1831 = vmatpush.msra.mxu0 %v546
    %1832 = vmatpush.msra.mxu0 %v538
    %1833 = vmatpush.msra.mxu0 %v530
    %1834 = vmatpush.msra.mxu0 %v522
    %1835 = vmatpush.msra.mxu0 %v514
    %1836 = vmatpush.msra.mxu0 %v506
    %1837 = vmatpush.msra.mxu0 %v498
    %1838 = vmatpush.msra.mxu0 %v490
    %1839 = vmatpush.msra.mxu0 %v482
    %1840 = vmatpush.msra.mxu0 %v474
    %1841 = vmatpush.msra.mxu0 %v466
    %1842 = vmatpush.msra.mxu0 %v458
    %1843 = vmatmul.f32.gmra.mxu0 %v1735
    %v1844 = vpop.f32.mrf.mxu0
    %v1845 = vadd.f32 0.0, %v1844
    %1846 = vdwg.mxu0
    %1847 = vmatpush.msra.mxu0 %v579
    %1848 = vmatpush.msra.mxu0 %v571
    %1849 = vmatpush.msra.mxu0 %v563
    %1850 = vmatpush.msra.mxu0 %v555
    %1851 = vmatpush.msra.mxu0 %v547
    %1852 = vmatpush.msra.mxu0 %v539
    %1853 = vmatpush.msra.mxu0 %v531
    %1854 = vmatpush.msra.mxu0 %v523
    %1855 = vmatpush.msra.mxu0 %v515
    %1856 = vmatpush.msra.mxu0 %v507
    %1857 = vmatpush.msra.mxu0 %v499
    %1858 = vmatpush.msra.mxu0 %v491
    %1859 = vmatpush.msra.mxu0 %v483
    %1860 = vmatpush.msra.mxu0 %v475
    %1861 = vmatpush.msra.mxu0 %v467
    %1862 = vmatpush.msra.mxu0 %v459
    %1863 = vmatmul.f32.gmra.mxu0 %v1735
    %v1864 = vpop.f32.mrf.mxu0
    %v1865 = vadd.f32 0.0, %v1864
    %1866 = vdwg.mxu0
    %1867 = vmatpush.msra.mxu0 %v580
    %1868 = vmatpush.msra.mxu0 %v572
    %1869 = vmatpush.msra.mxu0 %v564
    %1870 = vmatpush.msra.mxu0 %v556
    %1871 = vmatpush.msra.mxu0 %v548
    %1872 = vmatpush.msra.mxu0 %v540
    %1873 = vmatpush.msra.mxu0 %v532
    %1874 = vmatpush.msra.mxu0 %v524
    %1875 = vmatpush.msra.mxu0 %v516
    %1876 = vmatpush.msra.mxu0 %v508
    %1877 = vmatpush.msra.mxu0 %v500
    %1878 = vmatpush.msra.mxu0 %v492
    %1879 = vmatpush.msra.mxu0 %v484
    %1880 = vmatpush.msra.mxu0 %v476
    %1881 = vmatpush.msra.mxu0 %v468
    %1882 = vmatpush.msra.mxu0 %v460
    %1883 = vmatmul.f32.gmra.mxu0 %v1735
    %v1884 = vpop.f32.mrf.mxu0
    %v1885 = vadd.f32 0.0, %v1884
    %1886 = vdwg.mxu0
    %1887 = vmatpush.msra.mxu0 %v581
    %1888 = vmatpush.msra.mxu0 %v573
    %1889 = vmatpush.msra.mxu0 %v565
    %1890 = vmatpush.msra.mxu0 %v557
    %1891 = vmatpush.msra.mxu0 %v549
    %1892 = vmatpush.msra.mxu0 %v541
    %1893 = vmatpush.msra.mxu0 %v533
    %1894 = vmatpush.msra.mxu0 %v525
    %1895 = vmatpush.msra.mxu0 %v517
    %1896 = vmatpush.msra.mxu0 %v509
    %1897 = vmatpush.msra.mxu0 %v501
    %1898 = vmatpush.msra.mxu0 %v493
    %1899 = vmatpush.msra.mxu0 %v485
    %1900 = vmatpush.msra.mxu0 %v477
    %1901 = vmatpush.msra.mxu0 %v469
    %1902 = vmatpush.msra.mxu0 %v461
    %1903 = vmatmul.f32.gmra.mxu0 %v1735
    %v1904 = vpop.f32.mrf.mxu0
    %v1905 = vadd.f32 0.0, %v1904
    %1906 = vdwg.mxu0
    %1907 = vmatpush.msra.mxu0 %v582
    %1908 = vmatpush.msra.mxu0 %v574
    %1909 = vmatpush.msra.mxu0 %v566
    %1910 = vmatpush.msra.mxu0 %v558
    %1911 = vmatpush.msra.mxu0 %v550
    %1912 = vmatpush.msra.mxu0 %v542
    %1913 = vmatpush.msra.mxu0 %v534
    %1914 = vmatpush.msra.mxu0 %v526
    %1915 = vmatpush.msra.mxu0 %v518
    %1916 = vmatpush.msra.mxu0 %v510
    %1917 = vmatpush.msra.mxu0 %v502
    %1918 = vmatpush.msra.mxu0 %v494
    %1919 = vmatpush.msra.mxu0 %v486
    %1920 = vmatpush.msra.mxu0 %v478
    %1921 = vmatpush.msra.mxu0 %v470
    %1922 = vmatpush.msra.mxu0 %v462
    %1923 = vmatmul.f32.gmra.mxu0 %v1735
    %v1924 = vpop.f32.mrf.mxu0
    %v1925 = vadd.f32 0.0, %v1924
    %1926 = vdwg.mxu0
    %1927 = vmatpush.msra.mxu0 %v583
    %1928 = vmatpush.msra.mxu0 %v575
    %1929 = vmatpush.msra.mxu0 %v567
    %1930 = vmatpush.msra.mxu0 %v559
    %1931 = vmatpush.msra.mxu0 %v551
    %1932 = vmatpush.msra.mxu0 %v543
    %1933 = vmatpush.msra.mxu0 %v535
    %1934 = vmatpush.msra.mxu0 %v527
    %1935 = vmatpush.msra.mxu0 %v519
    %1936 = vmatpush.msra.mxu0 %v511
    %1937 = vmatpush.msra.mxu0 %v503
    %1938 = vmatpush.msra.mxu0 %v495
    %1939 = vmatpush.msra.mxu0 %v487
    %1940 = vmatpush.msra.mxu0 %v479
    %1941 = vmatpush.msra.mxu0 %v471
    %1942 = vmatpush.msra.mxu0 %v463
    %1943 = vmatmul.f32.gmra.mxu0 %v1735
    %v1944 = vpop.f32.mrf.mxu0
    %v1945 = vadd.f32 0.0, %v1944
    %1946 = vdwg.mxu0
    %1947 = vmatpush.msra.mxu0 %v584
    %1948 = vmatpush.msra.mxu0 %v576
    %1949 = vmatpush.msra.mxu0 %v568
    %1950 = vmatpush.msra.mxu0 %v560
    %1951 = vmatpush.msra.mxu0 %v552
    %1952 = vmatpush.msra.mxu0 %v544
    %1953 = vmatpush.msra.mxu0 %v536
    %1954 = vmatpush.msra.mxu0 %v528
    %1955 = vmatpush.msra.mxu0 %v520
    %1956 = vmatpush.msra.mxu0 %v512
    %1957 = vmatpush.msra.mxu0 %v504
    %1958 = vmatpush.msra.mxu0 %v496
    %1959 = vmatpush.msra.mxu0 %v488
    %1960 = vmatpush.msra.mxu0 %v480
    %1961 = vmatpush.msra.mxu0 %v472
    %1962 = vmatpush.msra.mxu0 %v464
    %1963 = vmatmul.f32.gmra.mxu0 %v1735
    %v1964 = vpop.f32.mrf.mxu0
    %v1965 = vadd.f32 0.0, %v1964
    %1966 = vdwg.mxu0
    %1967 = vmatpush.msra.mxu0 %v805
    %1968 = vmatpush.msra.mxu0 %v801
    %1969 = vmatpush.msra.mxu0 %v797
    %1970 = vmatpush.msra.mxu0 %v793
    %1971 = vmatpush.msra.mxu0 %v789
    %1972 = vmatpush.msra.mxu0 %v785
    %1973 = vmatpush.msra.mxu0 %v781
    %1974 = vmatpush.msra.mxu0 %v777
    %1975 = vmatpush.msra.mxu0 %v773
    %1976 = vmatpush.msra.mxu0 %v769
    %1977 = vmatpush.msra.mxu0 %v765
    %1978 = vmatpush.msra.mxu0 %v761
    %1979 = vmatpush.msra.mxu0 %v757
    %1980 = vmatpush.msra.mxu0 %v753
    %1981 = vmatpush.msra.mxu0 %v749
    %1982 = vmatpush.msra.mxu0 %v745
    %1983 = vmatmul.f32.gmra.mxu0 %v1806
    %v1984 = vpop.f32.mrf.mxu0
    %v1985 = vadd.f32 0.0, %v1984
    %1986 = vdwg.mxu0
    %1987 = vmatpush.msra.mxu0 %v806
    %1988 = vmatpush.msra.mxu0 %v802
    %1989 = vmatpush.msra.mxu0 %v798
    %1990 = vmatpush.msra.mxu0 %v794
    %1991 = vmatpush.msra.mxu0 %v790
    %1992 = vmatpush.msra.mxu0 %v786
    %1993 = vmatpush.msra.mxu0 %v782
    %1994 = vmatpush.msra.mxu0 %v778
    %1995 = vmatpush.msra.mxu0 %v774
    %1996 = vmatpush.msra.mxu0 %v770
    %1997 = vmatpush.msra.mxu0 %v766
    %1998 = vmatpush.msra.mxu0 %v762
    %1999 = vmatpush.msra.mxu0 %v758
    %2000 = vmatpush.msra.mxu0 %v754
    %2001 = vmatpush.msra.mxu0 %v750
    %2002 = vmatpush.msra.mxu0 %v746
    %2003 = vmatmul.f32.gmra.mxu0 %v1806
    %v2004 = vpop.f32.mrf.mxu0
    %v2005 = vadd.f32 0.0, %v2004
    %2006 = vdwg.mxu0
    %2007 = vmatpush.msra.mxu0 %v807
    %2008 = vmatpush.msra.mxu0 %v803
    %2009 = vmatpush.msra.mxu0 %v799
    %2010 = vmatpush.msra.mxu0 %v795
    %2011 = vmatpush.msra.mxu0 %v791
    %2012 = vmatpush.msra.mxu0 %v787
    %2013 = vmatpush.msra.mxu0 %v783
    %2014 = vmatpush.msra.mxu0 %v779
    %2015 = vmatpush.msra.mxu0 %v775
    %2016 = vmatpush.msra.mxu0 %v771
    %2017 = vmatpush.msra.mxu0 %v767
    %2018 = vmatpush.msra.mxu0 %v763
    %2019 = vmatpush.msra.mxu0 %v759
    %2020 = vmatpush.msra.mxu0 %v755
    %2021 = vmatpush.msra.mxu0 %v751
    %2022 = vmatpush.msra.mxu0 %v747
    %2023 = vmatmul.f32.gmra.mxu0 %v1806
    %v2024 = vpop.f32.mrf.mxu0
    %v2025 = vadd.f32 0.0, %v2024
    %2026 = vdwg.mxu0
    %2027 = vmatpush.msra.mxu0 %v808
    %2028 = vmatpush.msra.mxu0 %v804
    %2029 = vmatpush.msra.mxu0 %v800
    %2030 = vmatpush.msra.mxu0 %v796
    %2031 = vmatpush.msra.mxu0 %v792
    %2032 = vmatpush.msra.mxu0 %v788
    %2033 = vmatpush.msra.mxu0 %v784
    %2034 = vmatpush.msra.mxu0 %v780
    %2035 = vmatpush.msra.mxu0 %v776
    %2036 = vmatpush.msra.mxu0 %v772
    %2037 = vmatpush.msra.mxu0 %v768
    %2038 = vmatpush.msra.mxu0 %v764
    %2039 = vmatpush.msra.mxu0 %v760
    %2040 = vmatpush.msra.mxu0 %v756
    %2041 = vmatpush.msra.mxu0 %v752
    %2042 = vmatpush.msra.mxu0 %v748
    %2043 = vmatmul.f32.gmra.mxu0 %v1806
    %v2044 = vpop.f32.mrf.mxu0
    %v2045 = vadd.f32 0.0, %v2044
    %2046 = vdwg.mxu0
    %s2047 = scalar_lea.vmem [#allocation2], 128
    %v2048 = vld [vmem:[%s2047] sm:$0xff]
    %v2049 = vld [vmem:[%s2047 + $0x8] sm:$0xff]
    %v2050 = vld [vmem:[%s2047 + $0x10] sm:$0xff]
    %v2051 = vld [vmem:[%s2047 + $0x18] sm:$0xff]
    %v2052 = vadd.f32 %v1825, %v2048
    %v2053 = vadd.f32 %v1845, %v2049
    %v2054 = vadd.f32 %v1865, %v2050
    %v2055 = vadd.f32 %v1885, %v2051
    %v2056 = vxor.u32 %v2052, 2147483648
    %v2057 = vxor.u32 %v2053, 2147483648
    %v2058 = vxor.u32 %v2054, 2147483648
    %v2059 = vmul.f32 %v2056, 1.442695
    %v2060 = vpow.pop %v2059
    %v2061 = vmul.f32 %v2057, 1.442695
    %v2062 = vpow.pop %v2061
    %v2063 = vmul.f32 %v2058, 1.442695
    %v2064 = vpow.pop %v2063
    %v2065 = vadd.f32 %v2060, 1.0
    %v2066 = vadd.f32 %v2062, 1.0
    %v2067 = vadd.f32 %v2064, 1.0
    %v2068 = vrcp.pop %v2065
    %v2069 = vmul.f32 %v2065, %v2068
    %v2070 = vsub.f32 1.0, %v2069
    %v2071 = vmul.f32 %v2068, %v2070
    %v2072 = vadd.f32 %v2068, %v2071
    %vm2073 = vweird.f32 %v2065
    %vm2074 = vweird.f32 %v2068
    %vm2075 = vmor %vm2073, %vm2074
    %v2076 = vsel %vm2075, %v2068, %v2072
    %v2077 = vand.u32 2147483647, %v2065
    %vm2078 = vcmp.eq.f32.partialorder %v2077, 8.507059e+37
    %v2079 = vand.u32 %v2065, 2147483648
    %v2080 = vor.u32 1.1754944e-38, %v2079
    %v2081 = vsel %vm2078, %v2080, %v2076
    %v2082 = vmul.f32 1.0, %v2081
    %v2083 = vrcp.pop %v2066
    %v2084 = vmul.f32 %v2066, %v2083
    %v2085 = vsub.f32 1.0, %v2084
    %v2086 = vmul.f32 %v2083, %v2085
    %v2087 = vadd.f32 %v2083, %v2086
    %vm2088 = vweird.f32 %v2066
    %vm2089 = vweird.f32 %v2083
    %vm2090 = vmor %vm2088, %vm2089
    %v2091 = vsel %vm2090, %v2083, %v2087
    %v2092 = vand.u32 2147483647, %v2066
    %vm2093 = vcmp.eq.f32.partialorder %v2092, 8.507059e+37
    %v2094 = vand.u32 %v2066, 2147483648
    %v2095 = vor.u32 1.1754944e-38, %v2094
    %v2096 = vsel %vm2093, %v2095, %v2091
    %v2097 = vmul.f32 1.0, %v2096
    %v2098 = vrcp.pop %v2067
    %v2099 = vmul.f32 %v2067, %v2098
    %v2100 = vsub.f32 1.0, %v2099
    %v2101 = vmul.f32 %v2098, %v2100
    %v2102 = vadd.f32 %v2098, %v2101
    %vm2103 = vweird.f32 %v2067
    %vm2104 = vweird.f32 %v2098
    %vm2105 = vmor %vm2103, %vm2104
    %v2106 = vsel %vm2105, %v2098, %v2102
    %v2107 = vand.u32 2147483647, %v2067
    %vm2108 = vcmp.eq.f32.partialorder %v2107, 8.507059e+37
    %v2109 = vand.u32 %v2067, 2147483648
    %v2110 = vor.u32 1.1754944e-38, %v2109
    %v2111 = vsel %vm2108, %v2110, %v2106
    %v2112 = vmul.f32 1.0, %v2111
    %v2113 = vtanh.pop %v2055
    %v2114 = vmul.f32 %v2097, %v1733
    %v2115 = vmul.f32 %v2082, %v2113
    %v2116 = vadd.f32 %v2114, %v2115
    %v2117 = vtanh.pop %v2116
    %v2118 = vmul.f32 %v2112, %v2117
    %v2119 = vadd.f32 %v1905, %v1985
    %v2120 = vadd.f32 %v1925, %v2005
    %v2121 = vadd.f32 %v1945, %v2025
    %v2122 = vadd.f32 %v1965, %v2045
    %v2123 = vadd.f32 %v2119, %v966
    %v2124 = vadd.f32 %v2120, %v967
    %v2125 = vadd.f32 %v2121, %v968
    %v2126 = vadd.f32 %v2122, %v969
    %v2127 = vxor.u32 %v2123, 2147483648
    %v2128 = vxor.u32 %v2124, 2147483648
    %v2129 = vxor.u32 %v2125, 2147483648
    %v2130 = vmul.f32 %v2127, 1.442695
    %v2131 = vpow.pop %v2130
    %v2132 = vmul.f32 %v2128, 1.442695
    %v2133 = vpow.pop %v2132
    %v2134 = vmul.f32 %v2129, 1.442695
    %v2135 = vpow.pop %v2134
    %v2136 = vadd.f32 %v2131, 1.0
    %v2137 = vadd.f32 %v2133, 1.0
    %v2138 = vadd.f32 %v2135, 1.0
    %v2139 = vrcp.pop %v2136
    %v2140 = vmul.f32 %v2136, %v2139
    %v2141 = vsub.f32 1.0, %v2140
    %v2142 = vmul.f32 %v2139, %v2141
    %v2143 = vadd.f32 %v2139, %v2142
    %vm2144 = vweird.f32 %v2136
    %vm2145 = vweird.f32 %v2139
    %vm2146 = vmor %vm2144, %vm2145
    %v2147 = vsel %vm2146, %v2139, %v2143
    %v2148 = vand.u32 2147483647, %v2136
    %vm2149 = vcmp.eq.f32.partialorder %v2148, 8.507059e+37
    %v2150 = vand.u32 %v2136, 2147483648
    %v2151 = vor.u32 1.1754944e-38, %v2150
    %v2152 = vsel %vm2149, %v2151, %v2147
    %v2153 = vmul.f32 1.0, %v2152
    %v2154 = vrcp.pop %v2137
    %v2155 = vmul.f32 %v2137, %v2154
    %v2156 = vsub.f32 1.0, %v2155
    %v2157 = vmul.f32 %v2154, %v2156
    %v2158 = vadd.f32 %v2154, %v2157
    %vm2159 = vweird.f32 %v2137
    %vm2160 = vweird.f32 %v2154
    %vm2161 = vmor %vm2159, %vm2160
    %v2162 = vsel %vm2161, %v2154, %v2158
    %v2163 = vand.u32 2147483647, %v2137
    %vm2164 = vcmp.eq.f32.partialorder %v2163, 8.507059e+37
    %v2165 = vand.u32 %v2137, 2147483648
    %v2166 = vor.u32 1.1754944e-38, %v2165
    %v2167 = vsel %vm2164, %v2166, %v2162
    %v2168 = vmul.f32 1.0, %v2167
    %v2169 = vrcp.pop %v2138
    %v2170 = vmul.f32 %v2138, %v2169
    %v2171 = vsub.f32 1.0, %v2170
    %v2172 = vmul.f32 %v2169, %v2171
    %v2173 = vadd.f32 %v2169, %v2172
    %vm2174 = vweird.f32 %v2138
    %vm2175 = vweird.f32 %v2169
    %vm2176 = vmor %vm2174, %vm2175
    %v2177 = vsel %vm2176, %v2169, %v2173
    %v2178 = vand.u32 2147483647, %v2138
    %vm2179 = vcmp.eq.f32.partialorder %v2178, 8.507059e+37
    %v2180 = vand.u32 %v2138, 2147483648
    %v2181 = vor.u32 1.1754944e-38, %v2180
    %v2182 = vsel %vm2179, %v2181, %v2177
    %v2183 = vmul.f32 1.0, %v2182
    %v2184 = vtanh.pop %v2126
    %v2185 = vmul.f32 %v2168, %v1804
    %v2186 = vmul.f32 %v2153, %v2184
    %v2187 = vadd.f32 %v2185, %v2186
    %v2188 = vtanh.pop %v2187
    %v2189 = vmul.f32 %v2183, %v2188
    %2190 = vmatpush.msra.mxu0 %v577
    %2191 = vmatpush.msra.mxu0 %v569
    %2192 = vmatpush.msra.mxu0 %v561
    %2193 = vmatpush.msra.mxu0 %v553
    %2194 = vmatpush.msra.mxu0 %v545
    %2195 = vmatpush.msra.mxu0 %v537
    %2196 = vmatpush.msra.mxu0 %v529
    %2197 = vmatpush.msra.mxu0 %v521
    %2198 = vmatpush.msra.mxu0 %v513
    %2199 = vmatpush.msra.mxu0 %v505
    %2200 = vmatpush.msra.mxu0 %v497
    %2201 = vmatpush.msra.mxu0 %v489
    %2202 = vmatpush.msra.mxu0 %v481
    %2203 = vmatpush.msra.mxu0 %v473
    %2204 = vmatpush.msra.mxu0 %v465
    %2205 = vmatpush.msra.mxu0 %v457
    %2206 = vmatmul.f32.gmra.mxu0 %v2118
    %v2207 = vpop.f32.mrf.mxu0
    %v2208 = vadd.f32 0.0, %v2207
    %2209 = vdwg.mxu0
    %2210 = vmatpush.msra.mxu0 %v578
    %2211 = vmatpush.msra.mxu0 %v570
    %2212 = vmatpush.msra.mxu0 %v562
    %2213 = vmatpush.msra.mxu0 %v554
    %2214 = vmatpush.msra.mxu0 %v546
    %2215 = vmatpush.msra.mxu0 %v538
    %2216 = vmatpush.msra.mxu0 %v530
    %2217 = vmatpush.msra.mxu0 %v522
    %2218 = vmatpush.msra.mxu0 %v514
    %2219 = vmatpush.msra.mxu0 %v506
    %2220 = vmatpush.msra.mxu0 %v498
    %2221 = vmatpush.msra.mxu0 %v490
    %2222 = vmatpush.msra.mxu0 %v482
    %2223 = vmatpush.msra.mxu0 %v474
    %2224 = vmatpush.msra.mxu0 %v466
    %2225 = vmatpush.msra.mxu0 %v458
    %2226 = vmatmul.f32.gmra.mxu0 %v2118
    %v2227 = vpop.f32.mrf.mxu0
    %v2228 = vadd.f32 0.0, %v2227
    %2229 = vdwg.mxu0
    %2230 = vmatpush.msra.mxu0 %v579
    %2231 = vmatpush.msra.mxu0 %v571
    %2232 = vmatpush.msra.mxu0 %v563
    %2233 = vmatpush.msra.mxu0 %v555
    %2234 = vmatpush.msra.mxu0 %v547
    %2235 = vmatpush.msra.mxu0 %v539
    %2236 = vmatpush.msra.mxu0 %v531
    %2237 = vmatpush.msra.mxu0 %v523
    %2238 = vmatpush.msra.mxu0 %v515
    %2239 = vmatpush.msra.mxu0 %v507
    %2240 = vmatpush.msra.mxu0 %v499
    %2241 = vmatpush.msra.mxu0 %v491
    %2242 = vmatpush.msra.mxu0 %v483
    %2243 = vmatpush.msra.mxu0 %v475
    %2244 = vmatpush.msra.mxu0 %v467
    %2245 = vmatpush.msra.mxu0 %v459
    %2246 = vmatmul.f32.gmra.mxu0 %v2118
    %v2247 = vpop.f32.mrf.mxu0
    %v2248 = vadd.f32 0.0, %v2247
    %2249 = vdwg.mxu0
    %2250 = vmatpush.msra.mxu0 %v580
    %2251 = vmatpush.msra.mxu0 %v572
    %2252 = vmatpush.msra.mxu0 %v564
    %2253 = vmatpush.msra.mxu0 %v556
    %2254 = vmatpush.msra.mxu0 %v548
    %2255 = vmatpush.msra.mxu0 %v540
    %2256 = vmatpush.msra.mxu0 %v532
    %2257 = vmatpush.msra.mxu0 %v524
    %2258 = vmatpush.msra.mxu0 %v516
    %2259 = vmatpush.msra.mxu0 %v508
    %2260 = vmatpush.msra.mxu0 %v500
    %2261 = vmatpush.msra.mxu0 %v492
    %2262 = vmatpush.msra.mxu0 %v484
    %2263 = vmatpush.msra.mxu0 %v476
    %2264 = vmatpush.msra.mxu0 %v468
    %2265 = vmatpush.msra.mxu0 %v460
    %2266 = vmatmul.f32.gmra.mxu0 %v2118
    %v2267 = vpop.f32.mrf.mxu0
    %v2268 = vadd.f32 0.0, %v2267
    %2269 = vdwg.mxu0
    %2270 = vmatpush.msra.mxu0 %v581
    %2271 = vmatpush.msra.mxu0 %v573
    %2272 = vmatpush.msra.mxu0 %v565
    %2273 = vmatpush.msra.mxu0 %v557
    %2274 = vmatpush.msra.mxu0 %v549
    %2275 = vmatpush.msra.mxu0 %v541
    %2276 = vmatpush.msra.mxu0 %v533
    %2277 = vmatpush.msra.mxu0 %v525
    %2278 = vmatpush.msra.mxu0 %v517
    %2279 = vmatpush.msra.mxu0 %v509
    %2280 = vmatpush.msra.mxu0 %v501
    %2281 = vmatpush.msra.mxu0 %v493
    %2282 = vmatpush.msra.mxu0 %v485
    %2283 = vmatpush.msra.mxu0 %v477
    %2284 = vmatpush.msra.mxu0 %v469
    %2285 = vmatpush.msra.mxu0 %v461
    %2286 = vmatmul.f32.gmra.mxu0 %v2118
    %v2287 = vpop.f32.mrf.mxu0
    %v2288 = vadd.f32 0.0, %v2287
    %2289 = vdwg.mxu0
    %2290 = vmatpush.msra.mxu0 %v582
    %2291 = vmatpush.msra.mxu0 %v574
    %2292 = vmatpush.msra.mxu0 %v566
    %2293 = vmatpush.msra.mxu0 %v558
    %2294 = vmatpush.msra.mxu0 %v550
    %2295 = vmatpush.msra.mxu0 %v542
    %2296 = vmatpush.msra.mxu0 %v534
    %2297 = vmatpush.msra.mxu0 %v526
    %2298 = vmatpush.msra.mxu0 %v518
    %2299 = vmatpush.msra.mxu0 %v510
    %2300 = vmatpush.msra.mxu0 %v502
    %2301 = vmatpush.msra.mxu0 %v494
    %2302 = vmatpush.msra.mxu0 %v486
    %2303 = vmatpush.msra.mxu0 %v478
    %2304 = vmatpush.msra.mxu0 %v470
    %2305 = vmatpush.msra.mxu0 %v462
    %2306 = vmatmul.f32.gmra.mxu0 %v2118
    %v2307 = vpop.f32.mrf.mxu0
    %v2308 = vadd.f32 0.0, %v2307
    %2309 = vdwg.mxu0
    %2310 = vmatpush.msra.mxu0 %v583
    %2311 = vmatpush.msra.mxu0 %v575
    %2312 = vmatpush.msra.mxu0 %v567
    %2313 = vmatpush.msra.mxu0 %v559
    %2314 = vmatpush.msra.mxu0 %v551
    %2315 = vmatpush.msra.mxu0 %v543
    %2316 = vmatpush.msra.mxu0 %v535
    %2317 = vmatpush.msra.mxu0 %v527
    %2318 = vmatpush.msra.mxu0 %v519
    %2319 = vmatpush.msra.mxu0 %v511
    %2320 = vmatpush.msra.mxu0 %v503
    %2321 = vmatpush.msra.mxu0 %v495
    %2322 = vmatpush.msra.mxu0 %v487
    %2323 = vmatpush.msra.mxu0 %v479
    %2324 = vmatpush.msra.mxu0 %v471
    %2325 = vmatpush.msra.mxu0 %v463
    %2326 = vmatmul.f32.gmra.mxu0 %v2118
    %v2327 = vpop.f32.mrf.mxu0
    %v2328 = vadd.f32 0.0, %v2327
    %2329 = vdwg.mxu0
    %2330 = vmatpush.msra.mxu0 %v584
    %2331 = vmatpush.msra.mxu0 %v576
    %2332 = vmatpush.msra.mxu0 %v568
    %2333 = vmatpush.msra.mxu0 %v560
    %2334 = vmatpush.msra.mxu0 %v552
    %2335 = vmatpush.msra.mxu0 %v544
    %2336 = vmatpush.msra.mxu0 %v536
    %2337 = vmatpush.msra.mxu0 %v528
    %2338 = vmatpush.msra.mxu0 %v520
    %2339 = vmatpush.msra.mxu0 %v512
    %2340 = vmatpush.msra.mxu0 %v504
    %2341 = vmatpush.msra.mxu0 %v496
    %2342 = vmatpush.msra.mxu0 %v488
    %2343 = vmatpush.msra.mxu0 %v480
    %2344 = vmatpush.msra.mxu0 %v472
    %2345 = vmatpush.msra.mxu0 %v464
    %2346 = vmatmul.f32.gmra.mxu0 %v2118
    %v2347 = vpop.f32.mrf.mxu0
    %v2348 = vadd.f32 0.0, %v2347
    %2349 = vdwg.mxu0
    %2350 = vmatpush.msra.mxu0 %v805
    %2351 = vmatpush.msra.mxu0 %v801
    %2352 = vmatpush.msra.mxu0 %v797
    %2353 = vmatpush.msra.mxu0 %v793
    %2354 = vmatpush.msra.mxu0 %v789
    %2355 = vmatpush.msra.mxu0 %v785
    %2356 = vmatpush.msra.mxu0 %v781
    %2357 = vmatpush.msra.mxu0 %v777
    %2358 = vmatpush.msra.mxu0 %v773
    %2359 = vmatpush.msra.mxu0 %v769
    %2360 = vmatpush.msra.mxu0 %v765
    %2361 = vmatpush.msra.mxu0 %v761
    %2362 = vmatpush.msra.mxu0 %v757
    %2363 = vmatpush.msra.mxu0 %v753
    %2364 = vmatpush.msra.mxu0 %v749
    %2365 = vmatpush.msra.mxu0 %v745
    %2366 = vmatmul.f32.gmra.mxu0 %v2189
    %v2367 = vpop.f32.mrf.mxu0
    %v2368 = vadd.f32 0.0, %v2367
    %2369 = vdwg.mxu0
    %2370 = vmatpush.msra.mxu0 %v806
    %2371 = vmatpush.msra.mxu0 %v802
    %2372 = vmatpush.msra.mxu0 %v798
    %2373 = vmatpush.msra.mxu0 %v794
    %2374 = vmatpush.msra.mxu0 %v790
    %2375 = vmatpush.msra.mxu0 %v786
    %2376 = vmatpush.msra.mxu0 %v782
    %2377 = vmatpush.msra.mxu0 %v778
    %2378 = vmatpush.msra.mxu0 %v774
    %2379 = vmatpush.msra.mxu0 %v770
    %2380 = vmatpush.msra.mxu0 %v766
    %2381 = vmatpush.msra.mxu0 %v762
    %2382 = vmatpush.msra.mxu0 %v758
    %2383 = vmatpush.msra.mxu0 %v754
    %2384 = vmatpush.msra.mxu0 %v750
    %2385 = vmatpush.msra.mxu0 %v746
    %2386 = vmatmul.f32.gmra.mxu0 %v2189
    %v2387 = vpop.f32.mrf.mxu0
    %v2388 = vadd.f32 0.0, %v2387
    %2389 = vdwg.mxu0
    %2390 = vmatpush.msra.mxu0 %v807
    %2391 = vmatpush.msra.mxu0 %v803
    %2392 = vmatpush.msra.mxu0 %v799
    %2393 = vmatpush.msra.mxu0 %v795
    %2394 = vmatpush.msra.mxu0 %v791
    %2395 = vmatpush.msra.mxu0 %v787
    %2396 = vmatpush.msra.mxu0 %v783
    %2397 = vmatpush.msra.mxu0 %v779
    %2398 = vmatpush.msra.mxu0 %v775
    %2399 = vmatpush.msra.mxu0 %v771
    %2400 = vmatpush.msra.mxu0 %v767
    %2401 = vmatpush.msra.mxu0 %v763
    %2402 = vmatpush.msra.mxu0 %v759
    %2403 = vmatpush.msra.mxu0 %v755
    %2404 = vmatpush.msra.mxu0 %v751
    %2405 = vmatpush.msra.mxu0 %v747
    %2406 = vmatmul.f32.gmra.mxu0 %v2189
    %v2407 = vpop.f32.mrf.mxu0
    %v2408 = vadd.f32 0.0, %v2407
    %2409 = vdwg.mxu0
    %2410 = vmatpush.msra.mxu0 %v808
    %2411 = vmatpush.msra.mxu0 %v804
    %2412 = vmatpush.msra.mxu0 %v800
    %2413 = vmatpush.msra.mxu0 %v796
    %2414 = vmatpush.msra.mxu0 %v792
    %2415 = vmatpush.msra.mxu0 %v788
    %2416 = vmatpush.msra.mxu0 %v784
    %2417 = vmatpush.msra.mxu0 %v780
    %2418 = vmatpush.msra.mxu0 %v776
    %2419 = vmatpush.msra.mxu0 %v772
    %2420 = vmatpush.msra.mxu0 %v768
    %2421 = vmatpush.msra.mxu0 %v764
    %2422 = vmatpush.msra.mxu0 %v760
    %2423 = vmatpush.msra.mxu0 %v756
    %2424 = vmatpush.msra.mxu0 %v752
    %2425 = vmatpush.msra.mxu0 %v748
    %2426 = vmatmul.f32.gmra.mxu0 %v2189
    %v2427 = vpop.f32.mrf.mxu0
    %v2428 = vadd.f32 0.0, %v2427
    %2429 = vdwg.mxu0
    %s2430 = scalar_lea.vmem [#allocation2], 160
    %v2431 = vld [vmem:[%s2430] sm:$0xff]
    %v2432 = vld [vmem:[%s2430 + $0x8] sm:$0xff]
    %v2433 = vld [vmem:[%s2430 + $0x10] sm:$0xff]
    %v2434 = vld [vmem:[%s2430 + $0x18] sm:$0xff]
    %v2435 = vadd.f32 %v2208, %v2431
    %v2436 = vadd.f32 %v2228, %v2432
    %v2437 = vadd.f32 %v2248, %v2433
    %v2438 = vadd.f32 %v2268, %v2434
    %v2439 = vxor.u32 %v2435, 2147483648
    %v2440 = vxor.u32 %v2436, 2147483648
    %v2441 = vxor.u32 %v2437, 2147483648
    %v2442 = vmul.f32 %v2439, 1.442695
    %v2443 = vpow.pop %v2442
    %v2444 = vmul.f32 %v2440, 1.442695
    %v2445 = vpow.pop %v2444
    %v2446 = vmul.f32 %v2441, 1.442695
    %v2447 = vpow.pop %v2446
    %v2448 = vadd.f32 %v2443, 1.0
    %v2449 = vadd.f32 %v2445, 1.0
    %v2450 = vadd.f32 %v2447, 1.0
    %v2451 = vrcp.pop %v2448
    %v2452 = vmul.f32 %v2448, %v2451
    %v2453 = vsub.f32 1.0, %v2452
    %v2454 = vmul.f32 %v2451, %v2453
    %v2455 = vadd.f32 %v2451, %v2454
    %vm2456 = vweird.f32 %v2448
    %vm2457 = vweird.f32 %v2451
    %vm2458 = vmor %vm2456, %vm2457
    %v2459 = vsel %vm2458, %v2451, %v2455
    %v2460 = vand.u32 2147483647, %v2448
    %vm2461 = vcmp.eq.f32.partialorder %v2460, 8.507059e+37
    %v2462 = vand.u32 %v2448, 2147483648
    %v2463 = vor.u32 1.1754944e-38, %v2462
    %v2464 = vsel %vm2461, %v2463, %v2459
    %v2465 = vmul.f32 1.0, %v2464
    %v2466 = vrcp.pop %v2449
    %v2467 = vmul.f32 %v2449, %v2466
    %v2468 = vsub.f32 1.0, %v2467
    %v2469 = vmul.f32 %v2466, %v2468
    %v2470 = vadd.f32 %v2466, %v2469
    %vm2471 = vweird.f32 %v2449
    %vm2472 = vweird.f32 %v2466
    %vm2473 = vmor %vm2471, %vm2472
    %v2474 = vsel %vm2473, %v2466, %v2470
    %v2475 = vand.u32 2147483647, %v2449
    %vm2476 = vcmp.eq.f32.partialorder %v2475, 8.507059e+37
    %v2477 = vand.u32 %v2449, 2147483648
    %v2478 = vor.u32 1.1754944e-38, %v2477
    %v2479 = vsel %vm2476, %v2478, %v2474
    %v2480 = vmul.f32 1.0, %v2479
    %v2481 = vrcp.pop %v2450
    %v2482 = vmul.f32 %v2450, %v2481
    %v2483 = vsub.f32 1.0, %v2482
    %v2484 = vmul.f32 %v2481, %v2483
    %v2485 = vadd.f32 %v2481, %v2484
    %vm2486 = vweird.f32 %v2450
    %vm2487 = vweird.f32 %v2481
    %vm2488 = vmor %vm2486, %vm2487
    %v2489 = vsel %vm2488, %v2481, %v2485
    %v2490 = vand.u32 2147483647, %v2450
    %vm2491 = vcmp.eq.f32.partialorder %v2490, 8.507059e+37
    %v2492 = vand.u32 %v2450, 2147483648
    %v2493 = vor.u32 1.1754944e-38, %v2492
    %v2494 = vsel %vm2491, %v2493, %v2489
    %v2495 = vmul.f32 1.0, %v2494
    %v2496 = vtanh.pop %v2438
    %v2497 = vmul.f32 %v2480, %v2116
    %v2498 = vmul.f32 %v2465, %v2496
    %v2499 = vadd.f32 %v2497, %v2498
    %v2500 = vtanh.pop %v2499
    %v2501 = vmul.f32 %v2495, %v2500
    %v2502 = vadd.f32 %v2288, %v2368
    %v2503 = vadd.f32 %v2308, %v2388
    %v2504 = vadd.f32 %v2328, %v2408
    %v2505 = vadd.f32 %v2348, %v2428
    %v2506 = vadd.f32 %v2502, %v966
    %v2507 = vadd.f32 %v2503, %v967
    %v2508 = vadd.f32 %v2504, %v968
    %v2509 = vadd.f32 %v2505, %v969
    %v2510 = vxor.u32 %v2506, 2147483648
    %v2511 = vxor.u32 %v2507, 2147483648
    %v2512 = vxor.u32 %v2508, 2147483648
    %v2513 = vmul.f32 %v2510, 1.442695
    %v2514 = vpow.pop %v2513
    %v2515 = vmul.f32 %v2511, 1.442695
    %v2516 = vpow.pop %v2515
    %v2517 = vmul.f32 %v2512, 1.442695
    %v2518 = vpow.pop %v2517
    %v2519 = vadd.f32 %v2514, 1.0
    %v2520 = vadd.f32 %v2516, 1.0
    %v2521 = vadd.f32 %v2518, 1.0
    %v2522 = vrcp.pop %v2519
    %v2523 = vmul.f32 %v2519, %v2522
    %v2524 = vsub.f32 1.0, %v2523
    %v2525 = vmul.f32 %v2522, %v2524
    %v2526 = vadd.f32 %v2522, %v2525
    %vm2527 = vweird.f32 %v2519
    %vm2528 = vweird.f32 %v2522
    %vm2529 = vmor %vm2527, %vm2528
    %v2530 = vsel %vm2529, %v2522, %v2526
    %v2531 = vand.u32 2147483647, %v2519
    %vm2532 = vcmp.eq.f32.partialorder %v2531, 8.507059e+37
    %v2533 = vand.u32 %v2519, 2147483648
    %v2534 = vor.u32 1.1754944e-38, %v2533
    %v2535 = vsel %vm2532, %v2534, %v2530
    %v2536 = vmul.f32 1.0, %v2535
    %v2537 = vrcp.pop %v2520
    %v2538 = vmul.f32 %v2520, %v2537
    %v2539 = vsub.f32 1.0, %v2538
    %v2540 = vmul.f32 %v2537, %v2539
    %v2541 = vadd.f32 %v2537, %v2540
    %vm2542 = vweird.f32 %v2520
    %vm2543 = vweird.f32 %v2537
    %vm2544 = vmor %vm2542, %vm2543
    %v2545 = vsel %vm2544, %v2537, %v2541
    %v2546 = vand.u32 2147483647, %v2520
    %vm2547 = vcmp.eq.f32.partialorder %v2546, 8.507059e+37
    %v2548 = vand.u32 %v2520, 2147483648
    %v2549 = vor.u32 1.1754944e-38, %v2548
    %v2550 = vsel %vm2547, %v2549, %v2545
    %v2551 = vmul.f32 1.0, %v2550
    %v2552 = vrcp.pop %v2521
    %v2553 = vmul.f32 %v2521, %v2552
    %v2554 = vsub.f32 1.0, %v2553
    %v2555 = vmul.f32 %v2552, %v2554
    %v2556 = vadd.f32 %v2552, %v2555
    %vm2557 = vweird.f32 %v2521
    %vm2558 = vweird.f32 %v2552
    %vm2559 = vmor %vm2557, %vm2558
    %v2560 = vsel %vm2559, %v2552, %v2556
    %v2561 = vand.u32 2147483647, %v2521
    %vm2562 = vcmp.eq.f32.partialorder %v2561, 8.507059e+37
    %v2563 = vand.u32 %v2521, 2147483648
    %v2564 = vor.u32 1.1754944e-38, %v2563
    %v2565 = vsel %vm2562, %v2564, %v2560
    %v2566 = vmul.f32 1.0, %v2565
    %v2567 = vtanh.pop %v2509
    %v2568 = vmul.f32 %v2551, %v2187
    %v2569 = vmul.f32 %v2536, %v2567
    %v2570 = vadd.f32 %v2568, %v2569
    %v2571 = vtanh.pop %v2570
    %v2572 = vmul.f32 %v2566, %v2571
    %2573 = vmatpush.msra.mxu0 %v577
    %2574 = vmatpush.msra.mxu0 %v569
    %2575 = vmatpush.msra.mxu0 %v561
    %2576 = vmatpush.msra.mxu0 %v553
    %2577 = vmatpush.msra.mxu0 %v545
    %2578 = vmatpush.msra.mxu0 %v537
    %2579 = vmatpush.msra.mxu0 %v529
    %2580 = vmatpush.msra.mxu0 %v521
    %2581 = vmatpush.msra.mxu0 %v513
    %2582 = vmatpush.msra.mxu0 %v505
    %2583 = vmatpush.msra.mxu0 %v497
    %2584 = vmatpush.msra.mxu0 %v489
    %2585 = vmatpush.msra.mxu0 %v481
    %2586 = vmatpush.msra.mxu0 %v473
    %2587 = vmatpush.msra.mxu0 %v465
    %2588 = vmatpush.msra.mxu0 %v457
    %2589 = vmatmul.f32.gmra.mxu0 %v2501
    %v2590 = vpop.f32.mrf.mxu0
    %v2591 = vadd.f32 0.0, %v2590
    %2592 = vdwg.mxu0
    %2593 = vmatpush.msra.mxu0 %v578
    %2594 = vmatpush.msra.mxu0 %v570
    %2595 = vmatpush.msra.mxu0 %v562
    %2596 = vmatpush.msra.mxu0 %v554
    %2597 = vmatpush.msra.mxu0 %v546
    %2598 = vmatpush.msra.mxu0 %v538
    %2599 = vmatpush.msra.mxu0 %v530
    %2600 = vmatpush.msra.mxu0 %v522
    %2601 = vmatpush.msra.mxu0 %v514
    %2602 = vmatpush.msra.mxu0 %v506
    %2603 = vmatpush.msra.mxu0 %v498
    %2604 = vmatpush.msra.mxu0 %v490
    %2605 = vmatpush.msra.mxu0 %v482
    %2606 = vmatpush.msra.mxu0 %v474
    %2607 = vmatpush.msra.mxu0 %v466
    %2608 = vmatpush.msra.mxu0 %v458
    %2609 = vmatmul.f32.gmra.mxu0 %v2501
    %v2610 = vpop.f32.mrf.mxu0
    %v2611 = vadd.f32 0.0, %v2610
    %2612 = vdwg.mxu0
    %2613 = vmatpush.msra.mxu0 %v579
    %2614 = vmatpush.msra.mxu0 %v571
    %2615 = vmatpush.msra.mxu0 %v563
    %2616 = vmatpush.msra.mxu0 %v555
    %2617 = vmatpush.msra.mxu0 %v547
    %2618 = vmatpush.msra.mxu0 %v539
    %2619 = vmatpush.msra.mxu0 %v531
    %2620 = vmatpush.msra.mxu0 %v523
    %2621 = vmatpush.msra.mxu0 %v515
    %2622 = vmatpush.msra.mxu0 %v507
    %2623 = vmatpush.msra.mxu0 %v499
    %2624 = vmatpush.msra.mxu0 %v491
    %2625 = vmatpush.msra.mxu0 %v483
    %2626 = vmatpush.msra.mxu0 %v475
    %2627 = vmatpush.msra.mxu0 %v467
    %2628 = vmatpush.msra.mxu0 %v459
    %2629 = vmatmul.f32.gmra.mxu0 %v2501
    %v2630 = vpop.f32.mrf.mxu0
    %v2631 = vadd.f32 0.0, %v2630
    %2632 = vdwg.mxu0
    %2633 = vmatpush.msra.mxu0 %v580
    %2634 = vmatpush.msra.mxu0 %v572
    %2635 = vmatpush.msra.mxu0 %v564
    %2636 = vmatpush.msra.mxu0 %v556
    %2637 = vmatpush.msra.mxu0 %v548
    %2638 = vmatpush.msra.mxu0 %v540
    %2639 = vmatpush.msra.mxu0 %v532
    %2640 = vmatpush.msra.mxu0 %v524
    %2641 = vmatpush.msra.mxu0 %v516
    %2642 = vmatpush.msra.mxu0 %v508
    %2643 = vmatpush.msra.mxu0 %v500
    %2644 = vmatpush.msra.mxu0 %v492
    %2645 = vmatpush.msra.mxu0 %v484
    %2646 = vmatpush.msra.mxu0 %v476
    %2647 = vmatpush.msra.mxu0 %v468
    %2648 = vmatpush.msra.mxu0 %v460
    %2649 = vmatmul.f32.gmra.mxu0 %v2501
    %v2650 = vpop.f32.mrf.mxu0
    %v2651 = vadd.f32 0.0, %v2650
    %2652 = vdwg.mxu0
    %2653 = vmatpush.msra.mxu0 %v581
    %2654 = vmatpush.msra.mxu0 %v573
    %2655 = vmatpush.msra.mxu0 %v565
    %2656 = vmatpush.msra.mxu0 %v557
    %2657 = vmatpush.msra.mxu0 %v549
    %2658 = vmatpush.msra.mxu0 %v541
    %2659 = vmatpush.msra.mxu0 %v533
    %2660 = vmatpush.msra.mxu0 %v525
    %2661 = vmatpush.msra.mxu0 %v517
    %2662 = vmatpush.msra.mxu0 %v509
    %2663 = vmatpush.msra.mxu0 %v501
    %2664 = vmatpush.msra.mxu0 %v493
    %2665 = vmatpush.msra.mxu0 %v485
    %2666 = vmatpush.msra.mxu0 %v477
    %2667 = vmatpush.msra.mxu0 %v469
    %2668 = vmatpush.msra.mxu0 %v461
    %2669 = vmatmul.f32.gmra.mxu0 %v2501
    %v2670 = vpop.f32.mrf.mxu0
    %v2671 = vadd.f32 0.0, %v2670
    %2672 = vdwg.mxu0
    %2673 = vmatpush.msra.mxu0 %v582
    %2674 = vmatpush.msra.mxu0 %v574
    %2675 = vmatpush.msra.mxu0 %v566
    %2676 = vmatpush.msra.mxu0 %v558
    %2677 = vmatpush.msra.mxu0 %v550
    %2678 = vmatpush.msra.mxu0 %v542
    %2679 = vmatpush.msra.mxu0 %v534
    %2680 = vmatpush.msra.mxu0 %v526
    %2681 = vmatpush.msra.mxu0 %v518
    %2682 = vmatpush.msra.mxu0 %v510
    %2683 = vmatpush.msra.mxu0 %v502
    %2684 = vmatpush.msra.mxu0 %v494
    %2685 = vmatpush.msra.mxu0 %v486
    %2686 = vmatpush.msra.mxu0 %v478
    %2687 = vmatpush.msra.mxu0 %v470
    %2688 = vmatpush.msra.mxu0 %v462
    %2689 = vmatmul.f32.gmra.mxu0 %v2501
    %v2690 = vpop.f32.mrf.mxu0
    %v2691 = vadd.f32 0.0, %v2690
    %2692 = vdwg.mxu0
    %2693 = vmatpush.msra.mxu0 %v583
    %2694 = vmatpush.msra.mxu0 %v575
    %2695 = vmatpush.msra.mxu0 %v567
    %2696 = vmatpush.msra.mxu0 %v559
    %2697 = vmatpush.msra.mxu0 %v551
    %2698 = vmatpush.msra.mxu0 %v543
    %2699 = vmatpush.msra.mxu0 %v535
    %2700 = vmatpush.msra.mxu0 %v527
    %2701 = vmatpush.msra.mxu0 %v519
    %2702 = vmatpush.msra.mxu0 %v511
    %2703 = vmatpush.msra.mxu0 %v503
    %2704 = vmatpush.msra.mxu0 %v495
    %2705 = vmatpush.msra.mxu0 %v487
    %2706 = vmatpush.msra.mxu0 %v479
    %2707 = vmatpush.msra.mxu0 %v471
    %2708 = vmatpush.msra.mxu0 %v463
    %2709 = vmatmul.f32.gmra.mxu0 %v2501
    %v2710 = vpop.f32.mrf.mxu0
    %v2711 = vadd.f32 0.0, %v2710
    %2712 = vdwg.mxu0
    %2713 = vmatpush.msra.mxu0 %v584
    %2714 = vmatpush.msra.mxu0 %v576
    %2715 = vmatpush.msra.mxu0 %v568
    %2716 = vmatpush.msra.mxu0 %v560
    %2717 = vmatpush.msra.mxu0 %v552
    %2718 = vmatpush.msra.mxu0 %v544
    %2719 = vmatpush.msra.mxu0 %v536
    %2720 = vmatpush.msra.mxu0 %v528
    %2721 = vmatpush.msra.mxu0 %v520
    %2722 = vmatpush.msra.mxu0 %v512
    %2723 = vmatpush.msra.mxu0 %v504
    %2724 = vmatpush.msra.mxu0 %v496
    %2725 = vmatpush.msra.mxu0 %v488
    %2726 = vmatpush.msra.mxu0 %v480
    %2727 = vmatpush.msra.mxu0 %v472
    %2728 = vmatpush.msra.mxu0 %v464
    %2729 = vmatmul.f32.gmra.mxu0 %v2501
    %v2730 = vpop.f32.mrf.mxu0
    %v2731 = vadd.f32 0.0, %v2730
    %2732 = vdwg.mxu0
    %2733 = vmatpush.msra.mxu0 %v805
    %2734 = vmatpush.msra.mxu0 %v801
    %2735 = vmatpush.msra.mxu0 %v797
    %2736 = vmatpush.msra.mxu0 %v793
    %2737 = vmatpush.msra.mxu0 %v789
    %2738 = vmatpush.msra.mxu0 %v785
    %2739 = vmatpush.msra.mxu0 %v781
    %2740 = vmatpush.msra.mxu0 %v777
    %2741 = vmatpush.msra.mxu0 %v773
    %2742 = vmatpush.msra.mxu0 %v769
    %2743 = vmatpush.msra.mxu0 %v765
    %2744 = vmatpush.msra.mxu0 %v761
    %2745 = vmatpush.msra.mxu0 %v757
    %2746 = vmatpush.msra.mxu0 %v753
    %2747 = vmatpush.msra.mxu0 %v749
    %2748 = vmatpush.msra.mxu0 %v745
    %2749 = vmatmul.f32.gmra.mxu0 %v2572
    %v2750 = vpop.f32.mrf.mxu0
    %v2751 = vadd.f32 0.0, %v2750
    %2752 = vdwg.mxu0
    %2753 = vmatpush.msra.mxu0 %v806
    %2754 = vmatpush.msra.mxu0 %v802
    %2755 = vmatpush.msra.mxu0 %v798
    %2756 = vmatpush.msra.mxu0 %v794
    %2757 = vmatpush.msra.mxu0 %v790
    %2758 = vmatpush.msra.mxu0 %v786
    %2759 = vmatpush.msra.mxu0 %v782
    %2760 = vmatpush.msra.mxu0 %v778
    %2761 = vmatpush.msra.mxu0 %v774
    %2762 = vmatpush.msra.mxu0 %v770
    %2763 = vmatpush.msra.mxu0 %v766
    %2764 = vmatpush.msra.mxu0 %v762
    %2765 = vmatpush.msra.mxu0 %v758
    %2766 = vmatpush.msra.mxu0 %v754
    %2767 = vmatpush.msra.mxu0 %v750
    %2768 = vmatpush.msra.mxu0 %v746
    %2769 = vmatmul.f32.gmra.mxu0 %v2572
    %v2770 = vpop.f32.mrf.mxu0
    %v2771 = vadd.f32 0.0, %v2770
    %2772 = vdwg.mxu0
    %2773 = vmatpush.msra.mxu0 %v807
    %2774 = vmatpush.msra.mxu0 %v803
    %2775 = vmatpush.msra.mxu0 %v799
    %2776 = vmatpush.msra.mxu0 %v795
    %2777 = vmatpush.msra.mxu0 %v791
    %2778 = vmatpush.msra.mxu0 %v787
    %2779 = vmatpush.msra.mxu0 %v783
    %2780 = vmatpush.msra.mxu0 %v779
    %2781 = vmatpush.msra.mxu0 %v775
    %2782 = vmatpush.msra.mxu0 %v771
    %2783 = vmatpush.msra.mxu0 %v767
    %2784 = vmatpush.msra.mxu0 %v763
    %2785 = vmatpush.msra.mxu0 %v759
    %2786 = vmatpush.msra.mxu0 %v755
    %2787 = vmatpush.msra.mxu0 %v751
    %2788 = vmatpush.msra.mxu0 %v747
    %2789 = vmatmul.f32.gmra.mxu0 %v2572
    %v2790 = vpop.f32.mrf.mxu0
    %v2791 = vadd.f32 0.0, %v2790
    %2792 = vdwg.mxu0
    %2793 = vmatpush.msra.mxu0 %v808
    %2794 = vmatpush.msra.mxu0 %v804
    %2795 = vmatpush.msra.mxu0 %v800
    %2796 = vmatpush.msra.mxu0 %v796
    %2797 = vmatpush.msra.mxu0 %v792
    %2798 = vmatpush.msra.mxu0 %v788
    %2799 = vmatpush.msra.mxu0 %v784
    %2800 = vmatpush.msra.mxu0 %v780
    %2801 = vmatpush.msra.mxu0 %v776
    %2802 = vmatpush.msra.mxu0 %v772
    %2803 = vmatpush.msra.mxu0 %v768
    %2804 = vmatpush.msra.mxu0 %v764
    %2805 = vmatpush.msra.mxu0 %v760
    %2806 = vmatpush.msra.mxu0 %v756
    %2807 = vmatpush.msra.mxu0 %v752
    %2808 = vmatpush.msra.mxu0 %v748
    %2809 = vmatmul.f32.gmra.mxu0 %v2572
    %v2810 = vpop.f32.mrf.mxu0
    %v2811 = vadd.f32 0.0, %v2810
    %2812 = vdwg.mxu0
    %s2813 = scalar_lea.vmem [#allocation2], 192
    %v2814 = vld [vmem:[%s2813] sm:$0xff]
    %v2815 = vld [vmem:[%s2813 + $0x8] sm:$0xff]
    %v2816 = vld [vmem:[%s2813 + $0x10] sm:$0xff]
    %v2817 = vld [vmem:[%s2813 + $0x18] sm:$0xff]
    %v2818 = vadd.f32 %v2591, %v2814
    %v2819 = vadd.f32 %v2611, %v2815
    %v2820 = vadd.f32 %v2631, %v2816
    %v2821 = vadd.f32 %v2651, %v2817
    %v2822 = vxor.u32 %v2818, 2147483648
    %v2823 = vxor.u32 %v2819, 2147483648
    %v2824 = vxor.u32 %v2820, 2147483648
    %v2825 = vmul.f32 %v2822, 1.442695
    %v2826 = vpow.pop %v2825
    %v2827 = vmul.f32 %v2823, 1.442695
    %v2828 = vpow.pop %v2827
    %v2829 = vmul.f32 %v2824, 1.442695
    %v2830 = vpow.pop %v2829
    %v2831 = vadd.f32 %v2826, 1.0
    %v2832 = vadd.f32 %v2828, 1.0
    %v2833 = vadd.f32 %v2830, 1.0
    %v2834 = vrcp.pop %v2831
    %v2835 = vmul.f32 %v2831, %v2834
    %v2836 = vsub.f32 1.0, %v2835
    %v2837 = vmul.f32 %v2834, %v2836
    %v2838 = vadd.f32 %v2834, %v2837
    %vm2839 = vweird.f32 %v2831
    %vm2840 = vweird.f32 %v2834
    %vm2841 = vmor %vm2839, %vm2840
    %v2842 = vsel %vm2841, %v2834, %v2838
    %v2843 = vand.u32 2147483647, %v2831
    %vm2844 = vcmp.eq.f32.partialorder %v2843, 8.507059e+37
    %v2845 = vand.u32 %v2831, 2147483648
    %v2846 = vor.u32 1.1754944e-38, %v2845
    %v2847 = vsel %vm2844, %v2846, %v2842
    %v2848 = vmul.f32 1.0, %v2847
    %v2849 = vrcp.pop %v2832
    %v2850 = vmul.f32 %v2832, %v2849
    %v2851 = vsub.f32 1.0, %v2850
    %v2852 = vmul.f32 %v2849, %v2851
    %v2853 = vadd.f32 %v2849, %v2852
    %vm2854 = vweird.f32 %v2832
    %vm2855 = vweird.f32 %v2849
    %vm2856 = vmor %vm2854, %vm2855
    %v2857 = vsel %vm2856, %v2849, %v2853
    %v2858 = vand.u32 2147483647, %v2832
    %vm2859 = vcmp.eq.f32.partialorder %v2858, 8.507059e+37
    %v2860 = vand.u32 %v2832, 2147483648
    %v2861 = vor.u32 1.1754944e-38, %v2860
    %v2862 = vsel %vm2859, %v2861, %v2857
    %v2863 = vmul.f32 1.0, %v2862
    %v2864 = vrcp.pop %v2833
    %v2865 = vmul.f32 %v2833, %v2864
    %v2866 = vsub.f32 1.0, %v2865
    %v2867 = vmul.f32 %v2864, %v2866
    %v2868 = vadd.f32 %v2864, %v2867
    %vm2869 = vweird.f32 %v2833
    %vm2870 = vweird.f32 %v2864
    %vm2871 = vmor %vm2869, %vm2870
    %v2872 = vsel %vm2871, %v2864, %v2868
    %v2873 = vand.u32 2147483647, %v2833
    %vm2874 = vcmp.eq.f32.partialorder %v2873, 8.507059e+37
    %v2875 = vand.u32 %v2833, 2147483648
    %v2876 = vor.u32 1.1754944e-38, %v2875
    %v2877 = vsel %vm2874, %v2876, %v2872
    %v2878 = vmul.f32 1.0, %v2877
    %v2879 = vtanh.pop %v2821
    %v2880 = vmul.f32 %v2863, %v2499
    %v2881 = vmul.f32 %v2848, %v2879
    %v2882 = vadd.f32 %v2880, %v2881
    %v2883 = vtanh.pop %v2882
    %v2884 = vmul.f32 %v2878, %v2883
    %v2885 = vadd.f32 %v2671, %v2751
    %v2886 = vadd.f32 %v2691, %v2771
    %v2887 = vadd.f32 %v2711, %v2791
    %v2888 = vadd.f32 %v2731, %v2811
    %v2889 = vadd.f32 %v2885, %v966
    %v2890 = vadd.f32 %v2886, %v967
    %v2891 = vadd.f32 %v2887, %v968
    %v2892 = vadd.f32 %v2888, %v969
    %v2893 = vxor.u32 %v2889, 2147483648
    %v2894 = vxor.u32 %v2890, 2147483648
    %v2895 = vxor.u32 %v2891, 2147483648
    %v2896 = vmul.f32 %v2893, 1.442695
    %v2897 = vpow.pop %v2896
    %v2898 = vmul.f32 %v2894, 1.442695
    %v2899 = vpow.pop %v2898
    %v2900 = vmul.f32 %v2895, 1.442695
    %v2901 = vpow.pop %v2900
    %v2902 = vadd.f32 %v2897, 1.0
    %v2903 = vadd.f32 %v2899, 1.0
    %v2904 = vadd.f32 %v2901, 1.0
    %v2905 = vrcp.pop %v2902
    %v2906 = vmul.f32 %v2902, %v2905
    %v2907 = vsub.f32 1.0, %v2906
    %v2908 = vmul.f32 %v2905, %v2907
    %v2909 = vadd.f32 %v2905, %v2908
    %vm2910 = vweird.f32 %v2902
    %vm2911 = vweird.f32 %v2905
    %vm2912 = vmor %vm2910, %vm2911
    %v2913 = vsel %vm2912, %v2905, %v2909
    %v2914 = vand.u32 2147483647, %v2902
    %vm2915 = vcmp.eq.f32.partialorder %v2914, 8.507059e+37
    %v2916 = vand.u32 %v2902, 2147483648
    %v2917 = vor.u32 1.1754944e-38, %v2916
    %v2918 = vsel %vm2915, %v2917, %v2913
    %v2919 = vmul.f32 1.0, %v2918
    %v2920 = vrcp.pop %v2903
    %v2921 = vmul.f32 %v2903, %v2920
    %v2922 = vsub.f32 1.0, %v2921
    %v2923 = vmul.f32 %v2920, %v2922
    %v2924 = vadd.f32 %v2920, %v2923
    %vm2925 = vweird.f32 %v2903
    %vm2926 = vweird.f32 %v2920
    %vm2927 = vmor %vm2925, %vm2926
    %v2928 = vsel %vm2927, %v2920, %v2924
    %v2929 = vand.u32 2147483647, %v2903
    %vm2930 = vcmp.eq.f32.partialorder %v2929, 8.507059e+37
    %v2931 = vand.u32 %v2903, 2147483648
    %v2932 = vor.u32 1.1754944e-38, %v2931
    %v2933 = vsel %vm2930, %v2932, %v2928
    %v2934 = vmul.f32 1.0, %v2933
    %v2935 = vrcp.pop %v2904
    %v2936 = vmul.f32 %v2904, %v2935
    %v2937 = vsub.f32 1.0, %v2936
    %v2938 = vmul.f32 %v2935, %v2937
    %v2939 = vadd.f32 %v2935, %v2938
    %vm2940 = vweird.f32 %v2904
    %vm2941 = vweird.f32 %v2935
    %vm2942 = vmor %vm2940, %vm2941
    %v2943 = vsel %vm2942, %v2935, %v2939
    %v2944 = vand.u32 2147483647, %v2904
    %vm2945 = vcmp.eq.f32.partialorder %v2944, 8.507059e+37
    %v2946 = vand.u32 %v2904, 2147483648
    %v2947 = vor.u32 1.1754944e-38, %v2946
    %v2948 = vsel %vm2945, %v2947, %v2943
    %v2949 = vmul.f32 1.0, %v2948
    %v2950 = vtanh.pop %v2892
    %v2951 = vmul.f32 %v2934, %v2570
    %v2952 = vmul.f32 %v2919, %v2950
    %v2953 = vadd.f32 %v2951, %v2952
    %v2954 = vtanh.pop %v2953
    %v2955 = vmul.f32 %v2949, %v2954
    %2956 = vmatpush.msra.mxu0 %v577
    %2957 = vmatpush.msra.mxu0 %v569
    %2958 = vmatpush.msra.mxu0 %v561
    %2959 = vmatpush.msra.mxu0 %v553
    %2960 = vmatpush.msra.mxu0 %v545
    %2961 = vmatpush.msra.mxu0 %v537
    %2962 = vmatpush.msra.mxu0 %v529
    %2963 = vmatpush.msra.mxu0 %v521
    %2964 = vmatpush.msra.mxu0 %v513
    %2965 = vmatpush.msra.mxu0 %v505
    %2966 = vmatpush.msra.mxu0 %v497
    %2967 = vmatpush.msra.mxu0 %v489
    %2968 = vmatpush.msra.mxu0 %v481
    %2969 = vmatpush.msra.mxu0 %v473
    %2970 = vmatpush.msra.mxu0 %v465
    %2971 = vmatpush.msra.mxu0 %v457
    %2972 = vmatmul.f32.gmra.mxu0 %v2884
    %v2973 = vpop.f32.mrf.mxu0
    %v2974 = vadd.f32 0.0, %v2973
    %2975 = vdwg.mxu0
    %2976 = vmatpush.msra.mxu0 %v578
    %2977 = vmatpush.msra.mxu0 %v570
    %2978 = vmatpush.msra.mxu0 %v562
    %2979 = vmatpush.msra.mxu0 %v554
    %2980 = vmatpush.msra.mxu0 %v546
    %2981 = vmatpush.msra.mxu0 %v538
    %2982 = vmatpush.msra.mxu0 %v530
    %2983 = vmatpush.msra.mxu0 %v522
    %2984 = vmatpush.msra.mxu0 %v514
    %2985 = vmatpush.msra.mxu0 %v506
    %2986 = vmatpush.msra.mxu0 %v498
    %2987 = vmatpush.msra.mxu0 %v490
    %2988 = vmatpush.msra.mxu0 %v482
    %2989 = vmatpush.msra.mxu0 %v474
    %2990 = vmatpush.msra.mxu0 %v466
    %2991 = vmatpush.msra.mxu0 %v458
    %2992 = vmatmul.f32.gmra.mxu0 %v2884
    %v2993 = vpop.f32.mrf.mxu0
    %v2994 = vadd.f32 0.0, %v2993
    %2995 = vdwg.mxu0
    %2996 = vmatpush.msra.mxu0 %v579
    %2997 = vmatpush.msra.mxu0 %v571
    %2998 = vmatpush.msra.mxu0 %v563
    %2999 = vmatpush.msra.mxu0 %v555
    %3000 = vmatpush.msra.mxu0 %v547
    %3001 = vmatpush.msra.mxu0 %v539
    %3002 = vmatpush.msra.mxu0 %v531
    %3003 = vmatpush.msra.mxu0 %v523
    %3004 = vmatpush.msra.mxu0 %v515
    %3005 = vmatpush.msra.mxu0 %v507
    %3006 = vmatpush.msra.mxu0 %v499
    %3007 = vmatpush.msra.mxu0 %v491
    %3008 = vmatpush.msra.mxu0 %v483
    %3009 = vmatpush.msra.mxu0 %v475
    %3010 = vmatpush.msra.mxu0 %v467
    %3011 = vmatpush.msra.mxu0 %v459
    %3012 = vmatmul.f32.gmra.mxu0 %v2884
    %v3013 = vpop.f32.mrf.mxu0
    %v3014 = vadd.f32 0.0, %v3013
    %3015 = vdwg.mxu0
    %3016 = vmatpush.msra.mxu0 %v580
    %3017 = vmatpush.msra.mxu0 %v572
    %3018 = vmatpush.msra.mxu0 %v564
    %3019 = vmatpush.msra.mxu0 %v556
    %3020 = vmatpush.msra.mxu0 %v548
    %3021 = vmatpush.msra.mxu0 %v540
    %3022 = vmatpush.msra.mxu0 %v532
    %3023 = vmatpush.msra.mxu0 %v524
    %3024 = vmatpush.msra.mxu0 %v516
    %3025 = vmatpush.msra.mxu0 %v508
    %3026 = vmatpush.msra.mxu0 %v500
    %3027 = vmatpush.msra.mxu0 %v492
    %3028 = vmatpush.msra.mxu0 %v484
    %3029 = vmatpush.msra.mxu0 %v476
    %3030 = vmatpush.msra.mxu0 %v468
    %3031 = vmatpush.msra.mxu0 %v460
    %3032 = vmatmul.f32.gmra.mxu0 %v2884
    %v3033 = vpop.f32.mrf.mxu0
    %v3034 = vadd.f32 0.0, %v3033
    %3035 = vdwg.mxu0
    %3036 = vmatpush.msra.mxu0 %v581
    %3037 = vmatpush.msra.mxu0 %v573
    %3038 = vmatpush.msra.mxu0 %v565
    %3039 = vmatpush.msra.mxu0 %v557
    %3040 = vmatpush.msra.mxu0 %v549
    %3041 = vmatpush.msra.mxu0 %v541
    %3042 = vmatpush.msra.mxu0 %v533
    %3043 = vmatpush.msra.mxu0 %v525
    %3044 = vmatpush.msra.mxu0 %v517
    %3045 = vmatpush.msra.mxu0 %v509
    %3046 = vmatpush.msra.mxu0 %v501
    %3047 = vmatpush.msra.mxu0 %v493
    %3048 = vmatpush.msra.mxu0 %v485
    %3049 = vmatpush.msra.mxu0 %v477
    %3050 = vmatpush.msra.mxu0 %v469
    %3051 = vmatpush.msra.mxu0 %v461
    %3052 = vmatmul.f32.gmra.mxu0 %v2884
    %v3053 = vpop.f32.mrf.mxu0
    %v3054 = vadd.f32 0.0, %v3053
    %3055 = vdwg.mxu0
    %3056 = vmatpush.msra.mxu0 %v582
    %3057 = vmatpush.msra.mxu0 %v574
    %3058 = vmatpush.msra.mxu0 %v566
    %3059 = vmatpush.msra.mxu0 %v558
    %3060 = vmatpush.msra.mxu0 %v550
    %3061 = vmatpush.msra.mxu0 %v542
    %3062 = vmatpush.msra.mxu0 %v534
    %3063 = vmatpush.msra.mxu0 %v526
    %3064 = vmatpush.msra.mxu0 %v518
    %3065 = vmatpush.msra.mxu0 %v510
    %3066 = vmatpush.msra.mxu0 %v502
    %3067 = vmatpush.msra.mxu0 %v494
    %3068 = vmatpush.msra.mxu0 %v486
    %3069 = vmatpush.msra.mxu0 %v478
    %3070 = vmatpush.msra.mxu0 %v470
    %3071 = vmatpush.msra.mxu0 %v462
    %3072 = vmatmul.f32.gmra.mxu0 %v2884
    %v3073 = vpop.f32.mrf.mxu0
    %v3074 = vadd.f32 0.0, %v3073
    %3075 = vdwg.mxu0
    %3076 = vmatpush.msra.mxu0 %v583
    %3077 = vmatpush.msra.mxu0 %v575
    %3078 = vmatpush.msra.mxu0 %v567
    %3079 = vmatpush.msra.mxu0 %v559
    %3080 = vmatpush.msra.mxu0 %v551
    %3081 = vmatpush.msra.mxu0 %v543
    %3082 = vmatpush.msra.mxu0 %v535
    %3083 = vmatpush.msra.mxu0 %v527
    %3084 = vmatpush.msra.mxu0 %v519
    %3085 = vmatpush.msra.mxu0 %v511
    %3086 = vmatpush.msra.mxu0 %v503
    %3087 = vmatpush.msra.mxu0 %v495
    %3088 = vmatpush.msra.mxu0 %v487
    %3089 = vmatpush.msra.mxu0 %v479
    %3090 = vmatpush.msra.mxu0 %v471
    %3091 = vmatpush.msra.mxu0 %v463
    %3092 = vmatmul.f32.gmra.mxu0 %v2884
    %v3093 = vpop.f32.mrf.mxu0
    %v3094 = vadd.f32 0.0, %v3093
    %3095 = vdwg.mxu0
    %3096 = vmatpush.msra.mxu0 %v584
    %3097 = vmatpush.msra.mxu0 %v576
    %3098 = vmatpush.msra.mxu0 %v568
    %3099 = vmatpush.msra.mxu0 %v560
    %3100 = vmatpush.msra.mxu0 %v552
    %3101 = vmatpush.msra.mxu0 %v544
    %3102 = vmatpush.msra.mxu0 %v536
    %3103 = vmatpush.msra.mxu0 %v528
    %3104 = vmatpush.msra.mxu0 %v520
    %3105 = vmatpush.msra.mxu0 %v512
    %3106 = vmatpush.msra.mxu0 %v504
    %3107 = vmatpush.msra.mxu0 %v496
    %3108 = vmatpush.msra.mxu0 %v488
    %3109 = vmatpush.msra.mxu0 %v480
    %3110 = vmatpush.msra.mxu0 %v472
    %3111 = vmatpush.msra.mxu0 %v464
    %3112 = vmatmul.f32.gmra.mxu0 %v2884
    %v3113 = vpop.f32.mrf.mxu0
    %v3114 = vadd.f32 0.0, %v3113
    %3115 = vdwg.mxu0
    %3116 = vmatpush.msra.mxu0 %v805
    %3117 = vmatpush.msra.mxu0 %v801
    %3118 = vmatpush.msra.mxu0 %v797
    %3119 = vmatpush.msra.mxu0 %v793
    %3120 = vmatpush.msra.mxu0 %v789
    %3121 = vmatpush.msra.mxu0 %v785
    %3122 = vmatpush.msra.mxu0 %v781
    %3123 = vmatpush.msra.mxu0 %v777
    %3124 = vmatpush.msra.mxu0 %v773
    %3125 = vmatpush.msra.mxu0 %v769
    %3126 = vmatpush.msra.mxu0 %v765
    %3127 = vmatpush.msra.mxu0 %v761
    %3128 = vmatpush.msra.mxu0 %v757
    %3129 = vmatpush.msra.mxu0 %v753
    %3130 = vmatpush.msra.mxu0 %v749
    %3131 = vmatpush.msra.mxu0 %v745
    %3132 = vmatmul.f32.gmra.mxu0 %v2955
    %v3133 = vpop.f32.mrf.mxu0
    %v3134 = vadd.f32 0.0, %v3133
    %3135 = vdwg.mxu0
    %3136 = vmatpush.msra.mxu0 %v806
    %3137 = vmatpush.msra.mxu0 %v802
    %3138 = vmatpush.msra.mxu0 %v798
    %3139 = vmatpush.msra.mxu0 %v794
    %3140 = vmatpush.msra.mxu0 %v790
    %3141 = vmatpush.msra.mxu0 %v786
    %3142 = vmatpush.msra.mxu0 %v782
    %3143 = vmatpush.msra.mxu0 %v778
    %3144 = vmatpush.msra.mxu0 %v774
    %3145 = vmatpush.msra.mxu0 %v770
    %3146 = vmatpush.msra.mxu0 %v766
    %3147 = vmatpush.msra.mxu0 %v762
    %3148 = vmatpush.msra.mxu0 %v758
    %3149 = vmatpush.msra.mxu0 %v754
    %3150 = vmatpush.msra.mxu0 %v750
    %3151 = vmatpush.msra.mxu0 %v746
    %3152 = vmatmul.f32.gmra.mxu0 %v2955
    %v3153 = vpop.f32.mrf.mxu0
    %v3154 = vadd.f32 0.0, %v3153
    %3155 = vdwg.mxu0
    %3156 = vmatpush.msra.mxu0 %v807
    %3157 = vmatpush.msra.mxu0 %v803
    %3158 = vmatpush.msra.mxu0 %v799
    %3159 = vmatpush.msra.mxu0 %v795
    %3160 = vmatpush.msra.mxu0 %v791
    %3161 = vmatpush.msra.mxu0 %v787
    %3162 = vmatpush.msra.mxu0 %v783
    %3163 = vmatpush.msra.mxu0 %v779
    %3164 = vmatpush.msra.mxu0 %v775
    %3165 = vmatpush.msra.mxu0 %v771
    %3166 = vmatpush.msra.mxu0 %v767
    %3167 = vmatpush.msra.mxu0 %v763
    %3168 = vmatpush.msra.mxu0 %v759
    %3169 = vmatpush.msra.mxu0 %v755
    %3170 = vmatpush.msra.mxu0 %v751
    %3171 = vmatpush.msra.mxu0 %v747
    %3172 = vmatmul.f32.gmra.mxu0 %v2955
    %v3173 = vpop.f32.mrf.mxu0
    %v3174 = vadd.f32 0.0, %v3173
    %3175 = vdwg.mxu0
    %3176 = vmatpush.msra.mxu0 %v808
    %3177 = vmatpush.msra.mxu0 %v804
    %3178 = vmatpush.msra.mxu0 %v800
    %3179 = vmatpush.msra.mxu0 %v796
    %3180 = vmatpush.msra.mxu0 %v792
    %3181 = vmatpush.msra.mxu0 %v788
    %3182 = vmatpush.msra.mxu0 %v784
    %3183 = vmatpush.msra.mxu0 %v780
    %3184 = vmatpush.msra.mxu0 %v776
    %3185 = vmatpush.msra.mxu0 %v772
    %3186 = vmatpush.msra.mxu0 %v768
    %3187 = vmatpush.msra.mxu0 %v764
    %3188 = vmatpush.msra.mxu0 %v760
    %3189 = vmatpush.msra.mxu0 %v756
    %3190 = vmatpush.msra.mxu0 %v752
    %3191 = vmatpush.msra.mxu0 %v748
    %3192 = vmatmul.f32.gmra.mxu0 %v2955
    %v3193 = vpop.f32.mrf.mxu0
    %v3194 = vadd.f32 0.0, %v3193
    %3195 = vdwg.mxu0
    %s3196 = scalar_lea.vmem [#allocation2], 224
    %v3197 = vld [vmem:[%s3196] sm:$0xff]
    %v3198 = vld [vmem:[%s3196 + $0x8] sm:$0xff]
    %v3199 = vld [vmem:[%s3196 + $0x10] sm:$0xff]
    %v3200 = vld [vmem:[%s3196 + $0x18] sm:$0xff]
    %v3201 = vadd.f32 %v2974, %v3197
    %v3202 = vadd.f32 %v2994, %v3198
    %v3203 = vadd.f32 %v3014, %v3199
    %v3204 = vadd.f32 %v3034, %v3200
    %v3205 = vxor.u32 %v3201, 2147483648
    %v3206 = vxor.u32 %v3202, 2147483648
    %v3207 = vxor.u32 %v3203, 2147483648
    %v3208 = vmul.f32 %v3205, 1.442695
    %v3209 = vpow.pop %v3208
    %v3210 = vmul.f32 %v3206, 1.442695
    %v3211 = vpow.pop %v3210
    %v3212 = vmul.f32 %v3207, 1.442695
    %v3213 = vpow.pop %v3212
    %v3214 = vadd.f32 %v3209, 1.0
    %v3215 = vadd.f32 %v3211, 1.0
    %v3216 = vadd.f32 %v3213, 1.0
    %v3217 = vrcp.pop %v3214
    %v3218 = vmul.f32 %v3214, %v3217
    %v3219 = vsub.f32 1.0, %v3218
    %v3220 = vmul.f32 %v3217, %v3219
    %v3221 = vadd.f32 %v3217, %v3220
    %vm3222 = vweird.f32 %v3214
    %vm3223 = vweird.f32 %v3217
    %vm3224 = vmor %vm3222, %vm3223
    %v3225 = vsel %vm3224, %v3217, %v3221
    %v3226 = vand.u32 2147483647, %v3214
    %vm3227 = vcmp.eq.f32.partialorder %v3226, 8.507059e+37
    %v3228 = vand.u32 %v3214, 2147483648
    %v3229 = vor.u32 1.1754944e-38, %v3228
    %v3230 = vsel %vm3227, %v3229, %v3225
    %v3231 = vmul.f32 1.0, %v3230
    %v3232 = vrcp.pop %v3215
    %v3233 = vmul.f32 %v3215, %v3232
    %v3234 = vsub.f32 1.0, %v3233
    %v3235 = vmul.f32 %v3232, %v3234
    %v3236 = vadd.f32 %v3232, %v3235
    %vm3237 = vweird.f32 %v3215
    %vm3238 = vweird.f32 %v3232
    %vm3239 = vmor %vm3237, %vm3238
    %v3240 = vsel %vm3239, %v3232, %v3236
    %v3241 = vand.u32 2147483647, %v3215
    %vm3242 = vcmp.eq.f32.partialorder %v3241, 8.507059e+37
    %v3243 = vand.u32 %v3215, 2147483648
    %v3244 = vor.u32 1.1754944e-38, %v3243
    %v3245 = vsel %vm3242, %v3244, %v3240
    %v3246 = vmul.f32 1.0, %v3245
    %v3247 = vrcp.pop %v3216
    %v3248 = vmul.f32 %v3216, %v3247
    %v3249 = vsub.f32 1.0, %v3248
    %v3250 = vmul.f32 %v3247, %v3249
    %v3251 = vadd.f32 %v3247, %v3250
    %vm3252 = vweird.f32 %v3216
    %vm3253 = vweird.f32 %v3247
    %vm3254 = vmor %vm3252, %vm3253
    %v3255 = vsel %vm3254, %v3247, %v3251
    %v3256 = vand.u32 2147483647, %v3216
    %vm3257 = vcmp.eq.f32.partialorder %v3256, 8.507059e+37
    %v3258 = vand.u32 %v3216, 2147483648
    %v3259 = vor.u32 1.1754944e-38, %v3258
    %v3260 = vsel %vm3257, %v3259, %v3255
    %v3261 = vmul.f32 1.0, %v3260
    %v3262 = vtanh.pop %v3204
    %v3263 = vmul.f32 %v3246, %v2882
    %v3264 = vmul.f32 %v3231, %v3262
    %v3265 = vadd.f32 %v3263, %v3264
    %v3266 = vtanh.pop %v3265
    %v3267 = vmul.f32 %v3261, %v3266
    %v3268 = vadd.f32 %v3054, %v3134
    %v3269 = vadd.f32 %v3074, %v3154
    %v3270 = vadd.f32 %v3094, %v3174
    %v3271 = vadd.f32 %v3114, %v3194
    %v3272 = vadd.f32 %v3268, %v966
    %v3273 = vadd.f32 %v3269, %v967
    %v3274 = vadd.f32 %v3270, %v968
    %v3275 = vadd.f32 %v3271, %v969
    %v3276 = vxor.u32 %v3272, 2147483648
    %v3277 = vxor.u32 %v3273, 2147483648
    %v3278 = vxor.u32 %v3274, 2147483648
    %v3279 = vmul.f32 %v3276, 1.442695
    %v3280 = vpow.pop %v3279
    %v3281 = vmul.f32 %v3277, 1.442695
    %v3282 = vpow.pop %v3281
    %v3283 = vmul.f32 %v3278, 1.442695
    %v3284 = vpow.pop %v3283
    %v3285 = vadd.f32 %v3280, 1.0
    %v3286 = vadd.f32 %v3282, 1.0
    %v3287 = vadd.f32 %v3284, 1.0
    %v3288 = vrcp.pop %v3285
    %v3289 = vmul.f32 %v3285, %v3288
    %v3290 = vsub.f32 1.0, %v3289
    %v3291 = vmul.f32 %v3288, %v3290
    %v3292 = vadd.f32 %v3288, %v3291
    %vm3293 = vweird.f32 %v3285
    %vm3294 = vweird.f32 %v3288
    %vm3295 = vmor %vm3293, %vm3294
    %v3296 = vsel %vm3295, %v3288, %v3292
    %v3297 = vand.u32 2147483647, %v3285
    %vm3298 = vcmp.eq.f32.partialorder %v3297, 8.507059e+37
    %v3299 = vand.u32 %v3285, 2147483648
    %v3300 = vor.u32 1.1754944e-38, %v3299
    %v3301 = vsel %vm3298, %v3300, %v3296
    %v3302 = vmul.f32 1.0, %v3301
    %v3303 = vrcp.pop %v3286
    %v3304 = vmul.f32 %v3286, %v3303
    %v3305 = vsub.f32 1.0, %v3304
    %v3306 = vmul.f32 %v3303, %v3305
    %v3307 = vadd.f32 %v3303, %v3306
    %vm3308 = vweird.f32 %v3286
    %vm3309 = vweird.f32 %v3303
    %vm3310 = vmor %vm3308, %vm3309
    %v3311 = vsel %vm3310, %v3303, %v3307
    %v3312 = vand.u32 2147483647, %v3286
    %vm3313 = vcmp.eq.f32.partialorder %v3312, 8.507059e+37
    %v3314 = vand.u32 %v3286, 2147483648
    %v3315 = vor.u32 1.1754944e-38, %v3314
    %v3316 = vsel %vm3313, %v3315, %v3311
    %v3317 = vmul.f32 1.0, %v3316
    %v3318 = vrcp.pop %v3287
    %v3319 = vmul.f32 %v3287, %v3318
    %v3320 = vsub.f32 1.0, %v3319
    %v3321 = vmul.f32 %v3318, %v3320
    %v3322 = vadd.f32 %v3318, %v3321
    %vm3323 = vweird.f32 %v3287
    %vm3324 = vweird.f32 %v3318
    %vm3325 = vmor %vm3323, %vm3324
    %v3326 = vsel %vm3325, %v3318, %v3322
    %v3327 = vand.u32 2147483647, %v3287
    %vm3328 = vcmp.eq.f32.partialorder %v3327, 8.507059e+37
    %v3329 = vand.u32 %v3287, 2147483648
    %v3330 = vor.u32 1.1754944e-38, %v3329
    %v3331 = vsel %vm3328, %v3330, %v3326
    %v3332 = vmul.f32 1.0, %v3331
    %v3333 = vtanh.pop %v3275
    %v3334 = vmul.f32 %v3317, %v2953
    %v3335 = vmul.f32 %v3302, %v3333
    %v3336 = vadd.f32 %v3334, %v3335
    %v3337 = vtanh.pop %v3336
    %v3338 = vmul.f32 %v3332, %v3337
    %3339 = vmatpush.msra.mxu0 %v805
    %3340 = vmatpush.msra.mxu0 %v801
    %3341 = vmatpush.msra.mxu0 %v797
    %3342 = vmatpush.msra.mxu0 %v793
    %3343 = vmatpush.msra.mxu0 %v789
    %3344 = vmatpush.msra.mxu0 %v785
    %3345 = vmatpush.msra.mxu0 %v781
    %3346 = vmatpush.msra.mxu0 %v777
    %3347 = vmatpush.msra.mxu0 %v773
    %3348 = vmatpush.msra.mxu0 %v769
    %3349 = vmatpush.msra.mxu0 %v765
    %3350 = vmatpush.msra.mxu0 %v761
    %3351 = vmatpush.msra.mxu0 %v757
    %3352 = vmatpush.msra.mxu0 %v753
    %3353 = vmatpush.msra.mxu0 %v749
    %3354 = vmatpush.msra.mxu0 %v745
    %3355 = vmatmul.f32.gmra.mxu0 %v3338
    %v3356 = vpop.f32.mrf.mxu0
    %v3357 = vadd.f32 0.0, %v3356
    %3358 = vdwg.mxu0
    %3359 = vmatpush.msra.mxu0 %v806
    %3360 = vmatpush.msra.mxu0 %v802
    %3361 = vmatpush.msra.mxu0 %v798
    %3362 = vmatpush.msra.mxu0 %v794
    %3363 = vmatpush.msra.mxu0 %v790
    %3364 = vmatpush.msra.mxu0 %v786
    %3365 = vmatpush.msra.mxu0 %v782
    %3366 = vmatpush.msra.mxu0 %v778
    %3367 = vmatpush.msra.mxu0 %v774
    %3368 = vmatpush.msra.mxu0 %v770
    %3369 = vmatpush.msra.mxu0 %v766
    %3370 = vmatpush.msra.mxu0 %v762
    %3371 = vmatpush.msra.mxu0 %v758
    %3372 = vmatpush.msra.mxu0 %v754
    %3373 = vmatpush.msra.mxu0 %v750
    %3374 = vmatpush.msra.mxu0 %v746
    %3375 = vmatmul.f32.gmra.mxu0 %v3338
    %v3376 = vpop.f32.mrf.mxu0
    %v3377 = vadd.f32 0.0, %v3376
    %3378 = vdwg.mxu0
    %3379 = vmatpush.msra.mxu0 %v807
    %3380 = vmatpush.msra.mxu0 %v803
    %3381 = vmatpush.msra.mxu0 %v799
    %3382 = vmatpush.msra.mxu0 %v795
    %3383 = vmatpush.msra.mxu0 %v791
    %3384 = vmatpush.msra.mxu0 %v787
    %3385 = vmatpush.msra.mxu0 %v783
    %3386 = vmatpush.msra.mxu0 %v779
    %3387 = vmatpush.msra.mxu0 %v775
    %3388 = vmatpush.msra.mxu0 %v771
    %3389 = vmatpush.msra.mxu0 %v767
    %3390 = vmatpush.msra.mxu0 %v763
    %3391 = vmatpush.msra.mxu0 %v759
    %3392 = vmatpush.msra.mxu0 %v755
    %3393 = vmatpush.msra.mxu0 %v751
    %3394 = vmatpush.msra.mxu0 %v747
    %3395 = vmatmul.f32.gmra.mxu0 %v3338
    %v3396 = vpop.f32.mrf.mxu0
    %v3397 = vadd.f32 0.0, %v3396
    %3398 = vdwg.mxu0
    %3399 = vmatpush.msra.mxu0 %v808
    %3400 = vmatpush.msra.mxu0 %v804
    %3401 = vmatpush.msra.mxu0 %v800
    %3402 = vmatpush.msra.mxu0 %v796
    %3403 = vmatpush.msra.mxu0 %v792
    %3404 = vmatpush.msra.mxu0 %v788
    %3405 = vmatpush.msra.mxu0 %v784
    %3406 = vmatpush.msra.mxu0 %v780
    %3407 = vmatpush.msra.mxu0 %v776
    %3408 = vmatpush.msra.mxu0 %v772
    %3409 = vmatpush.msra.mxu0 %v768
    %3410 = vmatpush.msra.mxu0 %v764
    %3411 = vmatpush.msra.mxu0 %v760
    %3412 = vmatpush.msra.mxu0 %v756
    %3413 = vmatpush.msra.mxu0 %v752
    %3414 = vmatpush.msra.mxu0 %v748
    %3415 = vmatmul.f32.gmra.mxu0 %v3338
    %v3416 = vpop.f32.mrf.mxu0
    %v3417 = vadd.f32 0.0, %v3416
    %3418 = vdwg.mxu0
    %3419 = vmatpush.msra.mxu0 %v581
    %3420 = vmatpush.msra.mxu0 %v573
    %3421 = vmatpush.msra.mxu0 %v565
    %3422 = vmatpush.msra.mxu0 %v557
    %3423 = vmatpush.msra.mxu0 %v549
    %3424 = vmatpush.msra.mxu0 %v541
    %3425 = vmatpush.msra.mxu0 %v533
    %3426 = vmatpush.msra.mxu0 %v525
    %3427 = vmatpush.msra.mxu0 %v517
    %3428 = vmatpush.msra.mxu0 %v509
    %3429 = vmatpush.msra.mxu0 %v501
    %3430 = vmatpush.msra.mxu0 %v493
    %3431 = vmatpush.msra.mxu0 %v485
    %3432 = vmatpush.msra.mxu0 %v477
    %3433 = vmatpush.msra.mxu0 %v469
    %3434 = vmatpush.msra.mxu0 %v461
    %3435 = vmatmul.f32.gmra.mxu0 %v3267
    %v3436 = vpop.f32.mrf.mxu0
    %v3437 = vadd.f32 %v3357, %v3436
    %3438 = vdwg.mxu0
    %3439 = vmatpush.msra.mxu0 %v582
    %3440 = vmatpush.msra.mxu0 %v574
    %3441 = vmatpush.msra.mxu0 %v566
    %3442 = vmatpush.msra.mxu0 %v558
    %3443 = vmatpush.msra.mxu0 %v550
    %3444 = vmatpush.msra.mxu0 %v542
    %3445 = vmatpush.msra.mxu0 %v534
    %3446 = vmatpush.msra.mxu0 %v526
    %3447 = vmatpush.msra.mxu0 %v518
    %3448 = vmatpush.msra.mxu0 %v510
    %3449 = vmatpush.msra.mxu0 %v502
    %3450 = vmatpush.msra.mxu0 %v494
    %3451 = vmatpush.msra.mxu0 %v486
    %3452 = vmatpush.msra.mxu0 %v478
    %3453 = vmatpush.msra.mxu0 %v470
    %3454 = vmatpush.msra.mxu0 %v462
    %3455 = vmatmul.f32.gmra.mxu0 %v3267
    %v3456 = vpop.f32.mrf.mxu0
    %v3457 = vadd.f32 %v3377, %v3456
    %3458 = vdwg.mxu0
    %3459 = vmatpush.msra.mxu0 %v583
    %3460 = vmatpush.msra.mxu0 %v575
    %3461 = vmatpush.msra.mxu0 %v567
    %3462 = vmatpush.msra.mxu0 %v559
    %3463 = vmatpush.msra.mxu0 %v551
    %3464 = vmatpush.msra.mxu0 %v543
    %3465 = vmatpush.msra.mxu0 %v535
    %3466 = vmatpush.msra.mxu0 %v527
    %3467 = vmatpush.msra.mxu0 %v519
    %3468 = vmatpush.msra.mxu0 %v511
    %3469 = vmatpush.msra.mxu0 %v503
    %3470 = vmatpush.msra.mxu0 %v495
    %3471 = vmatpush.msra.mxu0 %v487
    %3472 = vmatpush.msra.mxu0 %v479
    %3473 = vmatpush.msra.mxu0 %v471
    %3474 = vmatpush.msra.mxu0 %v463
    %3475 = vmatmul.f32.gmra.mxu0 %v3267
    %v3476 = vpop.f32.mrf.mxu0
    %v3477 = vadd.f32 %v3397, %v3476
    %3478 = vdwg.mxu0
    %3479 = vmatpush.msra.mxu0 %v584
    %3480 = vmatpush.msra.mxu0 %v576
    %3481 = vmatpush.msra.mxu0 %v568
    %3482 = vmatpush.msra.mxu0 %v560
    %3483 = vmatpush.msra.mxu0 %v552
    %3484 = vmatpush.msra.mxu0 %v544
    %3485 = vmatpush.msra.mxu0 %v536
    %3486 = vmatpush.msra.mxu0 %v528
    %3487 = vmatpush.msra.mxu0 %v520
    %3488 = vmatpush.msra.mxu0 %v512
    %3489 = vmatpush.msra.mxu0 %v504
    %3490 = vmatpush.msra.mxu0 %v496
    %3491 = vmatpush.msra.mxu0 %v488
    %3492 = vmatpush.msra.mxu0 %v480
    %3493 = vmatpush.msra.mxu0 %v472
    %3494 = vmatpush.msra.mxu0 %v464
    %3495 = vmatmul.f32.gmra.mxu0 %v3267
    %v3496 = vpop.f32.mrf.mxu0
    %v3497 = vadd.f32 %v3417, %v3496
    %3498 = vdwg.mxu0
    %v3499 = vadd.f32 %v3437, %v966
    %v3500 = vadd.f32 %v3457, %v967
    %v3501 = vadd.f32 %v3477, %v968
    %v3502 = vadd.f32 %v3497, %v969
    %v3503 = vxor.u32 %v3499, 2147483648
    %v3504 = vxor.u32 %v3500, 2147483648
    %v3505 = vxor.u32 %v3501, 2147483648
    %v3506 = vmul.f32 %v3503, 1.442695
    %v3507 = vpow.pop %v3506
    %v3508 = vmul.f32 %v3504, 1.442695
    %v3509 = vpow.pop %v3508
    %v3510 = vmul.f32 %v3505, 1.442695
    %v3511 = vpow.pop %v3510
    %v3512 = vadd.f32 %v3507, 1.0
    %v3513 = vadd.f32 %v3509, 1.0
    %v3514 = vadd.f32 %v3511, 1.0
    %v3515 = vrcp.pop %v3512
    %v3516 = vmul.f32 %v3512, %v3515
    %v3517 = vsub.f32 1.0, %v3516
    %v3518 = vmul.f32 %v3515, %v3517
    %v3519 = vadd.f32 %v3515, %v3518
    %vm3520 = vweird.f32 %v3512
    %vm3521 = vweird.f32 %v3515
    %vm3522 = vmor %vm3520, %vm3521
    %v3523 = vsel %vm3522, %v3515, %v3519
    %v3524 = vand.u32 2147483647, %v3512
    %vm3525 = vcmp.eq.f32.partialorder %v3524, 8.507059e+37
    %v3526 = vand.u32 %v3512, 2147483648
    %v3527 = vor.u32 1.1754944e-38, %v3526
    %v3528 = vsel %vm3525, %v3527, %v3523
    %v3529 = vmul.f32 1.0, %v3528
    %v3530 = vrcp.pop %v3513
    %v3531 = vmul.f32 %v3513, %v3530
    %v3532 = vsub.f32 1.0, %v3531
    %v3533 = vmul.f32 %v3530, %v3532
    %v3534 = vadd.f32 %v3530, %v3533
    %vm3535 = vweird.f32 %v3513
    %vm3536 = vweird.f32 %v3530
    %vm3537 = vmor %vm3535, %vm3536
    %v3538 = vsel %vm3537, %v3530, %v3534
    %v3539 = vand.u32 2147483647, %v3513
    %vm3540 = vcmp.eq.f32.partialorder %v3539, 8.507059e+37
    %v3541 = vand.u32 %v3513, 2147483648
    %v3542 = vor.u32 1.1754944e-38, %v3541
    %v3543 = vsel %vm3540, %v3542, %v3538
    %v3544 = vmul.f32 1.0, %v3543
    %v3545 = vrcp.pop %v3514
    %v3546 = vmul.f32 %v3514, %v3545
    %v3547 = vsub.f32 1.0, %v3546
    %v3548 = vmul.f32 %v3545, %v3547
    %v3549 = vadd.f32 %v3545, %v3548
    %vm3550 = vweird.f32 %v3514
    %vm3551 = vweird.f32 %v3545
    %vm3552 = vmor %vm3550, %vm3551
    %v3553 = vsel %vm3552, %v3545, %v3549
    %v3554 = vand.u32 2147483647, %v3514
    %vm3555 = vcmp.eq.f32.partialorder %v3554, 8.507059e+37
    %v3556 = vand.u32 %v3514, 2147483648
    %v3557 = vor.u32 1.1754944e-38, %v3556
    %v3558 = vsel %vm3555, %v3557, %v3553
    %v3559 = vmul.f32 1.0, %v3558
    %v3560 = vtanh.pop %v3502
    %v3561 = vmul.f32 %v3544, %v3336
    %v3562 = vmul.f32 %v3529, %v3560
    %v3563 = vadd.f32 %v3561, %v3562
    %v3564 = vtanh.pop %v3563
    %v3565 = vmul.f32 %v3559, %v3564
    %v3566 = vld [vmem:[%s8] sm:$0xff]
    %vm3567 = vcmp.eq.s32.totalorder %v3566, 8
    %v3568 = vsel %vm3567, 1, 0
    %v3569 = vcvt.s32.f32 %v3568
    %3571 = vset.pattern.permute.xlu0 0
    %3572 = vperm.xlu0 %3571, %v3569
    %v3573 = vpop.permute.xlu0 %3572
    %v3575 = vmul.f32 %v3565, %v3573
    %v3576 = vld [vmem:[#allocation11] sm:$0xff]
    %v3577 = vld [vmem:[#allocation11 + $0x8] sm:$0xff]
    %v3578 = vld [vmem:[#allocation11 + $0x10] sm:$0xff]
    %v3579 = vld [vmem:[#allocation11 + $0x18] sm:$0xff]
    %v3580 = vld [vmem:[#allocation11 + $0x20] sm:$0xff]
    %v3581 = vld [vmem:[#allocation11 + $0x28] sm:$0xff]
    %v3582 = vld [vmem:[#allocation11 + $0x30] sm:$0xff]
    %v3583 = vld [vmem:[#allocation11 + $0x38] sm:$0xff]
    %v3584 = vld [vmem:[#allocation11 + $0x40] sm:$0xff]
    %v3585 = vld [vmem:[#allocation11 + $0x48] sm:$0xff]
    %v3586 = vld [vmem:[#allocation11 + $0x50] sm:$0xff]
    %v3587 = vld [vmem:[#allocation11 + $0x58] sm:$0xff]
    %v3588 = vld [vmem:[#allocation11 + $0x60] sm:$0xff]
    %v3589 = vld [vmem:[#allocation11 + $0x68] sm:$0xff]
    %v3590 = vld [vmem:[#allocation11 + $0x70] sm:$0xff]
    %v3591 = vld [vmem:[#allocation11 + $0x78] sm:$0xff]
    %v3592 = vld [vmem:[%s7] sm:$0x1]
    %v3594 = vperm.slane %v3592, 0
    %3596 = vmatpush.msra.mxu0 %v3591
    %3597 = vmatpush.msra.mxu0 %v3590
    %3598 = vmatpush.msra.mxu0 %v3589
    %3599 = vmatpush.msra.mxu0 %v3588
    %3600 = vmatpush.msra.mxu0 %v3587
    %3601 = vmatpush.msra.mxu0 %v3586
    %3602 = vmatpush.msra.mxu0 %v3585
    %3603 = vmatpush.msra.mxu0 %v3584
    %3604 = vmatpush.msra.mxu0 %v3583
    %3605 = vmatpush.msra.mxu0 %v3582
    %3606 = vmatpush.msra.mxu0 %v3581
    %3607 = vmatpush.msra.mxu0 %v3580
    %3608 = vmatpush.msra.mxu0 %v3579
    %3609 = vmatpush.msra.mxu0 %v3578
    %3610 = vmatpush.msra.mxu0 %v3577
    %3611 = vmatpush.msra.mxu0 %v3576
    %3612 = vmatmul.f32.gmra.mxu0 %v3575
    %v3613 = vpop.f32.mrf.mxu0
    %v3614 = vadd.f32 %v3594, %v3613
    %3615 = vdwg.mxu0
    %3616 = vst [vmem:[#allocation12] sm:$0xff] %v3614
    // Predicated region
    $region58: #{tpu_custom_call.1} parent=1 // pred_check
      _
    $region59: #{tpu_custom_call.1} parent=1 // pred_check_branch
      %3618 = sbr.rel (0) target = $region61
    $region60: #{tpu_custom_call.1} parent=1 // pred_region
      %3620 = vsyncadd [#allocation5], 0
      %s3622 = sshll.u32 [#allocation12], 4
      %s3623 = int_to_ptr.vmem [resolvable:$true] %s3622
      %s3624 = sshll.u32 %s9, 4
      %s3625 = int_to_ptr.hbm [resolvable:$true] %s3624
      %3627 = dma.vmem_to_hbm [thread:$0]  %s3623, 128, %s3625, [#allocation5]
    $region61: #{tpu_custom_call.1} parent=1 // pred_fallthru
      _
    // Predicated region
    $region62: #{tpu_custom_call.1} parent=1 // pred_check
      _
    $region63: #{tpu_custom_call.1} parent=1 // pred_check_branch
      %3629 = sbr.rel (0) target = $region65
    $region64: #{tpu_custom_call.1} parent=1 // pred_region
      %3631 = dma.done [#allocation5], 128
    $region65: #{tpu_custom_call.1} parent=1 // pred_fallthru
      _
    %3632 = vsyncpa [#allocation4], 1
    %3633 = vsyncpa [#allocation7], 1
    %3634 = vsyncpa [#allocation10], 1
    %3635 = vsyncpa [#allocation5], 1

</llo_original>
